<compile_context>
chip_gen: v7x
topology: tpu7x:2x2x1
jax: 0.10.0
libtpu: 0.0.40
codegen_flags: <defaults>
</compile_context>

<pallas_src>
import functools

import numpy as np

import jax
import jax.numpy as jnp
from jax.experimental import pallas as pl
from jax.experimental.pallas import tpu as pltpu


# ---------------------------------------------------------------------------
# align_corners=True bilinear interpolation matrix (host-side numpy).
# ---------------------------------------------------------------------------
def _interp_matrix_np(out_size, in_size):
    """R such that (R @ x) is 1-D bilinear resize, align_corners=True."""
    if out_size == 1:
        src = np.zeros((1,), np.float64)
    else:
        src = np.arange(out_size, dtype=np.float64) * ((in_size - 1) / (out_size - 1))
    i0 = np.clip(np.floor(src).astype(np.int64), 0, in_size - 1)
    i1 = np.minimum(i0 + 1, in_size - 1)
    frac = (src - i0).astype(np.float32)
    R = np.zeros((out_size, in_size), np.float32)
    rows = np.arange(out_size)
    np.add.at(R, (rows, i0), 1.0 - frac)
    np.add.at(R, (rows, i1), frac)
    return R


# ---------------------------------------------------------------------------
# Fused kernel: conv1 (band) -> width resize -> height resize -> conv2 -> ReLU
#               -> conv3 (1x1) -> sigmoid, one output row tile per grid step.
# ---------------------------------------------------------------------------
def _fused_head_kernel(bs_ref,                       # scalar prefetch: (T,) i32
                       x_ref,                        # (1, Hin+2, Win+2, Cin) bf16
                       w1_ref,                       # (3, 3*Cin, C1) bf16  (dw-major)
                       b1_ref,                       # (1, C1) f32
                       rwt_ref,                      # (Win, Wp) bf16
                       rh_ref,                       # (1, TH+2, BAND) bf16
                       w2_ref,                       # (3, 3*C1, Cmid) bf16 (dw-major)
                       b2_ref,                       # (1, Cmid) f32
                       w3_ref,                       # (1, Cmid) f32
                       b3_ref,                       # (1, 1) f32
                       o_ref,                        # (1, TH, Wout) f32
                       *, Win, Cin, C1, Cmid, Wout, TH, BAND):
    Wp = Wout + 2
    t = pl.program_id(1)
    bs = bs_ref[t]                                   # first conv1 row of this tile's band

    # ---- conv1 (3x3, pad folded into the pre-padded input) on the band -----
    # 3 accumulated bf16 matmuls (loop over dw, K = 3*Cin); dh offsets are on
    # the cheap leading axis, so the only sublane shifts are the 3 dw windows.
    xband = x_ref[0, pl.ds(bs, BAND + 2), :, :]      # (BAND+2, Win+2, Cin) bf16
    acc1 = jnp.zeros((BAND * Win, C1), jnp.float32)
    for dw in range(3):
        xw = xband[:, dw:dw + Win, :]                # (BAND+2, Win, Cin)
        patch = jnp.concatenate(
            [xw[dh:dh + BAND] for dh in range(3)], axis=-1)      # (BAND, Win, 3*Cin)
        acc1 = acc1 + jnp.dot(patch.reshape(BAND * Win, 3 * Cin), w1_ref[dw],
                              preferred_element_type=jnp.float32)
    y1 = (acc1 + b1_ref[...]).reshape(BAND, Win, C1)             # f32

    # ---- width resize (+ conv2 horizontal zero pad folded into rwt) --------
    # TODO(synk): fold these two band-level relayouts + matmul into a single
    # dot_general / pltpu.einshape once verified against the target Mosaic.
    y1t = jnp.transpose(y1, (0, 2, 1)).reshape(BAND * C1, Win).astype(jnp.bfloat16)
    yw = jnp.dot(y1t, rwt_ref[...], preferred_element_type=jnp.float32)  # (BAND*C1, Wp)
    yw = jnp.transpose(yw.reshape(BAND, C1, Wp), (0, 2, 1))              # (BAND, Wp, C1)
    ywb = yw.astype(jnp.bfloat16).reshape(BAND, Wp * C1)

    # ---- height resize (+ conv2 vertical zero pad + 1-row halo) ------------
    xh = jnp.dot(rh_ref[0], ywb, preferred_element_type=jnp.float32)     # (TH+2, Wp*C1)
    xr = xh.reshape(TH + 2, Wp, C1).astype(jnp.bfloat16)

    # ---- conv2 (3x3): 3 accumulated bf16 matmuls (K = 3*C1) + ReLU ---------
    acc2 = jnp.zeros((TH * Wout, Cmid), jnp.float32)
    for dw in range(3):
        xw2 = xr[:, dw:dw + Wout, :]                 # (TH+2, Wout, C1)
        patch2 = jnp.concatenate(
            [xw2[dh:dh + TH] for dh in range(3)], axis=-1)       # (TH, Wout, 3*C1)
        acc2 = acc2 + jnp.dot(patch2.reshape(TH * Wout, 3 * C1), w2_ref[dw],
                              preferred_element_type=jnp.float32)
    acc2 = jnp.maximum(acc2 + b2_ref[...], 0.0)      # ReLU (f32, VPU)

    # ---- conv3 (1x1, Cmid -> 1) as a VPU broadcast-multiply + reduce -------
    z = jnp.sum(acc2.reshape(TH, Wout, Cmid) * w3_ref[...], axis=-1) + b3_ref[...]
    o_ref[0] = jax.nn.sigmoid(z)                     # lane-dense (TH, Wout) store


# ---------------------------------------------------------------------------
# Full head forward (NCHW in, NCHW out).
# ---------------------------------------------------------------------------
def depth_head_forward(hidden_states_nchw, params, height, width, *, tile_h=64):
    N, Cin, Hin, Win = (int(s) for s in hidden_states_nchw.shape)
    Hout, Wout = int(height), int(width)
    C1 = int(params["w1"].shape[-1])
    Cmid = int(params["w2"].shape[-1])
    Wp = Wout + 2

    # Output-row tiling (tile height kept sublane-aligned when actually tiled).
    TH = max(1, min(int(tile_h), Hout))
    if TH < Hout:
        TH = max(8, (TH // 8) * 8)
    T = -(-Hout // TH)
    Hout_pad = T * TH

    # Height-resize matrix with conv2's vertical zero padding (rows for output
    # rows -1 and >= Hout are zero) and the Hout -> Hout_pad tile padding.
    R_full = np.zeros((Hout_pad + 2, Hin), np.float32)
    R_full[1:Hout + 1] = _interp_matrix_np(Hout, Hin)

    # Per-tile contiguous source-row bands (band-limited height resize).
    lo, hi = [], []
    for t in range(T):
        sub = R_full[t * TH:t * TH + TH + 2]
        cols = np.nonzero(np.any(sub != 0.0, axis=0))[0]
        lo.append(int(cols[0]) if cols.size else 0)
        hi.append(int(cols[-1]) if cols.size else 0)
    band_raw = max(h - l + 1 for l, h in zip(lo, hi))
    BAND = min(((band_raw + 7) // 8) * 8, Hin)
    band_start_np = np.array([max(0, min(l, Hin - BAND)) for l in lo], np.int32)
    rh_tiles_np = np.stack(
        [R_full[t * TH:t * TH + TH + 2,
                band_start_np[t]:band_start_np[t] + BAND] for t in range(T)])

    # Width-resize matrix^T with conv2's horizontal zero padding folded in.
    rwt_np = np.zeros((Win, Wp), np.float32)
    rwt_np[:, 1:Wout + 1] = _interp_matrix_np(Wout, Win).T

    # Operands: bf16 for every MXU operand, f32 for biases / VPU math.
    x = jnp.transpose(hidden_states_nchw, (0, 2, 3, 1))
    x = jnp.pad(x, ((0, 0), (1, 1), (1, 1), (0, 0))).astype(jnp.bfloat16)
    w1r = jnp.transpose(params["w1"], (1, 0, 2, 3)).reshape(3, 3 * Cin, C1)
    w1r = w1r.astype(jnp.bfloat16)
    w2r = jnp.transpose(params["w2"], (1, 0, 2, 3)).reshape(3, 3 * C1, Cmid)
    w2r = w2r.astype(jnp.bfloat16)
    b1 = params["b1"].reshape(1, C1).astype(jnp.float32)
    b2 = params["b2"].reshape(1, Cmid).astype(jnp.float32)
    w3 = params["w3"].reshape(1, Cmid).astype(jnp.float32)
    b3 = params["b3"].reshape(1, 1).astype(jnp.float32)
    rwt = jnp.asarray(rwt_np, jnp.bfloat16)
    rh_tiles = jnp.asarray(rh_tiles_np, jnp.bfloat16)
    band_start = jnp.asarray(band_start_np)

    # Per-generation VMEM scoped limit (leave headroom, esp. v7x's 64 MiB).
    try:
        cap = int(pltpu.get_tpu_info().vmem_capacity_bytes)
        vmem_limit = max(32 << 20, min(int(cap * 0.8), 100 << 20))
    except Exception:  # info query unavailable -> conservative default
        vmem_limit = 48 << 20

    out = pl.pallas_call(
        functools.partial(_fused_head_kernel, Win=Win, Cin=Cin, C1=C1,
                          Cmid=Cmid, Wout=Wout, TH=TH, BAND=BAND),
        out_shape=jax.ShapeDtypeStruct((N, Hout_pad, Wout), jnp.float32),
        grid_spec=pltpu.PrefetchScalarGridSpec(
            num_scalar_prefetch=1,
            grid=(N, T),
            in_specs=[
                # padded input: resident across the row-tile axis
                pl.BlockSpec((1, Hin + 2, Win + 2, Cin),
                             lambda n, t, bs: (n, 0, 0, 0)),
                pl.BlockSpec((3, 3 * Cin, C1), lambda n, t, bs: (0, 0, 0)),
                pl.BlockSpec((1, C1), lambda n, t, bs: (0, 0)),
                pl.BlockSpec((Win, Wp), lambda n, t, bs: (0, 0)),
                pl.BlockSpec((1, TH + 2, BAND), lambda n, t, bs: (t, 0, 0)),
                pl.BlockSpec((3, 3 * C1, Cmid), lambda n, t, bs: (0, 0, 0)),
                pl.BlockSpec((1, Cmid), lambda n, t, bs: (0, 0)),
                pl.BlockSpec((1, Cmid), lambda n, t, bs: (0, 0)),
                pl.BlockSpec((1, 1), lambda n, t, bs: (0, 0)),
            ],
            out_specs=pl.BlockSpec((1, TH, Wout), lambda n, t, bs: (n, t, 0)),
        ),
        compiler_params=pltpu.CompilerParams(
            dimension_semantics=("parallel", "parallel"),
            vmem_limit_bytes=vmem_limit),
    )(band_start, x, w1r, b1, rwt, rh_tiles, w2r, b2, w3, b3)

    out = out[:, :Hout, :]                           # drop padded tile rows
    return out.reshape(N, 1, Hout, Wout)             # NCHW (N, 1, height, width)


# ---------------------------------------------------------------------------
# Pure-JAX reference (same math; inputs/weights rounded to bf16 like the
# kernel's MXU operands, accumulation in f32) for correctness check.
# ---------------------------------------------------------------------------
def reference_forward(hidden_states_nchw, params, height, width):
    Hout, Wout = int(height), int(width)
    bf = lambda a: a.astype(jnp.bfloat16).astype(jnp.float32)
    x = bf(jnp.transpose(hidden_states_nchw, (0, 2, 3, 1)))

    def conv(x, w, b):
        y = jax.lax.conv_general_dilated(
            x, bf(w), window_strides=(1, 1), padding=((1, 1), (1, 1)),
            dimension_numbers=("NHWC", "HWIO", "NHWC"))
        return y + b.reshape(1, 1, 1, -1).astype(jnp.float32)

    y = conv(x, params["w1"], params["b1"])
    _, Hin, Win, _ = y.shape
    rh = bf(jnp.asarray(_interp_matrix_np(Hout, int(Hin))))
    rw = bf(jnp.asarray(_interp_matrix_np(Wout, int(Win))))
    y = jnp.einsum("hH,nHWc->nhWc", rh, y)
    y = jnp.einsum("wW,nhWc->nhwc", rw, y)
    y = jax.nn.relu(conv(y, params["w2"], params["b2"]))
    y = jnp.einsum("nhwc,co->nhwo", y, bf(params["w3"]))
    y = y + params["b3"].reshape(1, 1, 1, -1).astype(jnp.float32)
    y = jax.nn.sigmoid(y)
    return jnp.transpose(y, (0, 3, 1, 2))


if __name__ == "__main__":
    # Small synthetic config: features=8 -> conv1: 8->4, conv2: 4->16, conv3: 16->1
    N, FEAT, HIN, WIN = 2, 8, 8, 8
    C1, CMID = FEAT // 2, 16
    HEIGHT, WIDTH = 16, 16

    key = jax.random.PRNGKey(0)
    k = jax.random.split(key, 7)
    params = {
        "w1": 0.1 * jax.random.normal(k[0], (3, 3, FEAT, C1), jnp.float32),
        "b1": 0.1 * jax.random.normal(k[1], (C1,), jnp.float32),
        "w2": 0.1 * jax.random.normal(k[2], (3, 3, C1, CMID), jnp.float32),
        "b2": 0.1 * jax.random.normal(k[3], (CMID,), jnp.float32),
        "w3": 0.1 * jax.random.normal(k[4], (CMID, 1), jnp.float32),
        "b3": 0.1 * jax.random.normal(k[5], (1,), jnp.float32),
    }
    hidden_states = jax.random.normal(k[6], (N, FEAT, HIN, WIN), jnp.float32)  # NCHW

    # Case 1: single row tile.
    out = jax.block_until_ready(
        depth_head_forward(hidden_states, params, HEIGHT, WIDTH))
    ref = jax.block_until_ready(
        reference_forward(hidden_states, params, HEIGHT, WIDTH))
    assert out.shape == (N, 1, HEIGHT, WIDTH), out.shape
    assert bool(jnp.all(jnp.isfinite(out)))
    err = float(jnp.max(jnp.abs(out - ref)))
    assert jnp.allclose(out, ref, rtol=1e-2, atol=1e-2), err

    # Case 2: multiple row tiles with a ragged tail (exercises halo, band table
    # and the padded-Hout path).
    H2, W2 = 20, 24
    out2 = jax.block_until_ready(
        depth_head_forward(hidden_states, params, H2, W2, tile_h=8))
    ref2 = jax.block_until_ready(
        reference_forward(hidden_states, params, H2, W2))
    assert out2.shape == (N, 1, H2, W2), out2.shape
    assert bool(jnp.all(jnp.isfinite(out2)))
    err2 = float(jnp.max(jnp.abs(out2 - ref2)))
    assert jnp.allclose(out2, ref2, rtol=1e-2, atol=1e-2), err2

    print("KERNEL_OK")
</pallas_src>

<mosaic_0001>
module attributes {stable_mosaic.version = 11 : i64} {
  func.func @_fused_head_kernel(%arg0: i32, %arg1: i32, %arg2: memref<1xi32, #tpu.memory_space<smem>>, %arg3: memref<1x10x10x8xbf16, #tpu.memory_space<vmem>>, %arg4: memref<3x24x4xbf16, #tpu.memory_space<vmem>>, %arg5: memref<1x4xf32, #tpu.memory_space<vmem>>, %arg6: memref<8x18xbf16, #tpu.memory_space<vmem>>, %arg7: memref<1x18x8xbf16, #tpu.memory_space<vmem>>, %arg8: memref<3x12x16xbf16, #tpu.memory_space<vmem>>, %arg9: memref<1x16xf32, #tpu.memory_space<vmem>>, %arg10: memref<1x16xf32, #tpu.memory_space<vmem>>, %arg11: memref<1x1xf32, #tpu.memory_space<vmem>>, %arg12: memref<1x16x16xf32, #tpu.memory_space<vmem>>) attributes {dimension_semantics = [#tpu.dimension_semantics<parallel>, #tpu.dimension_semantics<parallel>], iteration_bounds = array<i64: 2, 1>, scalar_prefetch = 1 : i64, scratch_operands = 0 : i64, tpu.core_type = #tpu.core_type<tc>, window_params = [{transform_indices = @transform_0, window_bounds = array<i64: 1, 10, 10, 8>}, {pipeline_mode = #tpu.pipeline_mode<synchronous>, transform_indices = @transform_1, window_bounds = array<i64: 3, 24, 4>}, {pipeline_mode = #tpu.pipeline_mode<synchronous>, transform_indices = @transform_2, window_bounds = array<i64: 1, 4>}, {pipeline_mode = #tpu.pipeline_mode<synchronous>, transform_indices = @transform_3, window_bounds = array<i64: 8, 18>}, {transform_indices = @transform_4, window_bounds = array<i64: 1, 18, 8>}, {pipeline_mode = #tpu.pipeline_mode<synchronous>, transform_indices = @transform_5, window_bounds = array<i64: 3, 12, 16>}, {pipeline_mode = #tpu.pipeline_mode<synchronous>, transform_indices = @transform_6, window_bounds = array<i64: 1, 16>}, {pipeline_mode = #tpu.pipeline_mode<synchronous>, transform_indices = @transform_7, window_bounds = array<i64: 1, 16>}, {pipeline_mode = #tpu.pipeline_mode<synchronous>, transform_indices = @transform_8, window_bounds = array<i64: 1, 1>}, {transform_indices = @transform_9, window_bounds = array<i64: 1, 16, 16>}]} {
    %0 = arith.index_cast %arg1 : i32 to index
    %1 = memref.load %arg2[%0] : memref<1xi32, #tpu.memory_space<smem>>
    %c0 = arith.constant 0 : index
    %2 = arith.index_cast %1 : i32 to index
    %c0_0 = arith.constant 0 : index
    %c0_1 = arith.constant 0 : index
    %3 = vector.load %arg3[%c0, %2, %c0_0, %c0_1] : memref<1x10x10x8xbf16, #tpu.memory_space<vmem>>, vector<1x10x10x8xbf16>
    %4 = vector.shape_cast %3 : vector<1x10x10x8xbf16> to vector<10x10x8xbf16>
    %cst = arith.constant 0.000000e+00 : f32
    %5 = vector.broadcast %cst : f32 to vector<64x4xf32>
    %6 = vector.extract_strided_slice %4 {offsets = [0, 0, 0], sizes = [10, 8, 8], strides = [1, 1, 1]} : vector<10x10x8xbf16> to vector<10x8x8xbf16>
    %7 = vector.extract_strided_slice %6 {offsets = [0, 0, 0], sizes = [8, 8, 8], strides = [1, 1, 1]} : vector<10x8x8xbf16> to vector<8x8x8xbf16>
    %8 = vector.extract_strided_slice %6 {offsets = [1, 0, 0], sizes = [8, 8, 8], strides = [1, 1, 1]} : vector<10x8x8xbf16> to vector<8x8x8xbf16>
    %9 = vector.extract_strided_slice %6 {offsets = [2, 0, 0], sizes = [8, 8, 8], strides = [1, 1, 1]} : vector<10x8x8xbf16> to vector<8x8x8xbf16>
    %10 = tpu.concatenate %7, %8, %9 in 2 : vector<8x8x8xbf16>, vector<8x8x8xbf16>, vector<8x8x8xbf16> -> vector<8x8x24xbf16>
    %11 = vector.shape_cast %10 : vector<8x8x24xbf16> to vector<64x24xbf16>
    %c0_2 = arith.constant 0 : index
    %c0_3 = arith.constant 0 : index
    %c0_4 = arith.constant 0 : index
    %12 = vector.load %arg4[%c0_2, %c0_3, %c0_4] : memref<3x24x4xbf16, #tpu.memory_space<vmem>>, vector<1x24x4xbf16>
    %13 = vector.shape_cast %12 : vector<1x24x4xbf16> to vector<24x4xbf16>
    %cst_5 = arith.constant dense<0.000000e+00> : vector<64x4xf32>
    %14 = tpu.matmul %11, %13, %cst_5 {dimension_numbers = #tpu.dot_dimension_numbers<[1], [0], [0], [1], [0, 0, 1, 1], [], []>} : vector<64x24xbf16>, vector<24x4xbf16>, vector<64x4xf32> -> vector<64x4xf32>
    %15 = arith.addf %5, %14 : vector<64x4xf32>
    %16 = vector.extract_strided_slice %4 {offsets = [0, 1, 0], sizes = [10, 8, 8], strides = [1, 1, 1]} : vector<10x10x8xbf16> to vector<10x8x8xbf16>
    %17 = vector.extract_strided_slice %16 {offsets = [0, 0, 0], sizes = [8, 8, 8], strides = [1, 1, 1]} : vector<10x8x8xbf16> to vector<8x8x8xbf16>
    %18 = vector.extract_strided_slice %16 {offsets = [1, 0, 0], sizes = [8, 8, 8], strides = [1, 1, 1]} : vector<10x8x8xbf16> to vector<8x8x8xbf16>
    %19 = vector.extract_strided_slice %16 {offsets = [2, 0, 0], sizes = [8, 8, 8], strides = [1, 1, 1]} : vector<10x8x8xbf16> to vector<8x8x8xbf16>
    %20 = tpu.concatenate %17, %18, %19 in 2 : vector<8x8x8xbf16>, vector<8x8x8xbf16>, vector<8x8x8xbf16> -> vector<8x8x24xbf16>
    %21 = vector.shape_cast %20 : vector<8x8x24xbf16> to vector<64x24xbf16>
    %c1 = arith.constant 1 : index
    %c0_6 = arith.constant 0 : index
    %c0_7 = arith.constant 0 : index
    %22 = vector.load %arg4[%c1, %c0_6, %c0_7] : memref<3x24x4xbf16, #tpu.memory_space<vmem>>, vector<1x24x4xbf16>
    %23 = vector.shape_cast %22 : vector<1x24x4xbf16> to vector<24x4xbf16>
    %cst_8 = arith.constant dense<0.000000e+00> : vector<64x4xf32>
    %24 = tpu.matmul %21, %23, %cst_8 {dimension_numbers = #tpu.dot_dimension_numbers<[1], [0], [0], [1], [0, 0, 1, 1], [], []>} : vector<64x24xbf16>, vector<24x4xbf16>, vector<64x4xf32> -> vector<64x4xf32>
    %25 = arith.addf %15, %24 : vector<64x4xf32>
    %26 = vector.extract_strided_slice %4 {offsets = [0, 2, 0], sizes = [10, 8, 8], strides = [1, 1, 1]} : vector<10x10x8xbf16> to vector<10x8x8xbf16>
    %27 = vector.extract_strided_slice %26 {offsets = [0, 0, 0], sizes = [8, 8, 8], strides = [1, 1, 1]} : vector<10x8x8xbf16> to vector<8x8x8xbf16>
    %28 = vector.extract_strided_slice %26 {offsets = [1, 0, 0], sizes = [8, 8, 8], strides = [1, 1, 1]} : vector<10x8x8xbf16> to vector<8x8x8xbf16>
    %29 = vector.extract_strided_slice %26 {offsets = [2, 0, 0], sizes = [8, 8, 8], strides = [1, 1, 1]} : vector<10x8x8xbf16> to vector<8x8x8xbf16>
    %30 = tpu.concatenate %27, %28, %29 in 2 : vector<8x8x8xbf16>, vector<8x8x8xbf16>, vector<8x8x8xbf16> -> vector<8x8x24xbf16>
    %31 = vector.shape_cast %30 : vector<8x8x24xbf16> to vector<64x24xbf16>
    %c2 = arith.constant 2 : index
    %c0_9 = arith.constant 0 : index
    %c0_10 = arith.constant 0 : index
    %32 = vector.load %arg4[%c2, %c0_9, %c0_10] : memref<3x24x4xbf16, #tpu.memory_space<vmem>>, vector<1x24x4xbf16>
    %33 = vector.shape_cast %32 : vector<1x24x4xbf16> to vector<24x4xbf16>
    %cst_11 = arith.constant dense<0.000000e+00> : vector<64x4xf32>
    %34 = tpu.matmul %31, %33, %cst_11 {dimension_numbers = #tpu.dot_dimension_numbers<[1], [0], [0], [1], [0, 0, 1, 1], [], []>} : vector<64x24xbf16>, vector<24x4xbf16>, vector<64x4xf32> -> vector<64x4xf32>
    %35 = arith.addf %25, %34 : vector<64x4xf32>
    %c0_12 = arith.constant 0 : index
    %c0_13 = arith.constant 0 : index
    %36 = vector.load %arg5[%c0_12, %c0_13] : memref<1x4xf32, #tpu.memory_space<vmem>>, vector<1x4xf32>
    %37 = vector.broadcast %36 : vector<1x4xf32> to vector<64x4xf32>
    %38 = arith.addf %35, %37 : vector<64x4xf32>
    %39 = vector.shape_cast %38 : vector<64x4xf32> to vector<8x8x4xf32>
    %40 = tpu.transpose %39, [0, 2, 1] : vector<8x8x4xf32> -> vector<8x4x8xf32>
    %41 = vector.shape_cast %40 : vector<8x4x8xf32> to vector<32x8xf32>
    %42 = arith.truncf %41 : vector<32x8xf32> to vector<32x8xbf16>
    %c0_14 = arith.constant 0 : index
    %c0_15 = arith.constant 0 : index
    %43 = vector.load %arg6[%c0_14, %c0_15] : memref<8x18xbf16, #tpu.memory_space<vmem>>, vector<8x18xbf16>
    %cst_16 = arith.constant dense<0.000000e+00> : vector<32x18xf32>
    %44 = tpu.matmul %42, %43, %cst_16 {dimension_numbers = #tpu.dot_dimension_numbers<[1], [0], [0], [1], [0, 0, 1, 1], [], []>} : vector<32x8xbf16>, vector<8x18xbf16>, vector<32x18xf32> -> vector<32x18xf32>
    %45 = vector.shape_cast %44 : vector<32x18xf32> to vector<8x4x18xf32>
    %46 = tpu.transpose %45, [0, 2, 1] : vector<8x4x18xf32> -> vector<8x18x4xf32>
    %47 = arith.truncf %46 : vector<8x18x4xf32> to vector<8x18x4xbf16>
    %48 = vector.shape_cast %47 : vector<8x18x4xbf16> to vector<8x72xbf16>
    %c0_17 = arith.constant 0 : index
    %c0_18 = arith.constant 0 : index
    %c0_19 = arith.constant 0 : index
    %49 = vector.load %arg7[%c0_17, %c0_18, %c0_19] : memref<1x18x8xbf16, #tpu.memory_space<vmem>>, vector<1x18x8xbf16>
    %50 = vector.shape_cast %49 : vector<1x18x8xbf16> to vector<18x8xbf16>
    %cst_20 = arith.constant dense<0.000000e+00> : vector<18x72xf32>
    %51 = tpu.matmul %50, %48, %cst_20 {dimension_numbers = #tpu.dot_dimension_numbers<[1], [0], [0], [1], [0, 0, 1, 1], [], []>} : vector<18x8xbf16>, vector<8x72xbf16>, vector<18x72xf32> -> vector<18x72xf32>
    %52 = vector.shape_cast %51 : vector<18x72xf32> to vector<18x18x4xf32>
    %53 = arith.truncf %52 : vector<18x18x4xf32> to vector<18x18x4xbf16>
    %cst_21 = arith.constant 0.000000e+00 : f32
    %54 = vector.broadcast %cst_21 : f32 to vector<256x16xf32>
    %55 = vector.extract_strided_slice %53 {offsets = [0, 0, 0], sizes = [18, 16, 4], strides = [1, 1, 1]} : vector<18x18x4xbf16> to vector<18x16x4xbf16>
    %56 = vector.extract_strided_slice %55 {offsets = [0, 0, 0], sizes = [16, 16, 4], strides = [1, 1, 1]} : vector<18x16x4xbf16> to vector<16x16x4xbf16>
    %57 = vector.extract_strided_slice %55 {offsets = [1, 0, 0], sizes = [16, 16, 4], strides = [1, 1, 1]} : vector<18x16x4xbf16> to vector<16x16x4xbf16>
    %58 = vector.extract_strided_slice %55 {offsets = [2, 0, 0], sizes = [16, 16, 4], strides = [1, 1, 1]} : vector<18x16x4xbf16> to vector<16x16x4xbf16>
    %59 = tpu.concatenate %56, %57, %58 in 2 : vector<16x16x4xbf16>, vector<16x16x4xbf16>, vector<16x16x4xbf16> -> vector<16x16x12xbf16>
    %60 = vector.shape_cast %59 : vector<16x16x12xbf16> to vector<256x12xbf16>
    %c0_22 = arith.constant 0 : index
    %c0_23 = arith.constant 0 : index
    %c0_24 = arith.constant 0 : index
    %61 = vector.load %arg8[%c0_22, %c0_23, %c0_24] : memref<3x12x16xbf16, #tpu.memory_space<vmem>>, vector<1x12x16xbf16>
    %62 = vector.shape_cast %61 : vector<1x12x16xbf16> to vector<12x16xbf16>
    %cst_25 = arith.constant dense<0.000000e+00> : vector<256x16xf32>
    %63 = tpu.matmul %60, %62, %cst_25 {dimension_numbers = #tpu.dot_dimension_numbers<[1], [0], [0], [1], [0, 0, 1, 1], [], []>} : vector<256x12xbf16>, vector<12x16xbf16>, vector<256x16xf32> -> vector<256x16xf32>
    %64 = arith.addf %54, %63 : vector<256x16xf32>
    %65 = vector.extract_strided_slice %53 {offsets = [0, 1, 0], sizes = [18, 16, 4], strides = [1, 1, 1]} : vector<18x18x4xbf16> to vector<18x16x4xbf16>
    %66 = vector.extract_strided_slice %65 {offsets = [0, 0, 0], sizes = [16, 16, 4], strides = [1, 1, 1]} : vector<18x16x4xbf16> to vector<16x16x4xbf16>
    %67 = vector.extract_strided_slice %65 {offsets = [1, 0, 0], sizes = [16, 16, 4], strides = [1, 1, 1]} : vector<18x16x4xbf16> to vector<16x16x4xbf16>
    %68 = vector.extract_strided_slice %65 {offsets = [2, 0, 0], sizes = [16, 16, 4], strides = [1, 1, 1]} : vector<18x16x4xbf16> to vector<16x16x4xbf16>
    %69 = tpu.concatenate %66, %67, %68 in 2 : vector<16x16x4xbf16>, vector<16x16x4xbf16>, vector<16x16x4xbf16> -> vector<16x16x12xbf16>
    %70 = vector.shape_cast %69 : vector<16x16x12xbf16> to vector<256x12xbf16>
    %c1_26 = arith.constant 1 : index
    %c0_27 = arith.constant 0 : index
    %c0_28 = arith.constant 0 : index
    %71 = vector.load %arg8[%c1_26, %c0_27, %c0_28] : memref<3x12x16xbf16, #tpu.memory_space<vmem>>, vector<1x12x16xbf16>
    %72 = vector.shape_cast %71 : vector<1x12x16xbf16> to vector<12x16xbf16>
    %cst_29 = arith.constant dense<0.000000e+00> : vector<256x16xf32>
    %73 = tpu.matmul %70, %72, %cst_29 {dimension_numbers = #tpu.dot_dimension_numbers<[1], [0], [0], [1], [0, 0, 1, 1], [], []>} : vector<256x12xbf16>, vector<12x16xbf16>, vector<256x16xf32> -> vector<256x16xf32>
    %74 = arith.addf %64, %73 : vector<256x16xf32>
    %75 = vector.extract_strided_slice %53 {offsets = [0, 2, 0], sizes = [18, 16, 4], strides = [1, 1, 1]} : vector<18x18x4xbf16> to vector<18x16x4xbf16>
    %76 = vector.extract_strided_slice %75 {offsets = [0, 0, 0], sizes = [16, 16, 4], strides = [1, 1, 1]} : vector<18x16x4xbf16> to vector<16x16x4xbf16>
    %77 = vector.extract_strided_slice %75 {offsets = [1, 0, 0], sizes = [16, 16, 4], strides = [1, 1, 1]} : vector<18x16x4xbf16> to vector<16x16x4xbf16>
    %78 = vector.extract_strided_slice %75 {offsets = [2, 0, 0], sizes = [16, 16, 4], strides = [1, 1, 1]} : vector<18x16x4xbf16> to vector<16x16x4xbf16>
    %79 = tpu.concatenate %76, %77, %78 in 2 : vector<16x16x4xbf16>, vector<16x16x4xbf16>, vector<16x16x4xbf16> -> vector<16x16x12xbf16>
    %80 = vector.shape_cast %79 : vector<16x16x12xbf16> to vector<256x12xbf16>
    %c2_30 = arith.constant 2 : index
    %c0_31 = arith.constant 0 : index
    %c0_32 = arith.constant 0 : index
    %81 = vector.load %arg8[%c2_30, %c0_31, %c0_32] : memref<3x12x16xbf16, #tpu.memory_space<vmem>>, vector<1x12x16xbf16>
    %82 = vector.shape_cast %81 : vector<1x12x16xbf16> to vector<12x16xbf16>
    %cst_33 = arith.constant dense<0.000000e+00> : vector<256x16xf32>
    %83 = tpu.matmul %80, %82, %cst_33 {dimension_numbers = #tpu.dot_dimension_numbers<[1], [0], [0], [1], [0, 0, 1, 1], [], []>} : vector<256x12xbf16>, vector<12x16xbf16>, vector<256x16xf32> -> vector<256x16xf32>
    %84 = arith.addf %74, %83 : vector<256x16xf32>
    %c0_34 = arith.constant 0 : index
    %c0_35 = arith.constant 0 : index
    %85 = vector.load %arg9[%c0_34, %c0_35] : memref<1x16xf32, #tpu.memory_space<vmem>>, vector<1x16xf32>
    %86 = vector.broadcast %85 : vector<1x16xf32> to vector<256x16xf32>
    %87 = arith.addf %84, %86 : vector<256x16xf32>
    %cst_36 = arith.constant 0.000000e+00 : f32
    %88 = vector.broadcast %cst_36 : f32 to vector<256x16xf32>
    %89 = arith.maximumf %87, %88 : vector<256x16xf32>
    %90 = vector.shape_cast %89 : vector<256x16xf32> to vector<16x16x16xf32>
    %c0_37 = arith.constant 0 : index
    %c0_38 = arith.constant 0 : index
    %91 = vector.load %arg10[%c0_37, %c0_38] : memref<1x16xf32, #tpu.memory_space<vmem>>, vector<1x16xf32>
    %92 = vector.shape_cast %91 : vector<1x16xf32> to vector<1x1x16xf32>
    %93 = vector.broadcast %92 : vector<1x1x16xf32> to vector<16x16x16xf32>
    %94 = arith.mulf %90, %93 : vector<16x16x16xf32>
    %cst_39 = arith.constant dense<0.000000e+00> : vector<16x16xf32>
    %95 = vector.multi_reduction <add>, %94, %cst_39 [2] : vector<16x16x16xf32> to vector<16x16xf32>
    %c0_40 = arith.constant 0 : index
    %c0_41 = arith.constant 0 : index
    %96 = vector.load %arg11[%c0_40, %c0_41] : memref<1x1xf32, #tpu.memory_space<vmem>>, vector<1x1xf32>
    %97 = vector.broadcast %96 : vector<1x1xf32> to vector<16x16xf32>
    %98 = arith.addf %95, %97 : vector<16x16xf32>
    %99 = arith.negf %98 : vector<16x16xf32>
    %100 = math.exp %99 : vector<16x16xf32>
    %cst_42 = arith.constant 1.000000e+00 : f32
    %101 = vector.broadcast %cst_42 : f32 to vector<16x16xf32>
    %102 = arith.addf %101, %100 : vector<16x16xf32>
    %103 = arith.divf %101, %102 : vector<16x16xf32>
    %c0_43 = arith.constant 0 : index
    %c0_44 = arith.constant 0 : index
    %c0_45 = arith.constant 0 : index
    %104 = vector.load %arg12[%c0_43, %c0_44, %c0_45] : memref<1x16x16xf32, #tpu.memory_space<vmem>>, vector<1x16x16xf32>
    %105 = vector.shape_cast %104 : vector<1x16x16xf32> to vector<16x16xf32>
    %106 = vector.shape_cast %103 : vector<16x16xf32> to vector<1x16x16xf32>
    tpu.vector_store %arg12[%c0_43, %c0_44, %c0_45], %106 {strides = array<i32>} : memref<1x16x16xf32, #tpu.memory_space<vmem>>, vector<1x16x16xf32>,
    return
  }
  func.func @transform_0(%arg0: i32, %arg1: i32, %arg2: memref<1xi32, #tpu.memory_space<smem>>) -> (i32, i32, i32, i32) {
    %c0_i32 = arith.constant 0 : i32
    %c0_i32_0 = arith.constant 0 : i32
    %c0_i32_1 = arith.constant 0 : i32
    %c0_i32_2 = arith.constant 0 : i32
    return %arg0, %c0_i32, %c0_i32_0, %c0_i32_1 : i32, i32, i32, i32
  }
  func.func @transform_1(%arg0: i32, %arg1: i32, %arg2: memref<1xi32, #tpu.memory_space<smem>>) -> (i32, i32, i32) {
    %c0_i32 = arith.constant 0 : i32
    %c0_i32_0 = arith.constant 0 : i32
    %c0_i32_1 = arith.constant 0 : i32
    %c0_i32_2 = arith.constant 0 : i32
    return %c0_i32, %c0_i32_0, %c0_i32_1 : i32, i32, i32
  }
  func.func @transform_2(%arg0: i32, %arg1: i32, %arg2: memref<1xi32, #tpu.memory_space<smem>>) -> (i32, i32) {
    %c0_i32 = arith.constant 0 : i32
    %c0_i32_0 = arith.constant 0 : i32
    %c0_i32_1 = arith.constant 0 : i32
    return %c0_i32, %c0_i32_0 : i32, i32
  }
  func.func @transform_3(%arg0: i32, %arg1: i32, %arg2: memref<1xi32, #tpu.memory_space<smem>>) -> (i32, i32) {
    %c0_i32 = arith.constant 0 : i32
    %c0_i32_0 = arith.constant 0 : i32
    %c0_i32_1 = arith.constant 0 : i32
    return %c0_i32, %c0_i32_0 : i32, i32
  }
  func.func @transform_4(%arg0: i32, %arg1: i32, %arg2: memref<1xi32, #tpu.memory_space<smem>>) -> (i32, i32, i32) {
    %c0_i32 = arith.constant 0 : i32
    %c0_i32_0 = arith.constant 0 : i32
    %c0_i32_1 = arith.constant 0 : i32
    return %arg1, %c0_i32, %c0_i32_0 : i32, i32, i32
  }
  func.func @transform_5(%arg0: i32, %arg1: i32, %arg2: memref<1xi32, #tpu.memory_space<smem>>) -> (i32, i32, i32) {
    %c0_i32 = arith.constant 0 : i32
    %c0_i32_0 = arith.constant 0 : i32
    %c0_i32_1 = arith.constant 0 : i32
    %c0_i32_2 = arith.constant 0 : i32
    return %c0_i32, %c0_i32_0, %c0_i32_1 : i32, i32, i32
  }
  func.func @transform_6(%arg0: i32, %arg1: i32, %arg2: memref<1xi32, #tpu.memory_space<smem>>) -> (i32, i32) {
    %c0_i32 = arith.constant 0 : i32
    %c0_i32_0 = arith.constant 0 : i32
    %c0_i32_1 = arith.constant 0 : i32
    return %c0_i32, %c0_i32_0 : i32, i32
  }
  func.func @transform_7(%arg0: i32, %arg1: i32, %arg2: memref<1xi32, #tpu.memory_space<smem>>) -> (i32, i32) {
    %c0_i32 = arith.constant 0 : i32
    %c0_i32_0 = arith.constant 0 : i32
    %c0_i32_1 = arith.constant 0 : i32
    return %c0_i32, %c0_i32_0 : i32, i32
  }
  func.func @transform_8(%arg0: i32, %arg1: i32, %arg2: memref<1xi32, #tpu.memory_space<smem>>) -> (i32, i32) {
    %c0_i32 = arith.constant 0 : i32
    %c0_i32_0 = arith.constant 0 : i32
    %c0_i32_1 = arith.constant 0 : i32
    return %c0_i32, %c0_i32_0 : i32, i32
  }
  func.func @transform_9(%arg0: i32, %arg1: i32, %arg2: memref<1xi32, #tpu.memory_space<smem>>) -> (i32, i32, i32) {
    %c0_i32 = arith.constant 0 : i32
    %c0_i32_0 = arith.constant 0 : i32
    return %arg0, %arg1, %c0_i32 : i32, i32, i32
  }
}

</mosaic_0001>

<llo_original>
// kernel: tpu_custom_call.1
$region0: #{tpu_custom_call.1}
  #allocation0 [shape = 'u32[]', space=smem, size = 0x4, offset = 0x4, fixed_abs, tag = 'smem constant byte address 0x4 - core index']
  #allocation1 [shape = 'u32[144,128]{1,0:T(1,128)}', space=vmem, size = 0x12000, scoped, tag = 'internal scratch']
  #allocation2 [shape = 's32[1]{0}', space=sflag, size = 0x4, scoped, tag = 'scoped memory for tpu_custom_call.1']
  #allocation3 [shape = 's32[1]{0:T(128)S(6)}', space=smem, size = 0x200, scoped, tag = 'prefetched SMEM operand 0']
  #allocation4 [shape = 'f32[1,1]{1,0:T(1,128)S(1)}', space=vmem, size = 0x200, scoped, tag = 'scoped memory for tpu_custom_call.1']
  %s0 = inlined_call_operand.<no memory space> [shape: s32[1], index: 0, kind: input, shape index: {}]
  %s1 = inlined_call_operand.vmem [shape: bf16[2,10,10,8], index: 1, kind: input, shape index: {}]
  %s2 = inlined_call_operand.vmem [shape: bf16[3,24,4], index: 2, kind: input, shape index: {}]
  %s3 = inlined_call_operand.vmem [shape: f32[1,4], index: 3, kind: input, shape index: {}]
  %s4 = inlined_call_operand.vmem [shape: bf16[8,18], index: 4, kind: input, shape index: {}]
  %s5 = inlined_call_operand.vmem [shape: bf16[1,18,8], index: 5, kind: input, shape index: {}]
  %s6 = inlined_call_operand.vmem [shape: bf16[3,12,16], index: 6, kind: input, shape index: {}]
  %s7 = inlined_call_operand.vmem [shape: f32[1,16], index: 7, kind: input, shape index: {}]
  %s8 = inlined_call_operand.vmem [shape: f32[1,16], index: 8, kind: input, shape index: {}]
  %s9 = inlined_call_operand.<no memory space> [shape: f32[1,1], index: 9, kind: input, shape index: {}]
  %s10 = inlined_call_operand.hbm [shape: f32[2,16,16], index: 10, kind: output, shape index: {}]
  %s11 = sld [smem:[#allocation0]]
  $region69: #{tpu_custom_call.1} parent=0
    _
  %s13 = ssub.s32 1, %s11
  %s14 = scalar_select 0, %s13, %s11
  %15 = sst [smem:[#allocation3]] %s0
  %v16 = vstv %s9
  %17 = vst [vmem:[#allocation4] sm:$0x1] %v16
  $region1: #{tpu_custom_call.1} parent=0
    #allocation5 [shape = 'u8[16384]{0}', space=vmem, size = 0x4000, scoped, tag = 'output window, operand 0']
    #allocation6 [shape = 's32[2]{0}', space=sflag, size = 0x8, scoped, tag = 'scoped memory for tpu_custom_call.1']
    %18 = vsyncpa [#allocation6], 0
    %s19 = scalar_lea.sflag [#allocation6], 1
    %20 = vsyncpa %s19, 0
    loop: start=0, step=1, limit=4
    $region2: #{tpu_custom_call.1} parent=1 // loop_pre_header
      _
    $region3: #{tpu_custom_call.1} parent=1 // loop_header
      %s22 = sphi 0, %s26
      %p23 = scmp.ge.s32.totalorder %s22, 4
      %s29 = sphi 0, %s41
      %s30 = sphi 0, %s37
      %s31 = sphi 0, %s29
      %s32 = sphi 0, %s30
      %s33 = sphi 0, %s31
      %s34 = sphi 0, %s32
      %s44 = sphi 0, %s46
      %s47 = sphi 0, %s44
      %s48 = sphi 0, %s47
      %s64 = sphi 0, %s48
      %s68 = sphi 0, %s68
      %s70 = sphi 0, %s68
      %s71 = sphi 0, %s70
      %s85 = sphi 0, %s71
      %s89 = sphi 0, %s89
      %s91 = sphi 0, %s89
      %s92 = sphi 0, %s91
      %s106 = sphi 0, %s92
      %s110 = sphi 0, %s110
      %s112 = sphi 0, %s110
      %s113 = sphi 0, %s112
      %s127 = sphi 0, %s113
      %s133 = sphi 0, %s135
      %s136 = sphi 0, %s133
      %s137 = sphi 0, %s136
      %s153 = sphi 0, %s137
      %s157 = sphi 0, %s157
      %s159 = sphi 0, %s157
      %s160 = sphi 0, %s159
      %s174 = sphi 0, %s160
      %s178 = sphi 0, %s178
      %s180 = sphi 0, %s178
      %s181 = sphi 0, %s180
      %s195 = sphi 0, %s181
      %s199 = sphi 0, %s199
      %s201 = sphi 0, %s199
      %s202 = sphi 0, %s201
      %s216 = sphi 0, %s202
      %s220 = sphi 0, %s220
      %s222 = sphi 0, %s220
      %s223 = sphi 0, %s222
      %s237 = sphi 0, %s223
      %s245 = sphi 0, %s247
      %s248 = sphi 0, %s245
      %s249 = sphi 0, %s248
      %s265 = sphi 0, %s249
    $region4: #{tpu_custom_call.1} parent=1 // loop_header_branch
      %25 = sbr.rel (%p23) target = $region8
    $region5: #{tpu_custom_call.1} parent=1 // loop_body
      %s27 = ssub.s32 %s22, 1
      %s28 = ssub.s32 %s22, 2
      %s35 = sadd.s32 1, %s30
      %p36 = scmp.ge.s32.totalorder %s35, 1
      %s37 = scalar_select %p36, 0, %s35
      %s38 = sadd.s32 1, %s29
      %s39 = scalar_select %p36, %s38, %s29
      %p40 = scmp.ge.s32.totalorder %s39, 2
      %s41 = scalar_select %p40, 0, %s39
      %s42 = ssub.s32 %s29, %s41
      %p43 = scmp.eq.s32.totalorder %s42, 0
      %s45 = sadd.s32 %s44, 1
      %s46 = scalar_select %p43, %s44, %s45
      %p49 = pneg %p43
      %p50 = scmp.eq.s32.totalorder %s22, 1
      %p51 = por %p49, %p50
      %p52 = scmp.ne.s32.totalorder %s44, %s47
      %p53 = scmp.eq.s32.totalorder %s22, 0
      %p54 = por %p52, %p53
      %p55 = scmp.ne.s32.totalorder %s44, %s47
      %p56 = scmp.eq.s32.totalorder %s27, 1
      %p57 = por %p55, %p56
      %p58 = scmp.ne.s32.totalorder %s47, %s48
      %p59 = scmp.eq.s32.totalorder %s27, 0
      %p60 = por %p58, %p59
      %p61 = scmp.ne.s32.totalorder %s47, %s48
      %p62 = scmp.eq.s32.totalorder %s28, 1
      %p63 = por %p61, %p62
      %p65 = scmp.ne.s32.totalorder %s48, %s64
      %p66 = scmp.eq.s32.totalorder %s28, 0
      %p67 = por %p65, %p66
      %s69 = sadd.s32 %s68, 1
      %p72 = scmp.eq.s32.totalorder %s22, 1
      %p73 = scmp.ne.s32.totalorder %s68, %s70
      %p74 = scmp.eq.s32.totalorder %s22, 0
      %p75 = por %p73, %p74
      %p76 = scmp.ne.s32.totalorder %s68, %s70
      %p77 = scmp.eq.s32.totalorder %s27, 1
      %p78 = por %p76, %p77
      %p79 = scmp.ne.s32.totalorder %s70, %s71
      %p80 = scmp.eq.s32.totalorder %s27, 0
      %p81 = por %p79, %p80
      %p82 = scmp.ne.s32.totalorder %s70, %s71
      %p83 = scmp.eq.s32.totalorder %s28, 1
      %p84 = por %p82, %p83
      %p86 = scmp.ne.s32.totalorder %s71, %s85
      %p87 = scmp.eq.s32.totalorder %s28, 0
      %p88 = por %p86, %p87
      %s90 = sadd.s32 %s89, 1
      %p93 = scmp.eq.s32.totalorder %s22, 1
      %p94 = scmp.ne.s32.totalorder %s89, %s91
      %p95 = scmp.eq.s32.totalorder %s22, 0
      %p96 = por %p94, %p95
      %p97 = scmp.ne.s32.totalorder %s89, %s91
      %p98 = scmp.eq.s32.totalorder %s27, 1
      %p99 = por %p97, %p98
      %p100 = scmp.ne.s32.totalorder %s91, %s92
      %p101 = scmp.eq.s32.totalorder %s27, 0
      %p102 = por %p100, %p101
      %p103 = scmp.ne.s32.totalorder %s91, %s92
      %p104 = scmp.eq.s32.totalorder %s28, 1
      %p105 = por %p103, %p104
      %p107 = scmp.ne.s32.totalorder %s92, %s106
      %p108 = scmp.eq.s32.totalorder %s28, 0
      %p109 = por %p107, %p108
      %s111 = sadd.s32 %s110, 1
      %p114 = scmp.eq.s32.totalorder %s22, 1
      %p115 = scmp.ne.s32.totalorder %s110, %s112
      %p116 = scmp.eq.s32.totalorder %s22, 0
      %p117 = por %p115, %p116
      %p118 = scmp.ne.s32.totalorder %s110, %s112
      %p119 = scmp.eq.s32.totalorder %s27, 1
      %p120 = por %p118, %p119
      %p121 = scmp.ne.s32.totalorder %s112, %s113
      %p122 = scmp.eq.s32.totalorder %s27, 0
      %p123 = por %p121, %p122
      %p124 = scmp.ne.s32.totalorder %s112, %s113
      %p125 = scmp.eq.s32.totalorder %s28, 1
      %p126 = por %p124, %p125
      %p128 = scmp.ne.s32.totalorder %s113, %s127
      %p129 = scmp.eq.s32.totalorder %s28, 0
      %p130 = por %p128, %p129
      %s131 = ssub.s32 %s30, %s37
      %p132 = scmp.eq.s32.totalorder %s131, 0
      %s134 = sadd.s32 %s133, 1
      %s135 = scalar_select %p132, %s133, %s134
      %p138 = pneg %p132
      %p139 = scmp.eq.s32.totalorder %s22, 1
      %p140 = por %p138, %p139
      %p141 = scmp.ne.s32.totalorder %s133, %s136
      %p142 = scmp.eq.s32.totalorder %s22, 0
      %p143 = por %p141, %p142
      %p144 = scmp.ne.s32.totalorder %s133, %s136
      %p145 = scmp.eq.s32.totalorder %s27, 1
      %p146 = por %p144, %p145
      %p147 = scmp.ne.s32.totalorder %s136, %s137
      %p148 = scmp.eq.s32.totalorder %s27, 0
      %p149 = por %p147, %p148
      %p150 = scmp.ne.s32.totalorder %s136, %s137
      %p151 = scmp.eq.s32.totalorder %s28, 1
      %p152 = por %p150, %p151
      %p154 = scmp.ne.s32.totalorder %s137, %s153
      %p155 = scmp.eq.s32.totalorder %s28, 0
      %p156 = por %p154, %p155
      %s158 = sadd.s32 %s157, 1
      %p161 = scmp.eq.s32.totalorder %s22, 1
      %p162 = scmp.ne.s32.totalorder %s157, %s159
      %p163 = scmp.eq.s32.totalorder %s22, 0
      %p164 = por %p162, %p163
      %p165 = scmp.ne.s32.totalorder %s157, %s159
      %p166 = scmp.eq.s32.totalorder %s27, 1
      %p167 = por %p165, %p166
      %p168 = scmp.ne.s32.totalorder %s159, %s160
      %p169 = scmp.eq.s32.totalorder %s27, 0
      %p170 = por %p168, %p169
      %p171 = scmp.ne.s32.totalorder %s159, %s160
      %p172 = scmp.eq.s32.totalorder %s28, 1
      %p173 = por %p171, %p172
      %p175 = scmp.ne.s32.totalorder %s160, %s174
      %p176 = scmp.eq.s32.totalorder %s28, 0
      %p177 = por %p175, %p176
      %s179 = sadd.s32 %s178, 1
      %p182 = scmp.eq.s32.totalorder %s22, 1
      %p183 = scmp.ne.s32.totalorder %s178, %s180
      %p184 = scmp.eq.s32.totalorder %s22, 0
      %p185 = por %p183, %p184
      %p186 = scmp.ne.s32.totalorder %s178, %s180
      %p187 = scmp.eq.s32.totalorder %s27, 1
      %p188 = por %p186, %p187
      %p189 = scmp.ne.s32.totalorder %s180, %s181
      %p190 = scmp.eq.s32.totalorder %s27, 0
      %p191 = por %p189, %p190
      %p192 = scmp.ne.s32.totalorder %s180, %s181
      %p193 = scmp.eq.s32.totalorder %s28, 1
      %p194 = por %p192, %p193
      %p196 = scmp.ne.s32.totalorder %s181, %s195
      %p197 = scmp.eq.s32.totalorder %s28, 0
      %p198 = por %p196, %p197
      %s200 = sadd.s32 %s199, 1
      %p203 = scmp.eq.s32.totalorder %s22, 1
      %p204 = scmp.ne.s32.totalorder %s199, %s201
      %p205 = scmp.eq.s32.totalorder %s22, 0
      %p206 = por %p204, %p205
      %p207 = scmp.ne.s32.totalorder %s199, %s201
      %p208 = scmp.eq.s32.totalorder %s27, 1
      %p209 = por %p207, %p208
      %p210 = scmp.ne.s32.totalorder %s201, %s202
      %p211 = scmp.eq.s32.totalorder %s27, 0
      %p212 = por %p210, %p211
      %p213 = scmp.ne.s32.totalorder %s201, %s202
      %p214 = scmp.eq.s32.totalorder %s28, 1
      %p215 = por %p213, %p214
      %p217 = scmp.ne.s32.totalorder %s202, %s216
      %p218 = scmp.eq.s32.totalorder %s28, 0
      %p219 = por %p217, %p218
      %s221 = sadd.s32 %s220, 1
      %p224 = scmp.eq.s32.totalorder %s22, 1
      %p225 = scmp.ne.s32.totalorder %s220, %s222
      %p226 = scmp.eq.s32.totalorder %s22, 0
      %p227 = por %p225, %p226
      %p228 = scmp.ne.s32.totalorder %s220, %s222
      %p229 = scmp.eq.s32.totalorder %s27, 1
      %p230 = por %p228, %p229
      %p231 = scmp.ne.s32.totalorder %s222, %s223
      %p232 = scmp.eq.s32.totalorder %s27, 0
      %p233 = por %p231, %p232
      %p234 = scmp.ne.s32.totalorder %s222, %s223
      %p235 = scmp.eq.s32.totalorder %s28, 1
      %p236 = por %p234, %p235
      %p238 = scmp.ne.s32.totalorder %s223, %s237
      %p239 = scmp.eq.s32.totalorder %s28, 0
      %p240 = por %p238, %p239
      %s241 = ssub.s32 %s29, %s41
      %s242 = ssub.s32 %s30, %s37
      %s243 = sor.u32 %s241, %s242
      %p244 = scmp.eq.s32.totalorder %s243, 0
      %s246 = sadd.s32 %s245, 1
      %s247 = scalar_select %p244, %s245, %s246
      %p250 = pneg %p244
      %p251 = scmp.eq.s32.totalorder %s22, 1
      %p252 = por %p250, %p251
      %p253 = scmp.ne.s32.totalorder %s245, %s248
      %p254 = scmp.eq.s32.totalorder %s22, 0
      %p255 = por %p253, %p254
      %p256 = scmp.ne.s32.totalorder %s245, %s248
      %p257 = scmp.eq.s32.totalorder %s27, 1
      %p258 = por %p256, %p257
      %p259 = scmp.ne.s32.totalorder %s248, %s249
      %p260 = scmp.eq.s32.totalorder %s27, 0
      %p261 = por %p259, %p260
      %p262 = scmp.ne.s32.totalorder %s248, %s249
      %p263 = scmp.eq.s32.totalorder %s28, 1
      %p264 = por %p262, %p263
      %p266 = scmp.ne.s32.totalorder %s249, %s265
      %p267 = scmp.eq.s32.totalorder %s28, 0
      %p268 = por %p266, %p267
      %p269 = scmp.le.s32.totalorder 1, %s22
      %p270 = scmp.lt.s32.totalorder %s22, 3
      %p271 = pnand %p269, %p270
      %p272 = pneg %p271
      // Predicated region
      $region9: #{tpu_custom_call.1} parent=5 // pred_check
        _
      $region10: #{tpu_custom_call.1} parent=5 // pred_check_branch
        %274 = sbr.rel (%p271) target = $region12
      $region11: #{tpu_custom_call.1} parent=5 // pred_region
        %s275 = ssub.s32 %s22, 1
        // Predicated region
        $region13: #{tpu_custom_call.1} parent=11 // pred_check
          %p276 = pneg %p81
        $region14: #{tpu_custom_call.1} parent=11 // pred_check_branch
          %278 = sbr.rel (%p276) target = $region16
        $region15: #{tpu_custom_call.1} parent=11 // pred_region
          _
        $region16: #{tpu_custom_call.1} parent=11 // pred_fallthru
          _
        // Predicated region
        $region17: #{tpu_custom_call.1} parent=11 // pred_check
          %p279 = pneg %p102
        $region18: #{tpu_custom_call.1} parent=11 // pred_check_branch
          %281 = sbr.rel (%p279) target = $region20
        $region19: #{tpu_custom_call.1} parent=11 // pred_region
          _
        $region20: #{tpu_custom_call.1} parent=11 // pred_fallthru
          _
        // Predicated region
        $region21: #{tpu_custom_call.1} parent=11 // pred_check
          %p282 = pneg %p123
        $region22: #{tpu_custom_call.1} parent=11 // pred_check_branch
          %284 = sbr.rel (%p282) target = $region24
        $region23: #{tpu_custom_call.1} parent=11 // pred_region
          _
        $region24: #{tpu_custom_call.1} parent=11 // pred_fallthru
          _
        // Predicated region
        $region25: #{tpu_custom_call.1} parent=11 // pred_check
          %p285 = pneg %p149
        $region26: #{tpu_custom_call.1} parent=11 // pred_check_branch
          %287 = sbr.rel (%p285) target = $region28
        $region27: #{tpu_custom_call.1} parent=11 // pred_region
          %p288 = scmp.lt.s32.totalorder %s32, 0
          %s289 = scalar_select %p288, %s32, 0
          %s290 = smul.addr %s289, 3
          %s291 = smul.addr %s290, 4
          %s292 = scalar_lea.vmem %s5, %s291
        $region28: #{tpu_custom_call.1} parent=11 // pred_fallthru
          _
        // Predicated region
        $region29: #{tpu_custom_call.1} parent=11 // pred_check
          %p293 = pneg %p170
        $region30: #{tpu_custom_call.1} parent=11 // pred_check_branch
          %295 = sbr.rel (%p293) target = $region32
        $region31: #{tpu_custom_call.1} parent=11 // pred_region
          _
        $region32: #{tpu_custom_call.1} parent=11 // pred_fallthru
          _
        // Predicated region
        $region33: #{tpu_custom_call.1} parent=11 // pred_check
          %p296 = pneg %p191
        $region34: #{tpu_custom_call.1} parent=11 // pred_check_branch
          %298 = sbr.rel (%p296) target = $region36
        $region35: #{tpu_custom_call.1} parent=11 // pred_region
          _
        $region36: #{tpu_custom_call.1} parent=11 // pred_fallthru
          _
        // Predicated region
        $region37: #{tpu_custom_call.1} parent=11 // pred_check
          %p299 = pneg %p212
        $region38: #{tpu_custom_call.1} parent=11 // pred_check_branch
          %301 = sbr.rel (%p299) target = $region40
        $region39: #{tpu_custom_call.1} parent=11 // pred_region
          _
        $region40: #{tpu_custom_call.1} parent=11 // pred_fallthru
          _
        // Predicated region
        $region41: #{tpu_custom_call.1} parent=11 // pred_check
          %p302 = pneg %p233
        $region42: #{tpu_custom_call.1} parent=11 // pred_check_branch
          %304 = sbr.rel (%p302) target = $region44
        $region43: #{tpu_custom_call.1} parent=11 // pred_region
          _
        $region44: #{tpu_custom_call.1} parent=11 // pred_fallthru
          _
      $region12: #{tpu_custom_call.1} parent=5 // pred_fallthru
        _
      %p305 = scmp.lt.s32.totalorder %s22, 2
      // Predicated region
      $region45: #{tpu_custom_call.1} parent=5 // pred_check
        %p306 = pneg %p305
      $region46: #{tpu_custom_call.1} parent=5 // pred_check_branch
        %308 = sbr.rel (%p306) target = $region48
      $region47: #{tpu_custom_call.1} parent=5 // pred_region
        // Predicated region
        $region49: #{tpu_custom_call.1} parent=47 // pred_check
          %p309 = pneg %p54
        $region50: #{tpu_custom_call.1} parent=47 // pred_check_branch
          %311 = sbr.rel (%p309) target = $region52
        $region51: #{tpu_custom_call.1} parent=47 // pred_region
          %p312 = scmp.lt.s32.totalorder %s29, 1
          %s313 = scalar_select %p312, %s29, 1
          %s314 = smul.addr %s313, 20
          %s315 = smul.addr %s314, 4
          %s316 = scalar_lea.vmem %s1, %s315
        $region52: #{tpu_custom_call.1} parent=47 // pred_fallthru
          _
      $region48: #{tpu_custom_call.1} parent=5 // pred_fallthru
        _
      %p317 = scmp.le.s32.totalorder 1, %s22
      %p318 = scmp.lt.s32.totalorder %s22, 3
      %p319 = pnand %p317, %p318
      %p320 = pneg %p319
      // Predicated region
      $region53: #{tpu_custom_call.1} parent=5 // pred_check
        _
      $region54: #{tpu_custom_call.1} parent=5 // pred_check_branch
        %322 = sbr.rel (%p319) target = $region56
      $region55: #{tpu_custom_call.1} parent=5 // pred_region
        %s323 = ssub.s32 %s22, 1
        %p324 = scmp.lt.s32.totalorder %s31, 1
        %s325 = scalar_select %p324, %s31, 1
        %s326 = smul.addr %s325, 20
        %s327 = smul.addr %s326, 4
        %s328 = scalar_lea.vmem %s1, %s327
        %p329 = pneg %p60
        %p330 = pneg %p57
        %p331 = pneg %p81
        %p332 = pneg %p78
        %p333 = pneg %p102
        %p334 = pneg %p99
        %p335 = pneg %p123
        %p336 = pneg %p120
        %p337 = scmp.lt.s32.totalorder %s32, 0
        %s338 = scalar_select %p337, %s32, 0
        %s339 = smul.addr %s338, 3
        %s340 = smul.addr %s339, 4
        %s341 = scalar_lea.vmem %s5, %s340
        %p342 = pneg %p149
        %p343 = pneg %p146
        %p344 = pneg %p170
        %p345 = pneg %p167
        %p346 = pneg %p191
        %p347 = pneg %p188
        %p348 = pneg %p212
        %p349 = pneg %p209
        %p350 = pneg %p233
        %p351 = pneg %p230
        %p352 = pneg %p261
        %p353 = pneg %p258
        %s354 = sand.u32 %s248, 1
        %s355 = scalar_lea.sflag [#allocation6], %s354
        %s356 = sand.u32 %s248, 1
        %s357 = smul.addr %s356, 16
        %s358 = scalar_lea.vmem [#allocation5], %s357
        %p359 = scmp.lt.s32.totalorder %s31, 1
        %s360 = scalar_select %p359, %s31, 1
        %s361 = smul.addr %s360, 20
        %s362 = smul.addr %s361, 4
        %s363 = scalar_lea.vmem %s1, %s362
        %p364 = scmp.lt.s32.totalorder %s32, 0
        %s365 = scalar_select %p364, %s32, 0
        %s366 = smul.addr %s365, 3
        %s367 = smul.addr %s366, 4
        %s368 = scalar_lea.vmem %s5, %s367
        %s369 = smul.u32 2, %s32
        %s371 = sld [smem:[#allocation3 + %s32]]
        %s372 = smul.u32 %s371, 2
        %s373 = smul.addr %s372, 4
        %s374 = scalar_lea.vmem %s363, %s373
        %v375 = vld [vmem:[%s374] sm:$0xf]
        %v376 = vld [vmem:[%s374 + $0x4] sm:$0x1]
        %v377 = vld [vmem:[%s374 + $0x8] sm:$0xf]
        %v378 = vld [vmem:[%s374 + $0xc] sm:$0x1]
        %v379 = vld [vmem:[%s374 + $0x10] sm:$0xf]
        %v380 = vld [vmem:[%s374 + $0x14] sm:$0x1]
        %v381 = vld [vmem:[%s374 + $0x18] sm:$0xf]
        %v382 = vld [vmem:[%s374 + $0x1c] sm:$0x1]
        %v383 = vld [vmem:[%s374 + $0x20] sm:$0xf]
        %v384 = vld [vmem:[%s374 + $0x24] sm:$0x1]
        %v385 = vld [vmem:[%s374 + $0x28] sm:$0xf]
        %v386 = vld [vmem:[%s374 + $0x2c] sm:$0x1]
        %v387 = vld [vmem:[%s374 + $0x30] sm:$0xf]
        %v388 = vld [vmem:[%s374 + $0x34] sm:$0x1]
        %v389 = vld [vmem:[%s374 + $0x38] sm:$0xf]
        %v390 = vld [vmem:[%s374 + $0x3c] sm:$0x1]
        %v391 = vld [vmem:[%s374 + $0x40] sm:$0xf]
        %v392 = vld [vmem:[%s374 + $0x44] sm:$0x1]
        %v393 = vld [vmem:[%s374 + $0x48] sm:$0xf]
        %v394 = vld [vmem:[%s374 + $0x4c] sm:$0x1]
        %v403 = vunpack.c.l.b16 %v377
        %v404 = vunpack.c.l.b16 %v379
        %v405 = vunpack.c.l.b16 %v381
        %v406 = vunpack.c.l.b16 %v383
        %v407 = vunpack.c.l.b16 %v385
        %v408 = vunpack.c.l.b16 %v387
        %v409 = vunpack.c.l.b16 %v389
        %v410 = vunpack.c.l.b16 %v391
        %v411 = vpack.c.b16 %v403, %v403
        %v412 = vpack.c.b16 %v404, %v404
        %v413 = vpack.c.b16 %v405, %v405
        %v414 = vpack.c.b16 %v406, %v406
        %v415 = vpack.c.b16 %v407, %v407
        %v416 = vpack.c.b16 %v408, %v408
        %v417 = vpack.c.b16 %v409, %v409
        %v418 = vpack.c.b16 %v410, %v410
        %419 = vrot.lane.b32.xlu0 %v411, 8
        %v420 = vpop.permute.xlu0 %419
        %421 = vrot.lane.b32.xlu0 %v412, 8
        %v422 = vpop.permute.xlu0 %421
        %423 = vrot.lane.b32.xlu0 %v413, 8
        %v424 = vpop.permute.xlu0 %423
        %425 = vrot.lane.b32.xlu0 %v414, 8
        %v426 = vpop.permute.xlu0 %425
        %427 = vrot.lane.b32.xlu0 %v415, 8
        %v428 = vpop.permute.xlu0 %427
        %429 = vrot.lane.b32.xlu0 %v416, 8
        %v430 = vpop.permute.xlu0 %429
        %431 = vrot.lane.b32.xlu0 %v417, 8
        %v432 = vpop.permute.xlu0 %431
        %433 = vrot.lane.b32.xlu0 %v418, 8
        %v434 = vpop.permute.xlu0 %433
        %v436 = vunpack.c.l.b16 %v393
        %v437 = vpack.c.b16 %v436, %v436
        %438 = vrot.lane.b32.xlu0 %v412, 16
        %v439 = vpop.permute.xlu0 %438
        %440 = vrot.lane.b32.xlu0 %v413, 16
        %v441 = vpop.permute.xlu0 %440
        %442 = vrot.lane.b32.xlu0 %v414, 16
        %v443 = vpop.permute.xlu0 %442
        %444 = vrot.lane.b32.xlu0 %v415, 16
        %v445 = vpop.permute.xlu0 %444
        %446 = vrot.lane.b32.xlu0 %v416, 16
        %v447 = vpop.permute.xlu0 %446
        %448 = vrot.lane.b32.xlu0 %v417, 16
        %v449 = vpop.permute.xlu0 %448
        %450 = vrot.lane.b32.xlu0 %v418, 16
        %v451 = vpop.permute.xlu0 %450
        %452 = vrot.lane.b32.xlu0 %v437, 16
        %v453 = vpop.permute.xlu0 %452
        %vm454 = vcmask 64512
        %v457 = vsel %vm454, %v375, %v420
        %v460 = vsel %vm454, %v377, %v422
        %v463 = vsel %vm454, %v379, %v424
        %v466 = vsel %vm454, %v381, %v426
        %v469 = vsel %vm454, %v383, %v428
        %v472 = vsel %vm454, %v385, %v430
        %v475 = vsel %vm454, %v387, %v432
        %v478 = vsel %vm454, %v389, %v434
        %vm479 = vcmask 130048
        %v481 = vsel %vm479, %v457, %v439
        %v483 = vsel %vm479, %v460, %v441
        %v485 = vsel %vm479, %v463, %v443
        %v487 = vsel %vm479, %v466, %v445
        %v489 = vsel %vm479, %v469, %v447
        %v491 = vsel %vm479, %v472, %v449
        %v493 = vsel %vm479, %v475, %v451
        %v495 = vsel %vm479, %v478, %v453
        %v496 = vld [vmem:[%s2] sm:$0xf]
        %v497 = vld [vmem:[%s2 + $0x4] sm:$0xf]
        %v498 = vld [vmem:[%s2 + $0x8] sm:$0xf]
        %v508 = vunpack.c.l.b16 %v375
        %v509 = vunpack.c.l.b16 %v376
        %v510 = vunpack.c.l.b16 %v378
        %v511 = vunpack.c.l.b16 %v380
        %v512 = vunpack.c.l.b16 %v382
        %v513 = vunpack.c.l.b16 %v384
        %v514 = vunpack.c.l.b16 %v386
        %v515 = vunpack.c.l.b16 %v388
        %v516 = vunpack.c.l.b16 %v390
        %v517 = vpack.c.b16 %v509, %v508
        %v518 = vpack.c.b16 %v510, %v403
        %v519 = vpack.c.b16 %v511, %v404
        %v520 = vpack.c.b16 %v512, %v405
        %v521 = vpack.c.b16 %v513, %v406
        %v522 = vpack.c.b16 %v514, %v407
        %v523 = vpack.c.b16 %v515, %v408
        %v524 = vpack.c.b16 %v516, %v409
        %v526 = vunpack.c.l.b16 %v392
        %v527 = vpack.c.b16 %v526, %v410
        %528 = vrot.lane.b32.xlu0 %v518, 8
        %v529 = vpop.permute.xlu0 %528
        %530 = vrot.lane.b32.xlu0 %v519, 8
        %v531 = vpop.permute.xlu0 %530
        %532 = vrot.lane.b32.xlu0 %v520, 8
        %v533 = vpop.permute.xlu0 %532
        %534 = vrot.lane.b32.xlu0 %v521, 8
        %v535 = vpop.permute.xlu0 %534
        %536 = vrot.lane.b32.xlu0 %v522, 8
        %v537 = vpop.permute.xlu0 %536
        %538 = vrot.lane.b32.xlu0 %v523, 8
        %v539 = vpop.permute.xlu0 %538
        %540 = vrot.lane.b32.xlu0 %v524, 8
        %v541 = vpop.permute.xlu0 %540
        %542 = vrot.lane.b32.xlu0 %v527, 8
        %v543 = vpop.permute.xlu0 %542
        %v545 = vunpack.c.l.b16 %v394
        %v546 = vpack.c.b16 %v545, %v436
        %547 = vrot.lane.b32.xlu0 %v519, 16
        %v548 = vpop.permute.xlu0 %547
        %549 = vrot.lane.b32.xlu0 %v520, 16
        %v550 = vpop.permute.xlu0 %549
        %551 = vrot.lane.b32.xlu0 %v521, 16
        %v552 = vpop.permute.xlu0 %551
        %553 = vrot.lane.b32.xlu0 %v522, 16
        %v554 = vpop.permute.xlu0 %553
        %555 = vrot.lane.b32.xlu0 %v523, 16
        %v556 = vpop.permute.xlu0 %555
        %557 = vrot.lane.b32.xlu0 %v524, 16
        %v558 = vpop.permute.xlu0 %557
        %559 = vrot.lane.b32.xlu0 %v527, 16
        %v560 = vpop.permute.xlu0 %559
        %561 = vrot.lane.b32.xlu0 %v546, 16
        %v562 = vpop.permute.xlu0 %561
        %v565 = vsel %vm454, %v517, %v529
        %v568 = vsel %vm454, %v518, %v531
        %v571 = vsel %vm454, %v519, %v533
        %v574 = vsel %vm454, %v520, %v535
        %v577 = vsel %vm454, %v521, %v537
        %v580 = vsel %vm454, %v522, %v539
        %v583 = vsel %vm454, %v523, %v541
        %v586 = vsel %vm454, %v524, %v543
        %v588 = vsel %vm479, %v565, %v548
        %v590 = vsel %vm479, %v568, %v550
        %v592 = vsel %vm479, %v571, %v552
        %v594 = vsel %vm479, %v574, %v554
        %v596 = vsel %vm479, %v577, %v556
        %v598 = vsel %vm479, %v580, %v558
        %v600 = vsel %vm479, %v583, %v560
        %v602 = vsel %vm479, %v586, %v562
        %v611 = vunpack.c.l.b16 %v588
        %v612 = vunpack.c.h.b16 %v588
        %v613 = vunpack.c.l.b16 %v590
        %v614 = vunpack.c.h.b16 %v590
        %v615 = vunpack.c.l.b16 %v592
        %v616 = vunpack.c.h.b16 %v592
        %v617 = vunpack.c.l.b16 %v594
        %v618 = vunpack.c.h.b16 %v594
        %v619 = vunpack.c.l.b16 %v596
        %v620 = vunpack.c.h.b16 %v596
        %v621 = vunpack.c.l.b16 %v598
        %v622 = vunpack.c.h.b16 %v598
        %v623 = vunpack.c.l.b16 %v600
        %v624 = vunpack.c.h.b16 %v600
        %v625 = vunpack.c.l.b16 %v602
        %v626 = vunpack.c.h.b16 %v602
        %v627 = vpack.c.b16 %v611, %v611
        %v628 = vpack.c.b16 %v612, %v612
        %v629 = vpack.c.b16 %v613, %v613
        %v630 = vpack.c.b16 %v614, %v614
        %v631 = vpack.c.b16 %v615, %v615
        %v632 = vpack.c.b16 %v616, %v616
        %v633 = vpack.c.b16 %v617, %v617
        %v634 = vpack.c.b16 %v618, %v618
        %v635 = vpack.c.b16 %v619, %v619
        %v636 = vpack.c.b16 %v620, %v620
        %v637 = vpack.c.b16 %v621, %v621
        %v638 = vpack.c.b16 %v622, %v622
        %v639 = vpack.c.b16 %v623, %v623
        %v640 = vpack.c.b16 %v624, %v624
        %v641 = vpack.c.b16 %v625, %v625
        %v642 = vpack.c.b16 %v626, %v626
        %vm643 = vsmask.f32 3328
        %vm644 = vsmask.f32 7440
        %vm645 = vmor %vm643, %vm644
        %v647 = vshrl.u32 %v627, 16
        %v649 = vrot.slane %v647, 4
        %v650 = vshll.u32 %v627, 16
        %v652 = vrot.slane %v650, 5
        %v653 = vor.u32 %v649, %v652
        %v654 = vrot.slane %v653, 4
        %v656 = vshll.u32 %v628, 16
        %v658 = vrot.slane %v656, 5
        %v659 = vsel %vm645, %v654, %v658
        %v661 = vshrl.u32 %v629, 16
        %v663 = vrot.slane %v661, 4
        %v664 = vshll.u32 %v629, 16
        %v666 = vrot.slane %v664, 5
        %v667 = vor.u32 %v663, %v666
        %v668 = vrot.slane %v667, 4
        %v670 = vshll.u32 %v630, 16
        %v672 = vrot.slane %v670, 5
        %v673 = vsel %vm645, %v668, %v672
        %v675 = vshrl.u32 %v631, 16
        %v677 = vrot.slane %v675, 4
        %v678 = vshll.u32 %v631, 16
        %v680 = vrot.slane %v678, 5
        %v681 = vor.u32 %v677, %v680
        %v682 = vrot.slane %v681, 4
        %v684 = vshll.u32 %v632, 16
        %v686 = vrot.slane %v684, 5
        %v687 = vsel %vm645, %v682, %v686
        %v689 = vshrl.u32 %v633, 16
        %v691 = vrot.slane %v689, 4
        %v692 = vshll.u32 %v633, 16
        %v694 = vrot.slane %v692, 5
        %v695 = vor.u32 %v691, %v694
        %v696 = vrot.slane %v695, 4
        %v698 = vshll.u32 %v634, 16
        %v700 = vrot.slane %v698, 5
        %v701 = vsel %vm645, %v696, %v700
        %v703 = vshrl.u32 %v635, 16
        %v705 = vrot.slane %v703, 4
        %v706 = vshll.u32 %v635, 16
        %v708 = vrot.slane %v706, 5
        %v709 = vor.u32 %v705, %v708
        %v710 = vrot.slane %v709, 4
        %v712 = vshll.u32 %v636, 16
        %v714 = vrot.slane %v712, 5
        %v715 = vsel %vm645, %v710, %v714
        %v717 = vshrl.u32 %v637, 16
        %v719 = vrot.slane %v717, 4
        %v720 = vshll.u32 %v637, 16
        %v722 = vrot.slane %v720, 5
        %v723 = vor.u32 %v719, %v722
        %v724 = vrot.slane %v723, 4
        %v726 = vshll.u32 %v638, 16
        %v728 = vrot.slane %v726, 5
        %v729 = vsel %vm645, %v724, %v728
        %v731 = vshrl.u32 %v639, 16
        %v733 = vrot.slane %v731, 4
        %v734 = vshll.u32 %v639, 16
        %v736 = vrot.slane %v734, 5
        %v737 = vor.u32 %v733, %v736
        %v738 = vrot.slane %v737, 4
        %v740 = vshll.u32 %v640, 16
        %v742 = vrot.slane %v740, 5
        %v743 = vsel %vm645, %v738, %v742
        %v745 = vshrl.u32 %v641, 16
        %v747 = vrot.slane %v745, 4
        %v748 = vshll.u32 %v641, 16
        %v750 = vrot.slane %v748, 5
        %v751 = vor.u32 %v747, %v750
        %v752 = vrot.slane %v751, 4
        %v754 = vshll.u32 %v642, 16
        %v756 = vrot.slane %v754, 5
        %v757 = vsel %vm645, %v752, %v756
        %s758 = scalar_lea.vmem %s2, 12
        %v759 = vld [vmem:[%s758] sm:$0xf]
        %v760 = vld [vmem:[%s758 + $0x4] sm:$0xf]
        %v761 = vld [vmem:[%s758 + $0x8] sm:$0xf]
        %v762 = vunpack.c.l.b16 %v659
        %v763 = vunpack.c.l.b16 %v673
        %v764 = vunpack.c.l.b16 %v687
        %v765 = vunpack.c.l.b16 %v701
        %v766 = vunpack.c.l.b16 %v715
        %v767 = vunpack.c.l.b16 %v729
        %v768 = vunpack.c.l.b16 %v743
        %v769 = vunpack.c.l.b16 %v757
        %v770 = vpack.c.b16 %v763, %v762
        %v771 = vpack.c.b16 %v765, %v764
        %v772 = vpack.c.b16 %v767, %v766
        %v773 = vpack.c.b16 %v769, %v768
        %v777 = vunpack.c.l.b16 %v759
        %v778 = vunpack.c.l.b16 %v760
        %v779 = vunpack.c.l.b16 %v761
        %v780 = vpack.c.b16 %v778, %v777
        %v781 = vpack.c.b16 %v779, %v779
        %vm783 = vcmask 195584
        %v785 = vsel %vm783, %v770, 0
        %v788 = vsel %vm783, %v771, 0
        %v791 = vsel %vm783, %v772, 0
        %v794 = vsel %vm783, %v773, 0
        %vm796 = vcmask 1043456
        %v798 = vsel %vm796, %v781, 0
        %800 = vmatprep.subr.bf16.mxu0 0
        %801 = vmatpush1.bf16.msra.mxu0 %v780
        %802 = vmatprep.subr.bf16.mxu0 0
        %803 = vmatpush1.bf16.msra.mxu0 %v798
        %804 = vmatprep.subr.bf16.mxu0 0
        %805 = vmatpush1.bf16.msra.mxu0 0
        %806 = vmatprep.subr.bf16.mxu0 0
        %807 = vmatpush1.bf16.msra.mxu0 0
        %808 = vmatprep.subr.bf16.mxu0 0
        %809 = vmatpush1.bf16.msra.mxu0 0
        %810 = vmatprep.subr.bf16.mxu0 0
        %811 = vmatpush1.bf16.msra.mxu0 0
        %812 = vmatprep.subr.bf16.mxu0 0
        %813 = vmatpush1.bf16.msra.mxu0 0
        %814 = vmatprep.subr.bf16.mxu0 0
        %815 = vmatpush1.bf16.msra.mxu0 0
        %816 = vmatprep.subr.bf16.mxu0 0
        %817 = vmatpush1.bf16.msra.mxu0 0
        %818 = vmatprep.subr.bf16.mxu0 0
        %819 = vmatpush1.bf16.msra.mxu0 0
        %820 = vmatprep.subr.bf16.mxu0 0
        %821 = vmatpush1.bf16.msra.mxu0 0
        %822 = vmatprep.subr.bf16.mxu0 0
        %823 = vmatpush1.bf16.msra.mxu0 0
        %824 = vmatprep.subr.bf16.mxu0 0
        %825 = vmatpush1.bf16.msra.mxu0 0
        %826 = vmatprep.subr.bf16.mxu0 0
        %827 = vmatpush1.bf16.msra.mxu0 0
        %828 = vmatprep.subr.bf16.mxu0 0
        %829 = vmatpush1.bf16.msra.mxu0 0
        %830 = vmatprep.subr.bf16.mxu0 0
        %831 = vmatpush1.bf16.msra.mxu0 0
        %832 = vmatprep.mubr.bf16.mxu0 0
        %833 = vmatmul.mubr.bf16.gmra.mrb[0].mxu0 %v785
        %v834 = vpop.f32.mrb[0].mxu0
        %v835 = vadd.f32 0.0, %v834
        %v836 = vpop.f32.mrb[0].mxu0
        %v837 = vpop.f32.mrb[0].mxu0
        %v838 = vadd.f32 0.0, %v837
        %v839 = vpop.f32.mrb[0].mxu0
        %840 = vmatprep.mubr.bf16.mxu0 0
        %841 = vmatmul.mubr.bf16.gmra.mrb[0].mxu0 %v788
        %v842 = vpop.f32.mrb[0].mxu0
        %v843 = vadd.f32 0.0, %v842
        %v844 = vpop.f32.mrb[0].mxu0
        %v845 = vpop.f32.mrb[0].mxu0
        %v846 = vadd.f32 0.0, %v845
        %v847 = vpop.f32.mrb[0].mxu0
        %848 = vmatprep.mubr.bf16.mxu0 0
        %849 = vmatmul.mubr.bf16.gmra.mrb[0].mxu0 %v791
        %v850 = vpop.f32.mrb[0].mxu0
        %v851 = vadd.f32 0.0, %v850
        %v852 = vpop.f32.mrb[0].mxu0
        %v853 = vpop.f32.mrb[0].mxu0
        %v854 = vadd.f32 0.0, %v853
        %v855 = vpop.f32.mrb[0].mxu0
        %856 = vmatprep.mubr.bf16.mxu0 0
        %857 = vmatmul.mubr.bf16.gmra.mrb[0].mxu0 %v794
        %v858 = vpop.f32.mrb[0].mxu0
        %v859 = vadd.f32 0.0, %v858
        %v860 = vpop.f32.mrb[0].mxu0
        %v861 = vpop.f32.mrb[0].mxu0
        %v862 = vadd.f32 0.0, %v861
        %v863 = vpop.f32.mrb[0].mxu0
        %864 = vdwg.mxu0
        %v873 = vunpack.c.l.b16 %v481
        %v874 = vunpack.c.l.b16 %v483
        %v875 = vunpack.c.l.b16 %v485
        %v876 = vunpack.c.l.b16 %v487
        %v877 = vunpack.c.l.b16 %v489
        %v878 = vunpack.c.l.b16 %v491
        %v879 = vunpack.c.l.b16 %v493
        %v880 = vunpack.c.l.b16 %v495
        %v881 = vpack.c.b16 %v874, %v873
        %v882 = vpack.c.b16 %v876, %v875
        %v883 = vpack.c.b16 %v878, %v877
        %v884 = vpack.c.b16 %v880, %v879
        %v888 = vunpack.c.l.b16 %v496
        %v889 = vunpack.c.l.b16 %v497
        %v890 = vunpack.c.l.b16 %v498
        %v891 = vpack.c.b16 %v889, %v888
        %v892 = vpack.c.b16 %v890, %v890
        %v895 = vsel %vm783, %v881, 0
        %v898 = vsel %vm783, %v882, 0
        %v901 = vsel %vm783, %v883, 0
        %v904 = vsel %vm783, %v884, 0
        %v907 = vsel %vm796, %v892, 0
        %909 = vmatprep.subr.bf16.mxu0 0
        %910 = vmatpush1.bf16.msra.mxu0 %v891
        %911 = vmatprep.subr.bf16.mxu0 0
        %912 = vmatpush1.bf16.msra.mxu0 %v907
        %913 = vmatprep.subr.bf16.mxu0 0
        %914 = vmatpush1.bf16.msra.mxu0 0
        %915 = vmatprep.subr.bf16.mxu0 0
        %916 = vmatpush1.bf16.msra.mxu0 0
        %917 = vmatprep.subr.bf16.mxu0 0
        %918 = vmatpush1.bf16.msra.mxu0 0
        %919 = vmatprep.subr.bf16.mxu0 0
        %920 = vmatpush1.bf16.msra.mxu0 0
        %921 = vmatprep.subr.bf16.mxu0 0
        %922 = vmatpush1.bf16.msra.mxu0 0
        %923 = vmatprep.subr.bf16.mxu0 0
        %924 = vmatpush1.bf16.msra.mxu0 0
        %925 = vmatprep.subr.bf16.mxu0 0
        %926 = vmatpush1.bf16.msra.mxu0 0
        %927 = vmatprep.subr.bf16.mxu0 0
        %928 = vmatpush1.bf16.msra.mxu0 0
        %929 = vmatprep.subr.bf16.mxu0 0
        %930 = vmatpush1.bf16.msra.mxu0 0
        %931 = vmatprep.subr.bf16.mxu0 0
        %932 = vmatpush1.bf16.msra.mxu0 0
        %933 = vmatprep.subr.bf16.mxu0 0
        %934 = vmatpush1.bf16.msra.mxu0 0
        %935 = vmatprep.subr.bf16.mxu0 0
        %936 = vmatpush1.bf16.msra.mxu0 0
        %937 = vmatprep.subr.bf16.mxu0 0
        %938 = vmatpush1.bf16.msra.mxu0 0
        %939 = vmatprep.subr.bf16.mxu0 0
        %940 = vmatpush1.bf16.msra.mxu0 0
        %941 = vmatprep.mubr.bf16.mxu0 0
        %942 = vmatmul.mubr.bf16.gmra.mrb[0].mxu0 %v895
        %v943 = vpop.f32.mrb[0].mxu0
        %v944 = vadd.f32 %v835, %v943
        %v945 = vpop.f32.mrb[0].mxu0
        %v946 = vpop.f32.mrb[0].mxu0
        %v947 = vadd.f32 %v838, %v946
        %v948 = vpop.f32.mrb[0].mxu0
        %949 = vmatprep.mubr.bf16.mxu0 0
        %950 = vmatmul.mubr.bf16.gmra.mrb[0].mxu0 %v898
        %v951 = vpop.f32.mrb[0].mxu0
        %v952 = vadd.f32 %v843, %v951
        %v953 = vpop.f32.mrb[0].mxu0
        %v954 = vpop.f32.mrb[0].mxu0
        %v955 = vadd.f32 %v846, %v954
        %v956 = vpop.f32.mrb[0].mxu0
        %957 = vmatprep.mubr.bf16.mxu0 0
        %958 = vmatmul.mubr.bf16.gmra.mrb[0].mxu0 %v901
        %v959 = vpop.f32.mrb[0].mxu0
        %v960 = vadd.f32 %v851, %v959
        %v961 = vpop.f32.mrb[0].mxu0
        %v962 = vpop.f32.mrb[0].mxu0
        %v963 = vadd.f32 %v854, %v962
        %v964 = vpop.f32.mrb[0].mxu0
        %965 = vmatprep.mubr.bf16.mxu0 0
        %966 = vmatmul.mubr.bf16.gmra.mrb[0].mxu0 %v904
        %v967 = vpop.f32.mrb[0].mxu0
        %v968 = vadd.f32 %v859, %v967
        %v969 = vpop.f32.mrb[0].mxu0
        %v970 = vpop.f32.mrb[0].mxu0
        %v971 = vadd.f32 %v862, %v970
        %v972 = vpop.f32.mrb[0].mxu0
        %973 = vdwg.mxu0
        %vm974 = vcmask 1042432
        %vm975 = vcmask 1046532
        %vm976 = vmor %vm974, %vm975
        %v977 = vrot.slane %v627, 5
        %v978 = vrot.slane %v977, 4
        %v979 = vrot.slane %v628, 5
        %v980 = vsel %vm976, %v978, %v979
        %v981 = vrot.slane %v629, 5
        %v982 = vrot.slane %v981, 4
        %v983 = vrot.slane %v630, 5
        %v984 = vsel %vm976, %v982, %v983
        %v985 = vrot.slane %v631, 5
        %v986 = vrot.slane %v985, 4
        %v987 = vrot.slane %v632, 5
        %v988 = vsel %vm976, %v986, %v987
        %v989 = vrot.slane %v633, 5
        %v990 = vrot.slane %v989, 4
        %v991 = vrot.slane %v634, 5
        %v992 = vsel %vm976, %v990, %v991
        %v993 = vrot.slane %v635, 5
        %v994 = vrot.slane %v993, 4
        %v995 = vrot.slane %v636, 5
        %v996 = vsel %vm976, %v994, %v995
        %v997 = vrot.slane %v637, 5
        %v998 = vrot.slane %v997, 4
        %v999 = vrot.slane %v638, 5
        %v1000 = vsel %vm976, %v998, %v999
        %v1001 = vrot.slane %v639, 5
        %v1002 = vrot.slane %v1001, 4
        %v1003 = vrot.slane %v640, 5
        %v1004 = vsel %vm976, %v1002, %v1003
        %v1005 = vrot.slane %v641, 5
        %v1006 = vrot.slane %v1005, 4
        %v1007 = vrot.slane %v642, 5
        %v1008 = vsel %vm976, %v1006, %v1007
        %s1009 = scalar_lea.vmem %s2, 24
        %v1010 = vld [vmem:[%s1009] sm:$0xf]
        %v1011 = vld [vmem:[%s1009 + $0x4] sm:$0xf]
        %v1012 = vld [vmem:[%s1009 + $0x8] sm:$0xf]
        %v1013 = vunpack.c.l.b16 %v980
        %v1014 = vunpack.c.l.b16 %v984
        %v1015 = vunpack.c.l.b16 %v988
        %v1016 = vunpack.c.l.b16 %v992
        %v1017 = vunpack.c.l.b16 %v996
        %v1018 = vunpack.c.l.b16 %v1000
        %v1019 = vunpack.c.l.b16 %v1004
        %v1020 = vunpack.c.l.b16 %v1008
        %v1021 = vpack.c.b16 %v1014, %v1013
        %v1022 = vpack.c.b16 %v1016, %v1015
        %v1023 = vpack.c.b16 %v1018, %v1017
        %v1024 = vpack.c.b16 %v1020, %v1019
        %v1028 = vunpack.c.l.b16 %v1010
        %v1029 = vunpack.c.l.b16 %v1011
        %v1030 = vunpack.c.l.b16 %v1012
        %v1031 = vpack.c.b16 %v1029, %v1028
        %v1032 = vpack.c.b16 %v1030, %v1030
        %v1035 = vsel %vm783, %v1021, 0
        %v1038 = vsel %vm783, %v1022, 0
        %v1041 = vsel %vm783, %v1023, 0
        %v1044 = vsel %vm783, %v1024, 0
        %v1047 = vsel %vm796, %v1032, 0
        %1049 = vmatprep.subr.bf16.mxu0 0
        %1050 = vmatpush1.bf16.msra.mxu0 %v1031
        %1051 = vmatprep.subr.bf16.mxu0 0
        %1052 = vmatpush1.bf16.msra.mxu0 %v1047
        %1053 = vmatprep.subr.bf16.mxu0 0
        %1054 = vmatpush1.bf16.msra.mxu0 0
        %1055 = vmatprep.subr.bf16.mxu0 0
        %1056 = vmatpush1.bf16.msra.mxu0 0
        %1057 = vmatprep.subr.bf16.mxu0 0
        %1058 = vmatpush1.bf16.msra.mxu0 0
        %1059 = vmatprep.subr.bf16.mxu0 0
        %1060 = vmatpush1.bf16.msra.mxu0 0
        %1061 = vmatprep.subr.bf16.mxu0 0
        %1062 = vmatpush1.bf16.msra.mxu0 0
        %1063 = vmatprep.subr.bf16.mxu0 0
        %1064 = vmatpush1.bf16.msra.mxu0 0
        %1065 = vmatprep.subr.bf16.mxu0 0
        %1066 = vmatpush1.bf16.msra.mxu0 0
        %1067 = vmatprep.subr.bf16.mxu0 0
        %1068 = vmatpush1.bf16.msra.mxu0 0
        %1069 = vmatprep.subr.bf16.mxu0 0
        %1070 = vmatpush1.bf16.msra.mxu0 0
        %1071 = vmatprep.subr.bf16.mxu0 0
        %1072 = vmatpush1.bf16.msra.mxu0 0
        %1073 = vmatprep.subr.bf16.mxu0 0
        %1074 = vmatpush1.bf16.msra.mxu0 0
        %1075 = vmatprep.subr.bf16.mxu0 0
        %1076 = vmatpush1.bf16.msra.mxu0 0
        %1077 = vmatprep.subr.bf16.mxu0 0
        %1078 = vmatpush1.bf16.msra.mxu0 0
        %1079 = vmatprep.subr.bf16.mxu0 0
        %1080 = vmatpush1.bf16.msra.mxu0 0
        %1081 = vmatprep.mubr.bf16.mxu0 0
        %1082 = vmatmul.mubr.bf16.gmra.mrb[0].mxu0 %v1035
        %v1083 = vpop.f32.mrb[0].mxu0
        %v1084 = vadd.f32 0.0, %v1083
        %v1085 = vpop.f32.mrb[0].mxu0
        %v1086 = vpop.f32.mrb[0].mxu0
        %v1087 = vadd.f32 0.0, %v1086
        %v1088 = vpop.f32.mrb[0].mxu0
        %1089 = vmatprep.mubr.bf16.mxu0 0
        %1090 = vmatmul.mubr.bf16.gmra.mrb[0].mxu0 %v1038
        %v1091 = vpop.f32.mrb[0].mxu0
        %v1092 = vadd.f32 0.0, %v1091
        %v1093 = vpop.f32.mrb[0].mxu0
        %v1094 = vpop.f32.mrb[0].mxu0
        %v1095 = vadd.f32 0.0, %v1094
        %v1096 = vpop.f32.mrb[0].mxu0
        %1097 = vmatprep.mubr.bf16.mxu0 0
        %1098 = vmatmul.mubr.bf16.gmra.mrb[0].mxu0 %v1041
        %v1099 = vpop.f32.mrb[0].mxu0
        %v1100 = vadd.f32 0.0, %v1099
        %v1101 = vpop.f32.mrb[0].mxu0
        %v1102 = vpop.f32.mrb[0].mxu0
        %v1103 = vadd.f32 0.0, %v1102
        %v1104 = vpop.f32.mrb[0].mxu0
        %1105 = vmatprep.mubr.bf16.mxu0 0
        %1106 = vmatmul.mubr.bf16.gmra.mrb[0].mxu0 %v1044
        %v1107 = vpop.f32.mrb[0].mxu0
        %v1108 = vadd.f32 0.0, %v1107
        %v1109 = vpop.f32.mrb[0].mxu0
        %v1110 = vpop.f32.mrb[0].mxu0
        %v1111 = vadd.f32 0.0, %v1110
        %v1112 = vpop.f32.mrb[0].mxu0
        %1113 = vdwg.mxu0
        %v1114 = vadd.f32 %v944, %v1084
        %v1115 = vadd.f32 %v947, %v1087
        %v1116 = vadd.f32 %v952, %v1092
        %v1117 = vadd.f32 %v955, %v1095
        %v1118 = vadd.f32 %v960, %v1100
        %v1119 = vadd.f32 %v963, %v1103
        %v1120 = vadd.f32 %v968, %v1108
        %v1121 = vadd.f32 %v971, %v1111
        %v1122 = vld [vmem:[%s3] sm:$0x1]
        %v1124 = vlaneseq
        %v1125 = vshrl.u32 %v1124, 7
        %v1126 = vsub.s32 0, %v1125
        %v1127 = vrot.slane %v1122, %v1126
        %v1129 = vadd.f32 %v1114, %v1127
        %v1130 = vadd.f32 %v1115, %v1127
        %v1131 = vadd.f32 %v1116, %v1127
        %v1132 = vadd.f32 %v1117, %v1127
        %v1133 = vadd.f32 %v1118, %v1127
        %v1134 = vadd.f32 %v1119, %v1127
        %v1135 = vadd.f32 %v1120, %v1127
        %v1136 = vadd.f32 %v1121, %v1127
        %1137 = vxpose.xlu0.b32.start [1/16] %v1129, 128
        %1138 = vxpose.xlu0.b32.cont [2/16] 0.0, 128
        %1139 = vxpose.xlu0.b32.cont [3/16] 0.0, 128
        %1140 = vxpose.xlu0.b32.cont [4/16] 0.0, 128
        %1141 = vxpose.xlu0.b32.cont [5/16] 0.0, 128
        %1142 = vxpose.xlu0.b32.cont [6/16] 0.0, 128
        %1143 = vxpose.xlu0.b32.cont [7/16] 0.0, 128
        %1144 = vxpose.xlu0.b32.cont [8/16] 0.0, 128
        %1145 = vxpose.xlu0.b32.cont [9/16] 0.0, 128
        %1146 = vxpose.xlu0.b32.cont [10/16] 0.0, 128
        %1147 = vxpose.xlu0.b32.cont [11/16] 0.0, 128
        %1148 = vxpose.xlu0.b32.cont [12/16] 0.0, 128
        %1149 = vxpose.xlu0.b32.cont [13/16] 0.0, 128
        %1150 = vxpose.xlu0.b32.cont [14/16] 0.0, 128
        %1151 = vxpose.xlu0.b32.cont [15/16] 0.0, 128
        %1152 = vxpose.xlu0.b32.end [16/16] 0.0, 128
        %v1153 = vpop.trf.xlu0
        %v1154 = vpop.trf.xlu0
        %v1155 = vpop.trf.xlu0
        %v1156 = vpop.trf.xlu0
        %v1157 = vpop.trf.xlu0
        %v1158 = vpop.trf.xlu0
        %v1159 = vpop.trf.xlu0
        %v1160 = vpop.trf.xlu0
        %v1161 = vpop.trf.xlu0
        %v1162 = vpop.trf.xlu0
        %v1163 = vpop.trf.xlu0
        %v1164 = vpop.trf.xlu0
        %v1165 = vpop.trf.xlu0
        %v1166 = vpop.trf.xlu0
        %v1167 = vpop.trf.xlu0
        %v1168 = vpop.trf.xlu0
        %1169 = vxpose.xlu0.b32.start [1/16] %v1130, 128
        %1170 = vxpose.xlu0.b32.cont [2/16] 0.0, 128
        %1171 = vxpose.xlu0.b32.cont [3/16] 0.0, 128
        %1172 = vxpose.xlu0.b32.cont [4/16] 0.0, 128
        %1173 = vxpose.xlu0.b32.cont [5/16] 0.0, 128
        %1174 = vxpose.xlu0.b32.cont [6/16] 0.0, 128
        %1175 = vxpose.xlu0.b32.cont [7/16] 0.0, 128
        %1176 = vxpose.xlu0.b32.cont [8/16] 0.0, 128
        %1177 = vxpose.xlu0.b32.cont [9/16] 0.0, 128
        %1178 = vxpose.xlu0.b32.cont [10/16] 0.0, 128
        %1179 = vxpose.xlu0.b32.cont [11/16] 0.0, 128
        %1180 = vxpose.xlu0.b32.cont [12/16] 0.0, 128
        %1181 = vxpose.xlu0.b32.cont [13/16] 0.0, 128
        %1182 = vxpose.xlu0.b32.cont [14/16] 0.0, 128
        %1183 = vxpose.xlu0.b32.cont [15/16] 0.0, 128
        %1184 = vxpose.xlu0.b32.end [16/16] 0.0, 128
        %v1185 = vpop.trf.xlu0
        %v1186 = vpop.trf.xlu0
        %v1187 = vpop.trf.xlu0
        %v1188 = vpop.trf.xlu0
        %v1189 = vpop.trf.xlu0
        %v1190 = vpop.trf.xlu0
        %v1191 = vpop.trf.xlu0
        %v1192 = vpop.trf.xlu0
        %v1193 = vpop.trf.xlu0
        %v1194 = vpop.trf.xlu0
        %v1195 = vpop.trf.xlu0
        %v1196 = vpop.trf.xlu0
        %v1197 = vpop.trf.xlu0
        %v1198 = vpop.trf.xlu0
        %v1199 = vpop.trf.xlu0
        %v1200 = vpop.trf.xlu0
        %1201 = vxpose.xlu0.b32.start [1/16] %v1131, 128
        %1202 = vxpose.xlu0.b32.cont [2/16] 0.0, 128
        %1203 = vxpose.xlu0.b32.cont [3/16] 0.0, 128
        %1204 = vxpose.xlu0.b32.cont [4/16] 0.0, 128
        %1205 = vxpose.xlu0.b32.cont [5/16] 0.0, 128
        %1206 = vxpose.xlu0.b32.cont [6/16] 0.0, 128
        %1207 = vxpose.xlu0.b32.cont [7/16] 0.0, 128
        %1208 = vxpose.xlu0.b32.cont [8/16] 0.0, 128
        %1209 = vxpose.xlu0.b32.cont [9/16] 0.0, 128
        %1210 = vxpose.xlu0.b32.cont [10/16] 0.0, 128
        %1211 = vxpose.xlu0.b32.cont [11/16] 0.0, 128
        %1212 = vxpose.xlu0.b32.cont [12/16] 0.0, 128
        %1213 = vxpose.xlu0.b32.cont [13/16] 0.0, 128
        %1214 = vxpose.xlu0.b32.cont [14/16] 0.0, 128
        %1215 = vxpose.xlu0.b32.cont [15/16] 0.0, 128
        %1216 = vxpose.xlu0.b32.end [16/16] 0.0, 128
        %v1217 = vpop.trf.xlu0
        %v1218 = vpop.trf.xlu0
        %v1219 = vpop.trf.xlu0
        %v1220 = vpop.trf.xlu0
        %v1221 = vpop.trf.xlu0
        %v1222 = vpop.trf.xlu0
        %v1223 = vpop.trf.xlu0
        %v1224 = vpop.trf.xlu0
        %v1225 = vpop.trf.xlu0
        %v1226 = vpop.trf.xlu0
        %v1227 = vpop.trf.xlu0
        %v1228 = vpop.trf.xlu0
        %v1229 = vpop.trf.xlu0
        %v1230 = vpop.trf.xlu0
        %v1231 = vpop.trf.xlu0
        %v1232 = vpop.trf.xlu0
        %1233 = vxpose.xlu0.b32.start [1/16] %v1132, 128
        %1234 = vxpose.xlu0.b32.cont [2/16] 0.0, 128
        %1235 = vxpose.xlu0.b32.cont [3/16] 0.0, 128
        %1236 = vxpose.xlu0.b32.cont [4/16] 0.0, 128
        %1237 = vxpose.xlu0.b32.cont [5/16] 0.0, 128
        %1238 = vxpose.xlu0.b32.cont [6/16] 0.0, 128
        %1239 = vxpose.xlu0.b32.cont [7/16] 0.0, 128
        %1240 = vxpose.xlu0.b32.cont [8/16] 0.0, 128
        %1241 = vxpose.xlu0.b32.cont [9/16] 0.0, 128
        %1242 = vxpose.xlu0.b32.cont [10/16] 0.0, 128
        %1243 = vxpose.xlu0.b32.cont [11/16] 0.0, 128
        %1244 = vxpose.xlu0.b32.cont [12/16] 0.0, 128
        %1245 = vxpose.xlu0.b32.cont [13/16] 0.0, 128
        %1246 = vxpose.xlu0.b32.cont [14/16] 0.0, 128
        %1247 = vxpose.xlu0.b32.cont [15/16] 0.0, 128
        %1248 = vxpose.xlu0.b32.end [16/16] 0.0, 128
        %v1249 = vpop.trf.xlu0
        %v1250 = vpop.trf.xlu0
        %v1251 = vpop.trf.xlu0
        %v1252 = vpop.trf.xlu0
        %v1253 = vpop.trf.xlu0
        %v1254 = vpop.trf.xlu0
        %v1255 = vpop.trf.xlu0
        %v1256 = vpop.trf.xlu0
        %v1257 = vpop.trf.xlu0
        %v1258 = vpop.trf.xlu0
        %v1259 = vpop.trf.xlu0
        %v1260 = vpop.trf.xlu0
        %v1261 = vpop.trf.xlu0
        %v1262 = vpop.trf.xlu0
        %v1263 = vpop.trf.xlu0
        %v1264 = vpop.trf.xlu0
        %1265 = vxpose.xlu0.b32.start [1/16] %v1133, 128
        %1266 = vxpose.xlu0.b32.cont [2/16] 0.0, 128
        %1267 = vxpose.xlu0.b32.cont [3/16] 0.0, 128
        %1268 = vxpose.xlu0.b32.cont [4/16] 0.0, 128
        %1269 = vxpose.xlu0.b32.cont [5/16] 0.0, 128
        %1270 = vxpose.xlu0.b32.cont [6/16] 0.0, 128
        %1271 = vxpose.xlu0.b32.cont [7/16] 0.0, 128
        %1272 = vxpose.xlu0.b32.cont [8/16] 0.0, 128
        %1273 = vxpose.xlu0.b32.cont [9/16] 0.0, 128
        %1274 = vxpose.xlu0.b32.cont [10/16] 0.0, 128
        %1275 = vxpose.xlu0.b32.cont [11/16] 0.0, 128
        %1276 = vxpose.xlu0.b32.cont [12/16] 0.0, 128
        %1277 = vxpose.xlu0.b32.cont [13/16] 0.0, 128
        %1278 = vxpose.xlu0.b32.cont [14/16] 0.0, 128
        %1279 = vxpose.xlu0.b32.cont [15/16] 0.0, 128
        %1280 = vxpose.xlu0.b32.end [16/16] 0.0, 128
        %v1281 = vpop.trf.xlu0
        %v1282 = vpop.trf.xlu0
        %v1283 = vpop.trf.xlu0
        %v1284 = vpop.trf.xlu0
        %v1285 = vpop.trf.xlu0
        %v1286 = vpop.trf.xlu0
        %v1287 = vpop.trf.xlu0
        %v1288 = vpop.trf.xlu0
        %v1289 = vpop.trf.xlu0
        %v1290 = vpop.trf.xlu0
        %v1291 = vpop.trf.xlu0
        %v1292 = vpop.trf.xlu0
        %v1293 = vpop.trf.xlu0
        %v1294 = vpop.trf.xlu0
        %v1295 = vpop.trf.xlu0
        %v1296 = vpop.trf.xlu0
        %1297 = vxpose.xlu0.b32.start [1/16] %v1134, 128
        %1298 = vxpose.xlu0.b32.cont [2/16] 0.0, 128
        %1299 = vxpose.xlu0.b32.cont [3/16] 0.0, 128
        %1300 = vxpose.xlu0.b32.cont [4/16] 0.0, 128
        %1301 = vxpose.xlu0.b32.cont [5/16] 0.0, 128
        %1302 = vxpose.xlu0.b32.cont [6/16] 0.0, 128
        %1303 = vxpose.xlu0.b32.cont [7/16] 0.0, 128
        %1304 = vxpose.xlu0.b32.cont [8/16] 0.0, 128
        %1305 = vxpose.xlu0.b32.cont [9/16] 0.0, 128
        %1306 = vxpose.xlu0.b32.cont [10/16] 0.0, 128
        %1307 = vxpose.xlu0.b32.cont [11/16] 0.0, 128
        %1308 = vxpose.xlu0.b32.cont [12/16] 0.0, 128
        %1309 = vxpose.xlu0.b32.cont [13/16] 0.0, 128
        %1310 = vxpose.xlu0.b32.cont [14/16] 0.0, 128
        %1311 = vxpose.xlu0.b32.cont [15/16] 0.0, 128
        %1312 = vxpose.xlu0.b32.end [16/16] 0.0, 128
        %v1313 = vpop.trf.xlu0
        %v1314 = vpop.trf.xlu0
        %v1315 = vpop.trf.xlu0
        %v1316 = vpop.trf.xlu0
        %v1317 = vpop.trf.xlu0
        %v1318 = vpop.trf.xlu0
        %v1319 = vpop.trf.xlu0
        %v1320 = vpop.trf.xlu0
        %v1321 = vpop.trf.xlu0
        %v1322 = vpop.trf.xlu0
        %v1323 = vpop.trf.xlu0
        %v1324 = vpop.trf.xlu0
        %v1325 = vpop.trf.xlu0
        %v1326 = vpop.trf.xlu0
        %v1327 = vpop.trf.xlu0
        %v1328 = vpop.trf.xlu0
        %1329 = vxpose.xlu0.b32.start [1/16] %v1135, 128
        %1330 = vxpose.xlu0.b32.cont [2/16] 0.0, 128
        %1331 = vxpose.xlu0.b32.cont [3/16] 0.0, 128
        %1332 = vxpose.xlu0.b32.cont [4/16] 0.0, 128
        %1333 = vxpose.xlu0.b32.cont [5/16] 0.0, 128
        %1334 = vxpose.xlu0.b32.cont [6/16] 0.0, 128
        %1335 = vxpose.xlu0.b32.cont [7/16] 0.0, 128
        %1336 = vxpose.xlu0.b32.cont [8/16] 0.0, 128
        %1337 = vxpose.xlu0.b32.cont [9/16] 0.0, 128
        %1338 = vxpose.xlu0.b32.cont [10/16] 0.0, 128
        %1339 = vxpose.xlu0.b32.cont [11/16] 0.0, 128
        %1340 = vxpose.xlu0.b32.cont [12/16] 0.0, 128
        %1341 = vxpose.xlu0.b32.cont [13/16] 0.0, 128
        %1342 = vxpose.xlu0.b32.cont [14/16] 0.0, 128
        %1343 = vxpose.xlu0.b32.cont [15/16] 0.0, 128
        %1344 = vxpose.xlu0.b32.end [16/16] 0.0, 128
        %v1345 = vpop.trf.xlu0
        %v1346 = vpop.trf.xlu0
        %v1347 = vpop.trf.xlu0
        %v1348 = vpop.trf.xlu0
        %v1349 = vpop.trf.xlu0
        %v1350 = vpop.trf.xlu0
        %v1351 = vpop.trf.xlu0
        %v1352 = vpop.trf.xlu0
        %v1353 = vpop.trf.xlu0
        %v1354 = vpop.trf.xlu0
        %v1355 = vpop.trf.xlu0
        %v1356 = vpop.trf.xlu0
        %v1357 = vpop.trf.xlu0
        %v1358 = vpop.trf.xlu0
        %v1359 = vpop.trf.xlu0
        %v1360 = vpop.trf.xlu0
        %1361 = vxpose.xlu0.b32.start [1/16] %v1136, 128
        %1362 = vxpose.xlu0.b32.cont [2/16] 0.0, 128
        %1363 = vxpose.xlu0.b32.cont [3/16] 0.0, 128
        %1364 = vxpose.xlu0.b32.cont [4/16] 0.0, 128
        %1365 = vxpose.xlu0.b32.cont [5/16] 0.0, 128
        %1366 = vxpose.xlu0.b32.cont [6/16] 0.0, 128
        %1367 = vxpose.xlu0.b32.cont [7/16] 0.0, 128
        %1368 = vxpose.xlu0.b32.cont [8/16] 0.0, 128
        %1369 = vxpose.xlu0.b32.cont [9/16] 0.0, 128
        %1370 = vxpose.xlu0.b32.cont [10/16] 0.0, 128
        %1371 = vxpose.xlu0.b32.cont [11/16] 0.0, 128
        %1372 = vxpose.xlu0.b32.cont [12/16] 0.0, 128
        %1373 = vxpose.xlu0.b32.cont [13/16] 0.0, 128
        %1374 = vxpose.xlu0.b32.cont [14/16] 0.0, 128
        %1375 = vxpose.xlu0.b32.cont [15/16] 0.0, 128
        %1376 = vxpose.xlu0.b32.end [16/16] 0.0, 128
        %v1377 = vpop.trf.xlu0
        %v1378 = vpop.trf.xlu0
        %v1379 = vpop.trf.xlu0
        %v1380 = vpop.trf.xlu0
        %v1381 = vpop.trf.xlu0
        %v1382 = vpop.trf.xlu0
        %v1383 = vpop.trf.xlu0
        %v1384 = vpop.trf.xlu0
        %v1385 = vpop.trf.xlu0
        %v1386 = vpop.trf.xlu0
        %v1387 = vpop.trf.xlu0
        %v1388 = vpop.trf.xlu0
        %v1389 = vpop.trf.xlu0
        %v1390 = vpop.trf.xlu0
        %v1391 = vpop.trf.xlu0
        %v1392 = vpop.trf.xlu0
        %v1401 = vcombine.low %v1153, %v1185
        %v1402 = vcombine.low %v1217, %v1249
        %v1403 = vcombine.low %v1281, %v1313
        %v1404 = vcombine.low %v1345, %v1377
        %v1409 = vpack.c.bf16 %v1402, %v1401
        %v1410 = vpack.c.bf16 %v1404, %v1403
        %v1411 = vld [vmem:[%s4] sm:$0xf]
        %v1413 = vsel %vm454, %v1409, 0
        %v1416 = vsel %vm454, %v1410, 0
        %v1419 = vsel %vm796, %v1411, 0
        %1421 = vmatprep.subr.bf16.mxu0 0
        %1422 = vmatpush1.bf16.msra.mxu0 %v1419
        %1423 = vmatprep.subr.bf16.mxu0 0
        %1424 = vmatpush1.bf16.msra.mxu0 0
        %1425 = vmatprep.subr.bf16.mxu0 0
        %1426 = vmatpush1.bf16.msra.mxu0 0
        %1427 = vmatprep.subr.bf16.mxu0 0
        %1428 = vmatpush1.bf16.msra.mxu0 0
        %1429 = vmatprep.subr.bf16.mxu0 0
        %1430 = vmatpush1.bf16.msra.mxu0 0
        %1431 = vmatprep.subr.bf16.mxu0 0
        %1432 = vmatpush1.bf16.msra.mxu0 0
        %1433 = vmatprep.subr.bf16.mxu0 0
        %1434 = vmatpush1.bf16.msra.mxu0 0
        %1435 = vmatprep.subr.bf16.mxu0 0
        %1436 = vmatpush1.bf16.msra.mxu0 0
        %1437 = vmatprep.subr.bf16.mxu0 0
        %1438 = vmatpush1.bf16.msra.mxu0 0
        %1439 = vmatprep.subr.bf16.mxu0 0
        %1440 = vmatpush1.bf16.msra.mxu0 0
        %1441 = vmatprep.subr.bf16.mxu0 0
        %1442 = vmatpush1.bf16.msra.mxu0 0
        %1443 = vmatprep.subr.bf16.mxu0 0
        %1444 = vmatpush1.bf16.msra.mxu0 0
        %1445 = vmatprep.subr.bf16.mxu0 0
        %1446 = vmatpush1.bf16.msra.mxu0 0
        %1447 = vmatprep.subr.bf16.mxu0 0
        %1448 = vmatpush1.bf16.msra.mxu0 0
        %1449 = vmatprep.subr.bf16.mxu0 0
        %1450 = vmatpush1.bf16.msra.mxu0 0
        %1451 = vmatprep.subr.bf16.mxu0 0
        %1452 = vmatpush1.bf16.msra.mxu0 0
        %1453 = vmatprep.mubr.bf16.mxu0 0
        %1454 = vmatmul.mubr.bf16.gmra.mrb[0].mxu0 %v1413
        %v1455 = vpop.f32.mrb[0].mxu0
        %v1456 = vadd.f32 0.0, %v1455
        %v1457 = vpop.f32.mrb[0].mxu0
        %v1458 = vpop.f32.mrb[0].mxu0
        %v1459 = vadd.f32 0.0, %v1458
        %v1460 = vpop.f32.mrb[0].mxu0
        %1461 = vmatprep.mubr.bf16.mxu0 0
        %1462 = vmatmul.mubr.bf16.gmra.mrb[0].mxu0 %v1416
        %v1463 = vpop.f32.mrb[0].mxu0
        %v1464 = vadd.f32 0.0, %v1463
        %v1465 = vpop.f32.mrb[0].mxu0
        %v1466 = vpop.f32.mrb[0].mxu0
        %v1467 = vadd.f32 0.0, %v1466
        %v1468 = vpop.f32.mrb[0].mxu0
        %1469 = vdwg.mxu0
        %v1474 = vcombine.high %v1456, %v1456
        %v1475 = vcombine.high %v1459, %v1459
        %v1476 = vcombine.high %v1464, %v1464
        %v1477 = vcombine.high %v1467, %v1467
        %1482 = vxpose.xlu0.b32.start [1/16] %v1456, 128
        %1483 = vxpose.xlu0.b32.cont [2/16] 0.0, 128
        %1484 = vxpose.xlu0.b32.cont [3/16] 0.0, 128
        %1485 = vxpose.xlu0.b32.cont [4/16] 0.0, 128
        %1486 = vxpose.xlu0.b32.cont [5/16] 0.0, 128
        %1487 = vxpose.xlu0.b32.cont [6/16] 0.0, 128
        %1488 = vxpose.xlu0.b32.cont [7/16] 0.0, 128
        %1489 = vxpose.xlu0.b32.cont [8/16] 0.0, 128
        %1490 = vxpose.xlu0.b32.cont [9/16] 0.0, 128
        %1491 = vxpose.xlu0.b32.cont [10/16] 0.0, 128
        %1492 = vxpose.xlu0.b32.cont [11/16] 0.0, 128
        %1493 = vxpose.xlu0.b32.cont [12/16] 0.0, 128
        %1494 = vxpose.xlu0.b32.cont [13/16] 0.0, 128
        %1495 = vxpose.xlu0.b32.cont [14/16] 0.0, 128
        %1496 = vxpose.xlu0.b32.cont [15/16] 0.0, 128
        %1497 = vxpose.xlu0.b32.end [16/16] 0.0, 128
        %v1498 = vpop.trf.xlu0
        %v1499 = vpop.trf.xlu0
        %v1500 = vpop.trf.xlu0
        %v1501 = vpop.trf.xlu0
        %v1502 = vpop.trf.xlu0
        %v1503 = vpop.trf.xlu0
        %v1504 = vpop.trf.xlu0
        %v1505 = vpop.trf.xlu0
        %v1506 = vpop.trf.xlu0
        %v1507 = vpop.trf.xlu0
        %v1508 = vpop.trf.xlu0
        %v1509 = vpop.trf.xlu0
        %v1510 = vpop.trf.xlu0
        %v1511 = vpop.trf.xlu0
        %v1512 = vpop.trf.xlu0
        %v1513 = vpop.trf.xlu0
        %1514 = vxpose.xlu0.b32.start [1/16] %v1474, 128
        %1515 = vxpose.xlu0.b32.cont [2/16] 0.0, 128
        %1516 = vxpose.xlu0.b32.cont [3/16] 0.0, 128
        %1517 = vxpose.xlu0.b32.cont [4/16] 0.0, 128
        %1518 = vxpose.xlu0.b32.cont [5/16] 0.0, 128
        %1519 = vxpose.xlu0.b32.cont [6/16] 0.0, 128
        %1520 = vxpose.xlu0.b32.cont [7/16] 0.0, 128
        %1521 = vxpose.xlu0.b32.cont [8/16] 0.0, 128
        %1522 = vxpose.xlu0.b32.cont [9/16] 0.0, 128
        %1523 = vxpose.xlu0.b32.cont [10/16] 0.0, 128
        %1524 = vxpose.xlu0.b32.cont [11/16] 0.0, 128
        %1525 = vxpose.xlu0.b32.cont [12/16] 0.0, 128
        %1526 = vxpose.xlu0.b32.cont [13/16] 0.0, 128
        %1527 = vxpose.xlu0.b32.cont [14/16] 0.0, 128
        %1528 = vxpose.xlu0.b32.cont [15/16] 0.0, 128
        %1529 = vxpose.xlu0.b32.end [16/16] 0.0, 128
        %v1530 = vpop.trf.xlu0
        %v1531 = vpop.trf.xlu0
        %v1532 = vpop.trf.xlu0
        %v1533 = vpop.trf.xlu0
        %v1534 = vpop.trf.xlu0
        %v1535 = vpop.trf.xlu0
        %v1536 = vpop.trf.xlu0
        %v1537 = vpop.trf.xlu0
        %v1538 = vpop.trf.xlu0
        %v1539 = vpop.trf.xlu0
        %v1540 = vpop.trf.xlu0
        %v1541 = vpop.trf.xlu0
        %v1542 = vpop.trf.xlu0
        %v1543 = vpop.trf.xlu0
        %v1544 = vpop.trf.xlu0
        %v1545 = vpop.trf.xlu0
        %1546 = vxpose.xlu0.b32.start [1/16] %v1459, 128
        %1547 = vxpose.xlu0.b32.cont [2/16] 0.0, 128
        %1548 = vxpose.xlu0.b32.cont [3/16] 0.0, 128
        %1549 = vxpose.xlu0.b32.cont [4/16] 0.0, 128
        %1550 = vxpose.xlu0.b32.cont [5/16] 0.0, 128
        %1551 = vxpose.xlu0.b32.cont [6/16] 0.0, 128
        %1552 = vxpose.xlu0.b32.cont [7/16] 0.0, 128
        %1553 = vxpose.xlu0.b32.cont [8/16] 0.0, 128
        %1554 = vxpose.xlu0.b32.cont [9/16] 0.0, 128
        %1555 = vxpose.xlu0.b32.cont [10/16] 0.0, 128
        %1556 = vxpose.xlu0.b32.cont [11/16] 0.0, 128
        %1557 = vxpose.xlu0.b32.cont [12/16] 0.0, 128
        %1558 = vxpose.xlu0.b32.cont [13/16] 0.0, 128
        %1559 = vxpose.xlu0.b32.cont [14/16] 0.0, 128
        %1560 = vxpose.xlu0.b32.cont [15/16] 0.0, 128
        %1561 = vxpose.xlu0.b32.end [16/16] 0.0, 128
        %v1562 = vpop.trf.xlu0
        %v1563 = vpop.trf.xlu0
        %v1564 = vpop.trf.xlu0
        %v1565 = vpop.trf.xlu0
        %v1566 = vpop.trf.xlu0
        %v1567 = vpop.trf.xlu0
        %v1568 = vpop.trf.xlu0
        %v1569 = vpop.trf.xlu0
        %v1570 = vpop.trf.xlu0
        %v1571 = vpop.trf.xlu0
        %v1572 = vpop.trf.xlu0
        %v1573 = vpop.trf.xlu0
        %v1574 = vpop.trf.xlu0
        %v1575 = vpop.trf.xlu0
        %v1576 = vpop.trf.xlu0
        %v1577 = vpop.trf.xlu0
        %1578 = vxpose.xlu0.b32.start [1/16] %v1475, 128
        %1579 = vxpose.xlu0.b32.cont [2/16] 0.0, 128
        %1580 = vxpose.xlu0.b32.cont [3/16] 0.0, 128
        %1581 = vxpose.xlu0.b32.cont [4/16] 0.0, 128
        %1582 = vxpose.xlu0.b32.cont [5/16] 0.0, 128
        %1583 = vxpose.xlu0.b32.cont [6/16] 0.0, 128
        %1584 = vxpose.xlu0.b32.cont [7/16] 0.0, 128
        %1585 = vxpose.xlu0.b32.cont [8/16] 0.0, 128
        %1586 = vxpose.xlu0.b32.cont [9/16] 0.0, 128
        %1587 = vxpose.xlu0.b32.cont [10/16] 0.0, 128
        %1588 = vxpose.xlu0.b32.cont [11/16] 0.0, 128
        %1589 = vxpose.xlu0.b32.cont [12/16] 0.0, 128
        %1590 = vxpose.xlu0.b32.cont [13/16] 0.0, 128
        %1591 = vxpose.xlu0.b32.cont [14/16] 0.0, 128
        %1592 = vxpose.xlu0.b32.cont [15/16] 0.0, 128
        %1593 = vxpose.xlu0.b32.end [16/16] 0.0, 128
        %v1594 = vpop.trf.xlu0
        %v1595 = vpop.trf.xlu0
        %v1596 = vpop.trf.xlu0
        %v1597 = vpop.trf.xlu0
        %v1598 = vpop.trf.xlu0
        %v1599 = vpop.trf.xlu0
        %v1600 = vpop.trf.xlu0
        %v1601 = vpop.trf.xlu0
        %v1602 = vpop.trf.xlu0
        %v1603 = vpop.trf.xlu0
        %v1604 = vpop.trf.xlu0
        %v1605 = vpop.trf.xlu0
        %v1606 = vpop.trf.xlu0
        %v1607 = vpop.trf.xlu0
        %v1608 = vpop.trf.xlu0
        %v1609 = vpop.trf.xlu0
        %1610 = vxpose.xlu0.b32.start [1/16] %v1464, 128
        %1611 = vxpose.xlu0.b32.cont [2/16] 0.0, 128
        %1612 = vxpose.xlu0.b32.cont [3/16] 0.0, 128
        %1613 = vxpose.xlu0.b32.cont [4/16] 0.0, 128
        %1614 = vxpose.xlu0.b32.cont [5/16] 0.0, 128
        %1615 = vxpose.xlu0.b32.cont [6/16] 0.0, 128
        %1616 = vxpose.xlu0.b32.cont [7/16] 0.0, 128
        %1617 = vxpose.xlu0.b32.cont [8/16] 0.0, 128
        %1618 = vxpose.xlu0.b32.cont [9/16] 0.0, 128
        %1619 = vxpose.xlu0.b32.cont [10/16] 0.0, 128
        %1620 = vxpose.xlu0.b32.cont [11/16] 0.0, 128
        %1621 = vxpose.xlu0.b32.cont [12/16] 0.0, 128
        %1622 = vxpose.xlu0.b32.cont [13/16] 0.0, 128
        %1623 = vxpose.xlu0.b32.cont [14/16] 0.0, 128
        %1624 = vxpose.xlu0.b32.cont [15/16] 0.0, 128
        %1625 = vxpose.xlu0.b32.end [16/16] 0.0, 128
        %v1626 = vpop.trf.xlu0
        %v1627 = vpop.trf.xlu0
        %v1628 = vpop.trf.xlu0
        %v1629 = vpop.trf.xlu0
        %v1630 = vpop.trf.xlu0
        %v1631 = vpop.trf.xlu0
        %v1632 = vpop.trf.xlu0
        %v1633 = vpop.trf.xlu0
        %v1634 = vpop.trf.xlu0
        %v1635 = vpop.trf.xlu0
        %v1636 = vpop.trf.xlu0
        %v1637 = vpop.trf.xlu0
        %v1638 = vpop.trf.xlu0
        %v1639 = vpop.trf.xlu0
        %v1640 = vpop.trf.xlu0
        %v1641 = vpop.trf.xlu0
        %1642 = vxpose.xlu0.b32.start [1/16] %v1476, 128
        %1643 = vxpose.xlu0.b32.cont [2/16] 0.0, 128
        %1644 = vxpose.xlu0.b32.cont [3/16] 0.0, 128
        %1645 = vxpose.xlu0.b32.cont [4/16] 0.0, 128
        %1646 = vxpose.xlu0.b32.cont [5/16] 0.0, 128
        %1647 = vxpose.xlu0.b32.cont [6/16] 0.0, 128
        %1648 = vxpose.xlu0.b32.cont [7/16] 0.0, 128
        %1649 = vxpose.xlu0.b32.cont [8/16] 0.0, 128
        %1650 = vxpose.xlu0.b32.cont [9/16] 0.0, 128
        %1651 = vxpose.xlu0.b32.cont [10/16] 0.0, 128
        %1652 = vxpose.xlu0.b32.cont [11/16] 0.0, 128
        %1653 = vxpose.xlu0.b32.cont [12/16] 0.0, 128
        %1654 = vxpose.xlu0.b32.cont [13/16] 0.0, 128
        %1655 = vxpose.xlu0.b32.cont [14/16] 0.0, 128
        %1656 = vxpose.xlu0.b32.cont [15/16] 0.0, 128
        %1657 = vxpose.xlu0.b32.end [16/16] 0.0, 128
        %v1658 = vpop.trf.xlu0
        %v1659 = vpop.trf.xlu0
        %v1660 = vpop.trf.xlu0
        %v1661 = vpop.trf.xlu0
        %v1662 = vpop.trf.xlu0
        %v1663 = vpop.trf.xlu0
        %v1664 = vpop.trf.xlu0
        %v1665 = vpop.trf.xlu0
        %v1666 = vpop.trf.xlu0
        %v1667 = vpop.trf.xlu0
        %v1668 = vpop.trf.xlu0
        %v1669 = vpop.trf.xlu0
        %v1670 = vpop.trf.xlu0
        %v1671 = vpop.trf.xlu0
        %v1672 = vpop.trf.xlu0
        %v1673 = vpop.trf.xlu0
        %1674 = vxpose.xlu0.b32.start [1/16] %v1467, 128
        %1675 = vxpose.xlu0.b32.cont [2/16] 0.0, 128
        %1676 = vxpose.xlu0.b32.cont [3/16] 0.0, 128
        %1677 = vxpose.xlu0.b32.cont [4/16] 0.0, 128
        %1678 = vxpose.xlu0.b32.cont [5/16] 0.0, 128
        %1679 = vxpose.xlu0.b32.cont [6/16] 0.0, 128
        %1680 = vxpose.xlu0.b32.cont [7/16] 0.0, 128
        %1681 = vxpose.xlu0.b32.cont [8/16] 0.0, 128
        %1682 = vxpose.xlu0.b32.cont [9/16] 0.0, 128
        %1683 = vxpose.xlu0.b32.cont [10/16] 0.0, 128
        %1684 = vxpose.xlu0.b32.cont [11/16] 0.0, 128
        %1685 = vxpose.xlu0.b32.cont [12/16] 0.0, 128
        %1686 = vxpose.xlu0.b32.cont [13/16] 0.0, 128
        %1687 = vxpose.xlu0.b32.cont [14/16] 0.0, 128
        %1688 = vxpose.xlu0.b32.cont [15/16] 0.0, 128
        %1689 = vxpose.xlu0.b32.end [16/16] 0.0, 128
        %v1690 = vpop.trf.xlu0
        %v1691 = vpop.trf.xlu0
        %v1692 = vpop.trf.xlu0
        %v1693 = vpop.trf.xlu0
        %v1694 = vpop.trf.xlu0
        %v1695 = vpop.trf.xlu0
        %v1696 = vpop.trf.xlu0
        %v1697 = vpop.trf.xlu0
        %v1698 = vpop.trf.xlu0
        %v1699 = vpop.trf.xlu0
        %v1700 = vpop.trf.xlu0
        %v1701 = vpop.trf.xlu0
        %v1702 = vpop.trf.xlu0
        %v1703 = vpop.trf.xlu0
        %v1704 = vpop.trf.xlu0
        %v1705 = vpop.trf.xlu0
        %1706 = vxpose.xlu0.b32.start [1/16] %v1477, 128
        %1707 = vxpose.xlu0.b32.cont [2/16] 0.0, 128
        %1708 = vxpose.xlu0.b32.cont [3/16] 0.0, 128
        %1709 = vxpose.xlu0.b32.cont [4/16] 0.0, 128
        %1710 = vxpose.xlu0.b32.cont [5/16] 0.0, 128
        %1711 = vxpose.xlu0.b32.cont [6/16] 0.0, 128
        %1712 = vxpose.xlu0.b32.cont [7/16] 0.0, 128
        %1713 = vxpose.xlu0.b32.cont [8/16] 0.0, 128
        %1714 = vxpose.xlu0.b32.cont [9/16] 0.0, 128
        %1715 = vxpose.xlu0.b32.cont [10/16] 0.0, 128
        %1716 = vxpose.xlu0.b32.cont [11/16] 0.0, 128
        %1717 = vxpose.xlu0.b32.cont [12/16] 0.0, 128
        %1718 = vxpose.xlu0.b32.cont [13/16] 0.0, 128
        %1719 = vxpose.xlu0.b32.cont [14/16] 0.0, 128
        %1720 = vxpose.xlu0.b32.cont [15/16] 0.0, 128
        %1721 = vxpose.xlu0.b32.end [16/16] 0.0, 128
        %v1722 = vpop.trf.xlu0
        %v1723 = vpop.trf.xlu0
        %v1724 = vpop.trf.xlu0
        %v1725 = vpop.trf.xlu0
        %v1726 = vpop.trf.xlu0
        %v1727 = vpop.trf.xlu0
        %v1728 = vpop.trf.xlu0
        %v1729 = vpop.trf.xlu0
        %v1730 = vpop.trf.xlu0
        %v1731 = vpop.trf.xlu0
        %v1732 = vpop.trf.xlu0
        %v1733 = vpop.trf.xlu0
        %v1734 = vpop.trf.xlu0
        %v1735 = vpop.trf.xlu0
        %v1736 = vpop.trf.xlu0
        %v1737 = vpop.trf.xlu0
        %v1738 = vpack.c.bf16 %v1499, %v1498
        %v1739 = vpack.c.bf16 %v1500, %v1500
        %v1740 = vpack.c.bf16 %v1531, %v1530
        %v1741 = vpack.c.bf16 %v1532, %v1532
        %v1742 = vpack.c.bf16 %v1563, %v1562
        %v1743 = vpack.c.bf16 %v1564, %v1564
        %v1744 = vpack.c.bf16 %v1595, %v1594
        %v1745 = vpack.c.bf16 %v1596, %v1596
        %v1746 = vpack.c.bf16 %v1627, %v1626
        %v1747 = vpack.c.bf16 %v1628, %v1628
        %v1748 = vpack.c.bf16 %v1659, %v1658
        %v1749 = vpack.c.bf16 %v1660, %v1660
        %v1750 = vpack.c.bf16 %v1691, %v1690
        %v1751 = vpack.c.bf16 %v1692, %v1692
        %v1752 = vpack.c.bf16 %v1723, %v1722
        %v1753 = vpack.c.bf16 %v1724, %v1724
        %v1754 = vcombine.low %v1738, %v1746
        %v1755 = vcombine.high %v1738, %v1746
        %v1757 = vunpack.c.l.s4 1983009808
        %v1758 = vunpack.c.0.s8 %v1757
        %v1759 = vlaneseq
        %v1760 = vshrl.u32 %v1759, 7
        %v1761 = vsub.s32 %v1758, %v1760
        %v1762 = vrot.slane %v1754, %v1761
        %v1764 = vunpack.c.l.s4 1983009808
        %v1765 = vunpack.c.0.s8 %v1764
        %v1766 = vlaneseq
        %v1767 = vshrl.u32 %v1766, 7
        %v1768 = vsub.s32 %v1765, %v1767
        %v1769 = vrot.slane %v1755, %v1768
        %v1770 = vcombine.low %v1742, %v1750
        %v1771 = vcombine.high %v1742, %v1750
        %v1773 = vunpack.c.l.s4 1983009808
        %v1774 = vunpack.c.0.s8 %v1773
        %v1775 = vlaneseq
        %v1776 = vshrl.u32 %v1775, 7
        %v1777 = vsub.s32 %v1774, %v1776
        %v1778 = vrot.slane %v1770, %v1777
        %v1780 = vunpack.c.l.s4 1983009808
        %v1781 = vunpack.c.0.s8 %v1780
        %v1782 = vlaneseq
        %v1783 = vshrl.u32 %v1782, 7
        %v1784 = vsub.s32 %v1781, %v1783
        %v1785 = vrot.slane %v1771, %v1784
        %v1786 = vcombine.low %v1762, %v1778
        %v1787 = vcombine.high %v1762, %v1778
        %v1789 = vunpack.c.l.s4 1934713408
        %v1790 = vunpack.c.0.s8 %v1789
        %v1791 = vlaneseq
        %v1792 = vshrl.u32 %v1791, 7
        %v1793 = vsub.s32 %v1790, %v1792
        %v1794 = vrot.slane %v1786, %v1793
        %v1796 = vunpack.c.l.s4 1934713408
        %v1797 = vunpack.c.0.s8 %v1796
        %v1798 = vlaneseq
        %v1799 = vshrl.u32 %v1798, 7
        %v1800 = vsub.s32 %v1797, %v1799
        %v1801 = vrot.slane %v1787, %v1800
        %v1802 = vcombine.low %v1769, %v1785
        %v1803 = vcombine.high %v1769, %v1785
        %v1805 = vunpack.c.l.s4 1934713408
        %v1806 = vunpack.c.0.s8 %v1805
        %v1807 = vlaneseq
        %v1808 = vshrl.u32 %v1807, 7
        %v1809 = vsub.s32 %v1806, %v1808
        %v1810 = vrot.slane %v1802, %v1809
        %v1812 = vunpack.c.l.s4 1934713408
        %v1813 = vunpack.c.0.s8 %v1812
        %v1814 = vlaneseq
        %v1815 = vshrl.u32 %v1814, 7
        %v1816 = vsub.s32 %v1813, %v1815
        %v1817 = vrot.slane %v1803, %v1816
        %v1818 = vcombine.high %v1794, 0
        %v1819 = vcombine.high %v1801, 0
        %v1820 = vcombine.high %v1810, 0
        %v1821 = vcombine.high %v1817, 0
        %v1822 = vcombine.low %v1740, %v1748
        %v1823 = vcombine.high %v1740, %v1748
        %v1825 = vunpack.c.l.s4 1983009808
        %v1826 = vunpack.c.0.s8 %v1825
        %v1827 = vlaneseq
        %v1828 = vshrl.u32 %v1827, 7
        %v1829 = vsub.s32 %v1826, %v1828
        %v1830 = vrot.slane %v1822, %v1829
        %v1832 = vunpack.c.l.s4 1983009808
        %v1833 = vunpack.c.0.s8 %v1832
        %v1834 = vlaneseq
        %v1835 = vshrl.u32 %v1834, 7
        %v1836 = vsub.s32 %v1833, %v1835
        %v1837 = vrot.slane %v1823, %v1836
        %v1838 = vcombine.low %v1744, %v1752
        %v1839 = vcombine.high %v1744, %v1752
        %v1841 = vunpack.c.l.s4 1983009808
        %v1842 = vunpack.c.0.s8 %v1841
        %v1843 = vlaneseq
        %v1844 = vshrl.u32 %v1843, 7
        %v1845 = vsub.s32 %v1842, %v1844
        %v1846 = vrot.slane %v1838, %v1845
        %v1848 = vunpack.c.l.s4 1983009808
        %v1849 = vunpack.c.0.s8 %v1848
        %v1850 = vlaneseq
        %v1851 = vshrl.u32 %v1850, 7
        %v1852 = vsub.s32 %v1849, %v1851
        %v1853 = vrot.slane %v1839, %v1852
        %v1854 = vcombine.low %v1830, %v1846
        %v1855 = vcombine.high %v1830, %v1846
        %v1857 = vunpack.c.l.s4 1934713408
        %v1858 = vunpack.c.0.s8 %v1857
        %v1859 = vlaneseq
        %v1860 = vshrl.u32 %v1859, 7
        %v1861 = vsub.s32 %v1858, %v1860
        %v1862 = vrot.slane %v1854, %v1861
        %v1864 = vunpack.c.l.s4 1934713408
        %v1865 = vunpack.c.0.s8 %v1864
        %v1866 = vlaneseq
        %v1867 = vshrl.u32 %v1866, 7
        %v1868 = vsub.s32 %v1865, %v1867
        %v1869 = vrot.slane %v1855, %v1868
        %v1870 = vcombine.low %v1837, %v1853
        %v1871 = vcombine.high %v1837, %v1853
        %v1873 = vunpack.c.l.s4 1934713408
        %v1874 = vunpack.c.0.s8 %v1873
        %v1875 = vlaneseq
        %v1876 = vshrl.u32 %v1875, 7
        %v1877 = vsub.s32 %v1874, %v1876
        %v1878 = vrot.slane %v1870, %v1877
        %v1880 = vunpack.c.l.s4 1934713408
        %v1881 = vunpack.c.0.s8 %v1880
        %v1882 = vlaneseq
        %v1883 = vshrl.u32 %v1882, 7
        %v1884 = vsub.s32 %v1881, %v1883
        %v1885 = vrot.slane %v1871, %v1884
        %v1886 = vcombine.high %v1862, 0
        %v1887 = vcombine.high %v1869, 0
        %v1888 = vcombine.high %v1878, 0
        %v1889 = vcombine.high %v1885, 0
        %v1890 = vcombine.low %v1739, %v1747
        %v1892 = vunpack.c.l.s4 1983009808
        %v1893 = vunpack.c.0.s8 %v1892
        %v1894 = vlaneseq
        %v1895 = vshrl.u32 %v1894, 7
        %v1896 = vsub.s32 %v1893, %v1895
        %v1897 = vrot.slane %v1890, %v1896
        %v1898 = vcombine.low %v1743, %v1751
        %v1900 = vunpack.c.l.s4 1983009808
        %v1901 = vunpack.c.0.s8 %v1900
        %v1902 = vlaneseq
        %v1903 = vshrl.u32 %v1902, 7
        %v1904 = vsub.s32 %v1901, %v1903
        %v1905 = vrot.slane %v1898, %v1904
        %v1906 = vcombine.low %v1897, %v1905
        %v1908 = vunpack.c.l.s4 1934713408
        %v1909 = vunpack.c.0.s8 %v1908
        %v1910 = vlaneseq
        %v1911 = vshrl.u32 %v1910, 7
        %v1912 = vsub.s32 %v1909, %v1911
        %v1913 = vrot.slane %v1906, %v1912
        %v1914 = vcombine.low %v1741, %v1749
        %v1916 = vunpack.c.l.s4 1983009808
        %v1917 = vunpack.c.0.s8 %v1916
        %v1918 = vlaneseq
        %v1919 = vshrl.u32 %v1918, 7
        %v1920 = vsub.s32 %v1917, %v1919
        %v1921 = vrot.slane %v1914, %v1920
        %v1922 = vcombine.low %v1745, %v1753
        %v1924 = vunpack.c.l.s4 1983009808
        %v1925 = vunpack.c.0.s8 %v1924
        %v1926 = vlaneseq
        %v1927 = vshrl.u32 %v1926, 7
        %v1928 = vsub.s32 %v1925, %v1927
        %v1929 = vrot.slane %v1922, %v1928
        %v1930 = vcombine.low %v1921, %v1929
        %v1932 = vunpack.c.l.s4 1934713408
        %v1933 = vunpack.c.0.s8 %v1932
        %v1934 = vlaneseq
        %v1935 = vshrl.u32 %v1934, 7
        %v1936 = vsub.s32 %v1933, %v1935
        %v1937 = vrot.slane %v1930, %v1936
        %v1940 = vpack.i.b16 %v1862, %v1794
        %v1941 = vshrl.u32 %v1794, 16
        %v1942 = vshrl.u32 %v1862, 16
        %v1943 = vpack.i.b16 %v1942, %v1941
        %v1946 = vpack.i.b16 %v1886, %v1818
        %v1947 = vshrl.u32 %v1818, 16
        %v1948 = vshrl.u32 %v1886, 16
        %v1949 = vpack.i.b16 %v1948, %v1947
        %v1952 = vpack.i.b16 %v1869, %v1801
        %v1953 = vshrl.u32 %v1801, 16
        %v1954 = vshrl.u32 %v1869, 16
        %v1955 = vpack.i.b16 %v1954, %v1953
        %v1958 = vpack.i.b16 %v1887, %v1819
        %v1959 = vshrl.u32 %v1819, 16
        %v1960 = vshrl.u32 %v1887, 16
        %v1961 = vpack.i.b16 %v1960, %v1959
        %v1964 = vpack.i.b16 %v1878, %v1810
        %v1965 = vshrl.u32 %v1810, 16
        %v1966 = vshrl.u32 %v1878, 16
        %v1967 = vpack.i.b16 %v1966, %v1965
        %v1970 = vpack.i.b16 %v1888, %v1820
        %v1971 = vshrl.u32 %v1820, 16
        %v1972 = vshrl.u32 %v1888, 16
        %v1973 = vpack.i.b16 %v1972, %v1971
        %v1976 = vpack.i.b16 %v1885, %v1817
        %v1977 = vshrl.u32 %v1817, 16
        %v1978 = vshrl.u32 %v1885, 16
        %v1979 = vpack.i.b16 %v1978, %v1977
        %v1982 = vpack.i.b16 %v1889, %v1821
        %v1983 = vshrl.u32 %v1821, 16
        %v1984 = vshrl.u32 %v1889, 16
        %v1985 = vpack.i.b16 %v1984, %v1983
        %v1988 = vpack.i.b16 %v1937, %v1913
        %v1989 = vshrl.u32 %v1913, 16
        %v1990 = vshrl.u32 %v1937, 16
        %v1991 = vpack.i.b16 %v1990, %v1989
        %1992 = vrot.lane.b32.xlu0 %v1943, 4
        %v1993 = vpop.permute.xlu0 %1992
        %1994 = vrot.lane.b32.xlu0 %v1946, 8
        %v1995 = vpop.permute.xlu0 %1994
        %1996 = vrot.lane.b32.xlu0 %v1949, 12
        %v1997 = vpop.permute.xlu0 %1996
        %1998 = vrot.lane.b32.xlu0 %v1952, 16
        %v1999 = vpop.permute.xlu0 %1998
        %2000 = vrot.lane.b32.xlu0 %v1955, 20
        %v2001 = vpop.permute.xlu0 %2000
        %2002 = vrot.lane.b32.xlu0 %v1958, 24
        %v2003 = vpop.permute.xlu0 %2002
        %2004 = vrot.lane.b32.xlu0 %v1961, 28
        %v2005 = vpop.permute.xlu0 %2004
        %2006 = vrot.lane.b32.xlu0 %v1964, 32
        %v2007 = vpop.permute.xlu0 %2006
        %2008 = vrot.lane.b32.xlu0 %v1967, 36
        %v2009 = vpop.permute.xlu0 %2008
        %2010 = vrot.lane.b32.xlu0 %v1970, 40
        %v2011 = vpop.permute.xlu0 %2010
        %2012 = vrot.lane.b32.xlu0 %v1973, 44
        %v2013 = vpop.permute.xlu0 %2012
        %2014 = vrot.lane.b32.xlu0 %v1976, 48
        %v2015 = vpop.permute.xlu0 %2014
        %2016 = vrot.lane.b32.xlu0 %v1979, 52
        %v2017 = vpop.permute.xlu0 %2016
        %2018 = vrot.lane.b32.xlu0 %v1982, 56
        %v2019 = vpop.permute.xlu0 %2018
        %2020 = vrot.lane.b32.xlu0 %v1985, 60
        %v2021 = vpop.permute.xlu0 %2020
        %2022 = vrot.lane.b32.xlu0 %v1988, 64
        %v2023 = vpop.permute.xlu0 %2022
        %2024 = vrot.lane.b32.xlu0 %v1991, 68
        %v2025 = vpop.permute.xlu0 %2024
        %vm2026 = vcmask 31744
        %v2029 = vsel %vm2026, %v1940, %v1993
        %v2031 = vsel %vm454, %v2029, %v1995
        %vm2032 = vcmask 97280
        %v2034 = vsel %vm2032, %v2031, %v1997
        %v2036 = vsel %vm479, %v2034, %v1999
        %vm2037 = vcmask 162816
        %v2039 = vsel %vm2037, %v2036, %v2001
        %v2041 = vsel %vm783, %v2039, %v2003
        %vm2042 = vcmask 228352
        %v2044 = vsel %vm2042, %v2041, %v2005
        %vm2045 = vcmask 261120
        %v2047 = vsel %vm2045, %v2044, %v2007
        %vm2048 = vcmask 293888
        %v2050 = vsel %vm2048, %v2047, %v2009
        %vm2051 = vcmask 326656
        %v2053 = vsel %vm2051, %v2050, %v2011
        %vm2054 = vcmask 359424
        %v2056 = vsel %vm2054, %v2053, %v2013
        %vm2057 = vcmask 392192
        %v2059 = vsel %vm2057, %v2056, %v2015
        %vm2060 = vcmask 424960
        %v2062 = vsel %vm2060, %v2059, %v2017
        %vm2063 = vcmask 457728
        %v2065 = vsel %vm2063, %v2062, %v2019
        %vm2066 = vcmask 490496
        %v2068 = vsel %vm2066, %v2065, %v2021
        %vm2069 = vcmask 523264
        %v2071 = vsel %vm2069, %v2068, %v2023
        %vm2072 = vcmask 556032
        %v2074 = vsel %vm2072, %v2071, %v2025
        %v2075 = vld [vmem:[%s368] sm:$0xf]
        %v2076 = vld [vmem:[%s368 + $0x4] sm:$0xf]
        %v2077 = vld [vmem:[%s368 + $0x8] sm:$0x1]
        %v2081 = vunpack.c.l.b16 %v2075
        %v2082 = vunpack.c.l.b16 %v2076
        %v2083 = vunpack.c.l.b16 %v2077
        %v2084 = vpack.c.b16 %v2082, %v2081
        %v2085 = vpack.c.b16 %v2083, %v2083
        %v2087 = vsel %vm454, %v2084, 0
        %v2090 = vsel %vm454, %v2085, 0
        %v2092 = vsel %vm796, %v2074, 0
        %2094 = vmatprep.subr.bf16.mxu0 0
        %2095 = vmatpush1.bf16.msra.mxu0 %v2092
        %2096 = vmatprep.subr.bf16.mxu0 0
        %2097 = vmatpush1.bf16.msra.mxu0 0
        %2098 = vmatprep.subr.bf16.mxu0 0
        %2099 = vmatpush1.bf16.msra.mxu0 0
        %2100 = vmatprep.subr.bf16.mxu0 0
        %2101 = vmatpush1.bf16.msra.mxu0 0
        %2102 = vmatprep.subr.bf16.mxu0 0
        %2103 = vmatpush1.bf16.msra.mxu0 0
        %2104 = vmatprep.subr.bf16.mxu0 0
        %2105 = vmatpush1.bf16.msra.mxu0 0
        %2106 = vmatprep.subr.bf16.mxu0 0
        %2107 = vmatpush1.bf16.msra.mxu0 0
        %2108 = vmatprep.subr.bf16.mxu0 0
        %2109 = vmatpush1.bf16.msra.mxu0 0
        %2110 = vmatprep.subr.bf16.mxu0 0
        %2111 = vmatpush1.bf16.msra.mxu0 0
        %2112 = vmatprep.subr.bf16.mxu0 0
        %2113 = vmatpush1.bf16.msra.mxu0 0
        %2114 = vmatprep.subr.bf16.mxu0 0
        %2115 = vmatpush1.bf16.msra.mxu0 0
        %2116 = vmatprep.subr.bf16.mxu0 0
        %2117 = vmatpush1.bf16.msra.mxu0 0
        %2118 = vmatprep.subr.bf16.mxu0 0
        %2119 = vmatpush1.bf16.msra.mxu0 0
        %2120 = vmatprep.subr.bf16.mxu0 0
        %2121 = vmatpush1.bf16.msra.mxu0 0
        %2122 = vmatprep.subr.bf16.mxu0 0
        %2123 = vmatpush1.bf16.msra.mxu0 0
        %2124 = vmatprep.subr.bf16.mxu0 0
        %2125 = vmatpush1.bf16.msra.mxu0 0
        %2126 = vmatprep.mubr.bf16.mxu0 0
        %2127 = vmatmul.mubr.bf16.gmra.mrb[0].mxu0 %v2087
        %v2128 = vpop.f32.mrb[0].mxu0
        %v2129 = vadd.f32 0.0, %v2128
        %v2130 = vpop.f32.mrb[0].mxu0
        %v2131 = vpop.f32.mrb[0].mxu0
        %v2132 = vadd.f32 0.0, %v2131
        %v2133 = vpop.f32.mrb[0].mxu0
        %2134 = vmatprep.mubr.bf16.mxu0 0
        %2135 = vmatmul.mubr.bf16.gmra.mrb[0].mxu0 %v2090
        %v2136 = vpop.f32.mrb[0].mxu0
        %v2137 = vadd.f32 0.0, %v2136
        %v2138 = vpop.f32.mrb[0].mxu0
        %v2139 = vpop.f32.mrb[0].mxu0
        %v2140 = vpop.f32.mrb[0].mxu0
        %2141 = vdwg.mxu0
        %2145 = vrot.lane.b32.xlu0 %v2129, 124
        %v2146 = vpop.permute.xlu0 %2145
        %2147 = vrot.lane.b32.xlu0 %v2132, 124
        %v2148 = vpop.permute.xlu0 %2147
        %2149 = vrot.lane.b32.xlu0 %v2137, 124
        %v2150 = vpop.permute.xlu0 %2149
        %2154 = vrot.lane.b32.xlu0 %v2129, 120
        %v2155 = vpop.permute.xlu0 %2154
        %2156 = vrot.lane.b32.xlu0 %v2132, 120
        %v2157 = vpop.permute.xlu0 %2156
        %2158 = vrot.lane.b32.xlu0 %v2137, 120
        %v2159 = vpop.permute.xlu0 %2158
        %2163 = vrot.lane.b32.xlu0 %v2129, 116
        %v2164 = vpop.permute.xlu0 %2163
        %2165 = vrot.lane.b32.xlu0 %v2132, 116
        %v2166 = vpop.permute.xlu0 %2165
        %2167 = vrot.lane.b32.xlu0 %v2137, 116
        %v2168 = vpop.permute.xlu0 %2167
        %2172 = vrot.lane.b32.xlu0 %v2129, 112
        %v2173 = vpop.permute.xlu0 %2172
        %2174 = vrot.lane.b32.xlu0 %v2132, 112
        %v2175 = vpop.permute.xlu0 %2174
        %2176 = vrot.lane.b32.xlu0 %v2137, 112
        %v2177 = vpop.permute.xlu0 %2176
        %2181 = vrot.lane.b32.xlu0 %v2129, 108
        %v2182 = vpop.permute.xlu0 %2181
        %2183 = vrot.lane.b32.xlu0 %v2132, 108
        %v2184 = vpop.permute.xlu0 %2183
        %2185 = vrot.lane.b32.xlu0 %v2137, 108
        %v2186 = vpop.permute.xlu0 %2185
        %2190 = vrot.lane.b32.xlu0 %v2129, 104
        %v2191 = vpop.permute.xlu0 %2190
        %2192 = vrot.lane.b32.xlu0 %v2132, 104
        %v2193 = vpop.permute.xlu0 %2192
        %2194 = vrot.lane.b32.xlu0 %v2137, 104
        %v2195 = vpop.permute.xlu0 %2194
        %2199 = vrot.lane.b32.xlu0 %v2129, 100
        %v2200 = vpop.permute.xlu0 %2199
        %2201 = vrot.lane.b32.xlu0 %v2132, 100
        %v2202 = vpop.permute.xlu0 %2201
        %2203 = vrot.lane.b32.xlu0 %v2137, 100
        %v2204 = vpop.permute.xlu0 %2203
        %2208 = vrot.lane.b32.xlu0 %v2129, 96
        %v2209 = vpop.permute.xlu0 %2208
        %2210 = vrot.lane.b32.xlu0 %v2132, 96
        %v2211 = vpop.permute.xlu0 %2210
        %2212 = vrot.lane.b32.xlu0 %v2137, 96
        %v2213 = vpop.permute.xlu0 %2212
        %2217 = vrot.lane.b32.xlu0 %v2129, 92
        %v2218 = vpop.permute.xlu0 %2217
        %2219 = vrot.lane.b32.xlu0 %v2132, 92
        %v2220 = vpop.permute.xlu0 %2219
        %2221 = vrot.lane.b32.xlu0 %v2137, 92
        %v2222 = vpop.permute.xlu0 %2221
        %2226 = vrot.lane.b32.xlu0 %v2129, 88
        %v2227 = vpop.permute.xlu0 %2226
        %2228 = vrot.lane.b32.xlu0 %v2132, 88
        %v2229 = vpop.permute.xlu0 %2228
        %2230 = vrot.lane.b32.xlu0 %v2137, 88
        %v2231 = vpop.permute.xlu0 %2230
        %2235 = vrot.lane.b32.xlu0 %v2129, 84
        %v2236 = vpop.permute.xlu0 %2235
        %2237 = vrot.lane.b32.xlu0 %v2132, 84
        %v2238 = vpop.permute.xlu0 %2237
        %2239 = vrot.lane.b32.xlu0 %v2137, 84
        %v2240 = vpop.permute.xlu0 %2239
        %2244 = vrot.lane.b32.xlu0 %v2129, 80
        %v2245 = vpop.permute.xlu0 %2244
        %2246 = vrot.lane.b32.xlu0 %v2132, 80
        %v2247 = vpop.permute.xlu0 %2246
        %2248 = vrot.lane.b32.xlu0 %v2137, 80
        %v2249 = vpop.permute.xlu0 %2248
        %2253 = vrot.lane.b32.xlu0 %v2129, 76
        %v2254 = vpop.permute.xlu0 %2253
        %2255 = vrot.lane.b32.xlu0 %v2132, 76
        %v2256 = vpop.permute.xlu0 %2255
        %2257 = vrot.lane.b32.xlu0 %v2137, 76
        %v2258 = vpop.permute.xlu0 %2257
        %2262 = vrot.lane.b32.xlu0 %v2129, 72
        %v2263 = vpop.permute.xlu0 %2262
        %2264 = vrot.lane.b32.xlu0 %v2132, 72
        %v2265 = vpop.permute.xlu0 %2264
        %2266 = vrot.lane.b32.xlu0 %v2137, 72
        %v2267 = vpop.permute.xlu0 %2266
        %2271 = vrot.lane.b32.xlu0 %v2129, 68
        %v2272 = vpop.permute.xlu0 %2271
        %2273 = vrot.lane.b32.xlu0 %v2132, 68
        %v2274 = vpop.permute.xlu0 %2273
        %2275 = vrot.lane.b32.xlu0 %v2137, 68
        %v2276 = vpop.permute.xlu0 %2275
        %2280 = vrot.lane.b32.xlu0 %v2129, 64
        %v2281 = vpop.permute.xlu0 %2280
        %2282 = vrot.lane.b32.xlu0 %v2132, 64
        %v2283 = vpop.permute.xlu0 %2282
        %2284 = vrot.lane.b32.xlu0 %v2137, 64
        %v2285 = vpop.permute.xlu0 %2284
        %2288 = vrot.lane.b32.xlu0 %v2129, 60
        %v2289 = vpop.permute.xlu0 %2288
        %2290 = vrot.lane.b32.xlu0 %v2132, 60
        %v2291 = vpop.permute.xlu0 %2290
        %2292 = vrot.lane.b32.xlu0 %v2137, 60
        %v2293 = vpop.permute.xlu0 %2292
        %v2296 = vcombine.low %v2129, %v2155
        %v2297 = vcombine.high %v2129, %v2155
        %v2299 = vunpack.c.l.s4 1983009808
        %v2300 = vunpack.c.0.s8 %v2299
        %v2301 = vlaneseq
        %v2302 = vshrl.u32 %v2301, 7
        %v2303 = vsub.s32 %v2300, %v2302
        %v2304 = vrot.slane %v2296, %v2303
        %v2306 = vunpack.c.l.s4 1983009808
        %v2307 = vunpack.c.0.s8 %v2306
        %v2308 = vlaneseq
        %v2309 = vshrl.u32 %v2308, 7
        %v2310 = vsub.s32 %v2307, %v2309
        %v2311 = vrot.slane %v2297, %v2310
        %v2312 = vcombine.low %v2146, %v2164
        %v2313 = vcombine.high %v2146, %v2164
        %v2315 = vunpack.c.l.s4 1983009808
        %v2316 = vunpack.c.0.s8 %v2315
        %v2317 = vlaneseq
        %v2318 = vshrl.u32 %v2317, 7
        %v2319 = vsub.s32 %v2316, %v2318
        %v2320 = vrot.slane %v2312, %v2319
        %v2322 = vunpack.c.l.s4 1983009808
        %v2323 = vunpack.c.0.s8 %v2322
        %v2324 = vlaneseq
        %v2325 = vshrl.u32 %v2324, 7
        %v2326 = vsub.s32 %v2323, %v2325
        %v2327 = vrot.slane %v2313, %v2326
        %v2328 = vcombine.low %v2173, %v2191
        %v2329 = vcombine.high %v2173, %v2191
        %v2331 = vunpack.c.l.s4 1983009808
        %v2332 = vunpack.c.0.s8 %v2331
        %v2333 = vlaneseq
        %v2334 = vshrl.u32 %v2333, 7
        %v2335 = vsub.s32 %v2332, %v2334
        %v2336 = vrot.slane %v2328, %v2335
        %v2338 = vunpack.c.l.s4 1983009808
        %v2339 = vunpack.c.0.s8 %v2338
        %v2340 = vlaneseq
        %v2341 = vshrl.u32 %v2340, 7
        %v2342 = vsub.s32 %v2339, %v2341
        %v2343 = vrot.slane %v2329, %v2342
        %v2344 = vcombine.low %v2182, %v2200
        %v2345 = vcombine.high %v2182, %v2200
        %v2347 = vunpack.c.l.s4 1983009808
        %v2348 = vunpack.c.0.s8 %v2347
        %v2349 = vlaneseq
        %v2350 = vshrl.u32 %v2349, 7
        %v2351 = vsub.s32 %v2348, %v2350
        %v2352 = vrot.slane %v2344, %v2351
        %v2354 = vunpack.c.l.s4 1983009808
        %v2355 = vunpack.c.0.s8 %v2354
        %v2356 = vlaneseq
        %v2357 = vshrl.u32 %v2356, 7
        %v2358 = vsub.s32 %v2355, %v2357
        %v2359 = vrot.slane %v2345, %v2358
        %v2360 = vcombine.low %v2304, %v2320
        %v2361 = vcombine.high %v2304, %v2320
        %v2363 = vunpack.c.l.s4 1934713408
        %v2364 = vunpack.c.0.s8 %v2363
        %v2365 = vlaneseq
        %v2366 = vshrl.u32 %v2365, 7
        %v2367 = vsub.s32 %v2364, %v2366
        %v2368 = vrot.slane %v2360, %v2367
        %v2370 = vunpack.c.l.s4 1934713408
        %v2371 = vunpack.c.0.s8 %v2370
        %v2372 = vlaneseq
        %v2373 = vshrl.u32 %v2372, 7
        %v2374 = vsub.s32 %v2371, %v2373
        %v2375 = vrot.slane %v2361, %v2374
        %v2376 = vcombine.low %v2311, %v2327
        %v2377 = vcombine.high %v2311, %v2327
        %v2379 = vunpack.c.l.s4 1934713408
        %v2380 = vunpack.c.0.s8 %v2379
        %v2381 = vlaneseq
        %v2382 = vshrl.u32 %v2381, 7
        %v2383 = vsub.s32 %v2380, %v2382
        %v2384 = vrot.slane %v2376, %v2383
        %v2386 = vunpack.c.l.s4 1934713408
        %v2387 = vunpack.c.0.s8 %v2386
        %v2388 = vlaneseq
        %v2389 = vshrl.u32 %v2388, 7
        %v2390 = vsub.s32 %v2387, %v2389
        %v2391 = vrot.slane %v2377, %v2390
        %v2392 = vcombine.low %v2336, %v2352
        %v2393 = vcombine.high %v2336, %v2352
        %v2395 = vunpack.c.l.s4 1934713408
        %v2396 = vunpack.c.0.s8 %v2395
        %v2397 = vlaneseq
        %v2398 = vshrl.u32 %v2397, 7
        %v2399 = vsub.s32 %v2396, %v2398
        %v2400 = vrot.slane %v2392, %v2399
        %v2402 = vunpack.c.l.s4 1934713408
        %v2403 = vunpack.c.0.s8 %v2402
        %v2404 = vlaneseq
        %v2405 = vshrl.u32 %v2404, 7
        %v2406 = vsub.s32 %v2403, %v2405
        %v2407 = vrot.slane %v2393, %v2406
        %v2408 = vcombine.low %v2343, %v2359
        %v2409 = vcombine.high %v2343, %v2359
        %v2411 = vunpack.c.l.s4 1934713408
        %v2412 = vunpack.c.0.s8 %v2411
        %v2413 = vlaneseq
        %v2414 = vshrl.u32 %v2413, 7
        %v2415 = vsub.s32 %v2412, %v2414
        %v2416 = vrot.slane %v2408, %v2415
        %v2418 = vunpack.c.l.s4 1934713408
        %v2419 = vunpack.c.0.s8 %v2418
        %v2420 = vlaneseq
        %v2421 = vshrl.u32 %v2420, 7
        %v2422 = vsub.s32 %v2419, %v2421
        %v2423 = vrot.slane %v2409, %v2422
        %v2424 = vcombine.low %v2368, %v2400
        %v2425 = vcombine.high %v2368, %v2400
        %v2426 = vcombine.low %v2375, %v2407
        %v2427 = vcombine.high %v2375, %v2407
        %v2428 = vcombine.low %v2384, %v2416
        %v2429 = vcombine.high %v2384, %v2416
        %v2430 = vcombine.low %v2391, %v2423
        %v2431 = vcombine.high %v2391, %v2423
        %v2432 = vcombine.low %v2209, %v2227
        %v2433 = vcombine.high %v2209, %v2227
        %v2435 = vunpack.c.l.s4 1983009808
        %v2436 = vunpack.c.0.s8 %v2435
        %v2437 = vlaneseq
        %v2438 = vshrl.u32 %v2437, 7
        %v2439 = vsub.s32 %v2436, %v2438
        %v2440 = vrot.slane %v2432, %v2439
        %v2442 = vunpack.c.l.s4 1983009808
        %v2443 = vunpack.c.0.s8 %v2442
        %v2444 = vlaneseq
        %v2445 = vshrl.u32 %v2444, 7
        %v2446 = vsub.s32 %v2443, %v2445
        %v2447 = vrot.slane %v2433, %v2446
        %v2448 = vcombine.low %v2218, %v2236
        %v2449 = vcombine.high %v2218, %v2236
        %v2451 = vunpack.c.l.s4 1983009808
        %v2452 = vunpack.c.0.s8 %v2451
        %v2453 = vlaneseq
        %v2454 = vshrl.u32 %v2453, 7
        %v2455 = vsub.s32 %v2452, %v2454
        %v2456 = vrot.slane %v2448, %v2455
        %v2458 = vunpack.c.l.s4 1983009808
        %v2459 = vunpack.c.0.s8 %v2458
        %v2460 = vlaneseq
        %v2461 = vshrl.u32 %v2460, 7
        %v2462 = vsub.s32 %v2459, %v2461
        %v2463 = vrot.slane %v2449, %v2462
        %v2464 = vcombine.low %v2245, %v2263
        %v2465 = vcombine.high %v2245, %v2263
        %v2467 = vunpack.c.l.s4 1983009808
        %v2468 = vunpack.c.0.s8 %v2467
        %v2469 = vlaneseq
        %v2470 = vshrl.u32 %v2469, 7
        %v2471 = vsub.s32 %v2468, %v2470
        %v2472 = vrot.slane %v2464, %v2471
        %v2474 = vunpack.c.l.s4 1983009808
        %v2475 = vunpack.c.0.s8 %v2474
        %v2476 = vlaneseq
        %v2477 = vshrl.u32 %v2476, 7
        %v2478 = vsub.s32 %v2475, %v2477
        %v2479 = vrot.slane %v2465, %v2478
        %v2480 = vcombine.low %v2254, %v2272
        %v2481 = vcombine.high %v2254, %v2272
        %v2483 = vunpack.c.l.s4 1983009808
        %v2484 = vunpack.c.0.s8 %v2483
        %v2485 = vlaneseq
        %v2486 = vshrl.u32 %v2485, 7
        %v2487 = vsub.s32 %v2484, %v2486
        %v2488 = vrot.slane %v2480, %v2487
        %v2490 = vunpack.c.l.s4 1983009808
        %v2491 = vunpack.c.0.s8 %v2490
        %v2492 = vlaneseq
        %v2493 = vshrl.u32 %v2492, 7
        %v2494 = vsub.s32 %v2491, %v2493
        %v2495 = vrot.slane %v2481, %v2494
        %v2496 = vcombine.low %v2440, %v2456
        %v2497 = vcombine.high %v2440, %v2456
        %v2499 = vunpack.c.l.s4 1934713408
        %v2500 = vunpack.c.0.s8 %v2499
        %v2501 = vlaneseq
        %v2502 = vshrl.u32 %v2501, 7
        %v2503 = vsub.s32 %v2500, %v2502
        %v2504 = vrot.slane %v2496, %v2503
        %v2506 = vunpack.c.l.s4 1934713408
        %v2507 = vunpack.c.0.s8 %v2506
        %v2508 = vlaneseq
        %v2509 = vshrl.u32 %v2508, 7
        %v2510 = vsub.s32 %v2507, %v2509
        %v2511 = vrot.slane %v2497, %v2510
        %v2512 = vcombine.low %v2447, %v2463
        %v2513 = vcombine.high %v2447, %v2463
        %v2515 = vunpack.c.l.s4 1934713408
        %v2516 = vunpack.c.0.s8 %v2515
        %v2517 = vlaneseq
        %v2518 = vshrl.u32 %v2517, 7
        %v2519 = vsub.s32 %v2516, %v2518
        %v2520 = vrot.slane %v2512, %v2519
        %v2522 = vunpack.c.l.s4 1934713408
        %v2523 = vunpack.c.0.s8 %v2522
        %v2524 = vlaneseq
        %v2525 = vshrl.u32 %v2524, 7
        %v2526 = vsub.s32 %v2523, %v2525
        %v2527 = vrot.slane %v2513, %v2526
        %v2528 = vcombine.low %v2472, %v2488
        %v2529 = vcombine.high %v2472, %v2488
        %v2531 = vunpack.c.l.s4 1934713408
        %v2532 = vunpack.c.0.s8 %v2531
        %v2533 = vlaneseq
        %v2534 = vshrl.u32 %v2533, 7
        %v2535 = vsub.s32 %v2532, %v2534
        %v2536 = vrot.slane %v2528, %v2535
        %v2538 = vunpack.c.l.s4 1934713408
        %v2539 = vunpack.c.0.s8 %v2538
        %v2540 = vlaneseq
        %v2541 = vshrl.u32 %v2540, 7
        %v2542 = vsub.s32 %v2539, %v2541
        %v2543 = vrot.slane %v2529, %v2542
        %v2544 = vcombine.low %v2479, %v2495
        %v2545 = vcombine.high %v2479, %v2495
        %v2547 = vunpack.c.l.s4 1934713408
        %v2548 = vunpack.c.0.s8 %v2547
        %v2549 = vlaneseq
        %v2550 = vshrl.u32 %v2549, 7
        %v2551 = vsub.s32 %v2548, %v2550
        %v2552 = vrot.slane %v2544, %v2551
        %v2554 = vunpack.c.l.s4 1934713408
        %v2555 = vunpack.c.0.s8 %v2554
        %v2556 = vlaneseq
        %v2557 = vshrl.u32 %v2556, 7
        %v2558 = vsub.s32 %v2555, %v2557
        %v2559 = vrot.slane %v2545, %v2558
        %v2560 = vcombine.low %v2504, %v2536
        %v2561 = vcombine.high %v2504, %v2536
        %v2562 = vcombine.low %v2511, %v2543
        %v2563 = vcombine.high %v2511, %v2543
        %v2564 = vcombine.low %v2520, %v2552
        %v2565 = vcombine.high %v2520, %v2552
        %v2566 = vcombine.low %v2527, %v2559
        %v2567 = vcombine.high %v2527, %v2559
        %v2568 = vcombine.high %v2281, 0.0
        %v2570 = vunpack.c.l.s4 1983009808
        %v2571 = vunpack.c.0.s8 %v2570
        %v2572 = vlaneseq
        %v2573 = vshrl.u32 %v2572, 7
        %v2574 = vsub.s32 %v2571, %v2573
        %v2575 = vrot.slane %v2281, %v2574
        %v2577 = vunpack.c.l.s4 1983009808
        %v2578 = vunpack.c.0.s8 %v2577
        %v2579 = vlaneseq
        %v2580 = vshrl.u32 %v2579, 7
        %v2581 = vsub.s32 %v2578, %v2580
        %v2582 = vrot.slane %v2568, %v2581
        %v2583 = vcombine.high %v2289, 0.0
        %v2585 = vunpack.c.l.s4 1983009808
        %v2586 = vunpack.c.0.s8 %v2585
        %v2587 = vlaneseq
        %v2588 = vshrl.u32 %v2587, 7
        %v2589 = vsub.s32 %v2586, %v2588
        %v2590 = vrot.slane %v2289, %v2589
        %v2592 = vunpack.c.l.s4 1983009808
        %v2593 = vunpack.c.0.s8 %v2592
        %v2594 = vlaneseq
        %v2595 = vshrl.u32 %v2594, 7
        %v2596 = vsub.s32 %v2593, %v2595
        %v2597 = vrot.slane %v2583, %v2596
        %v2598 = vcombine.low %v2575, %v2590
        %v2599 = vcombine.high %v2575, %v2590
        %v2601 = vunpack.c.l.s4 1934713408
        %v2602 = vunpack.c.0.s8 %v2601
        %v2603 = vlaneseq
        %v2604 = vshrl.u32 %v2603, 7
        %v2605 = vsub.s32 %v2602, %v2604
        %v2606 = vrot.slane %v2598, %v2605
        %v2608 = vunpack.c.l.s4 1934713408
        %v2609 = vunpack.c.0.s8 %v2608
        %v2610 = vlaneseq
        %v2611 = vshrl.u32 %v2610, 7
        %v2612 = vsub.s32 %v2609, %v2611
        %v2613 = vrot.slane %v2599, %v2612
        %v2614 = vcombine.low %v2582, %v2597
        %v2615 = vcombine.high %v2582, %v2597
        %v2617 = vunpack.c.l.s4 1934713408
        %v2618 = vunpack.c.0.s8 %v2617
        %v2619 = vlaneseq
        %v2620 = vshrl.u32 %v2619, 7
        %v2621 = vsub.s32 %v2618, %v2620
        %v2622 = vrot.slane %v2614, %v2621
        %v2624 = vunpack.c.l.s4 1934713408
        %v2625 = vunpack.c.0.s8 %v2624
        %v2626 = vlaneseq
        %v2627 = vshrl.u32 %v2626, 7
        %v2628 = vsub.s32 %v2625, %v2627
        %v2629 = vrot.slane %v2615, %v2628
        %v2630 = vcombine.high %v2606, 0.0
        %v2631 = vcombine.high %v2613, 0.0
        %v2632 = vcombine.high %v2622, 0.0
        %v2633 = vcombine.high %v2629, 0.0
        %v2634 = vcombine.low %v2132, %v2157
        %v2635 = vcombine.high %v2132, %v2157
        %v2637 = vunpack.c.l.s4 1983009808
        %v2638 = vunpack.c.0.s8 %v2637
        %v2639 = vlaneseq
        %v2640 = vshrl.u32 %v2639, 7
        %v2641 = vsub.s32 %v2638, %v2640
        %v2642 = vrot.slane %v2634, %v2641
        %v2644 = vunpack.c.l.s4 1983009808
        %v2645 = vunpack.c.0.s8 %v2644
        %v2646 = vlaneseq
        %v2647 = vshrl.u32 %v2646, 7
        %v2648 = vsub.s32 %v2645, %v2647
        %v2649 = vrot.slane %v2635, %v2648
        %v2650 = vcombine.low %v2148, %v2166
        %v2651 = vcombine.high %v2148, %v2166
        %v2653 = vunpack.c.l.s4 1983009808
        %v2654 = vunpack.c.0.s8 %v2653
        %v2655 = vlaneseq
        %v2656 = vshrl.u32 %v2655, 7
        %v2657 = vsub.s32 %v2654, %v2656
        %v2658 = vrot.slane %v2650, %v2657
        %v2660 = vunpack.c.l.s4 1983009808
        %v2661 = vunpack.c.0.s8 %v2660
        %v2662 = vlaneseq
        %v2663 = vshrl.u32 %v2662, 7
        %v2664 = vsub.s32 %v2661, %v2663
        %v2665 = vrot.slane %v2651, %v2664
        %v2666 = vcombine.low %v2175, %v2193
        %v2667 = vcombine.high %v2175, %v2193
        %v2669 = vunpack.c.l.s4 1983009808
        %v2670 = vunpack.c.0.s8 %v2669
        %v2671 = vlaneseq
        %v2672 = vshrl.u32 %v2671, 7
        %v2673 = vsub.s32 %v2670, %v2672
        %v2674 = vrot.slane %v2666, %v2673
        %v2676 = vunpack.c.l.s4 1983009808
        %v2677 = vunpack.c.0.s8 %v2676
        %v2678 = vlaneseq
        %v2679 = vshrl.u32 %v2678, 7
        %v2680 = vsub.s32 %v2677, %v2679
        %v2681 = vrot.slane %v2667, %v2680
        %v2682 = vcombine.low %v2184, %v2202
        %v2683 = vcombine.high %v2184, %v2202
        %v2685 = vunpack.c.l.s4 1983009808
        %v2686 = vunpack.c.0.s8 %v2685
        %v2687 = vlaneseq
        %v2688 = vshrl.u32 %v2687, 7
        %v2689 = vsub.s32 %v2686, %v2688
        %v2690 = vrot.slane %v2682, %v2689
        %v2692 = vunpack.c.l.s4 1983009808
        %v2693 = vunpack.c.0.s8 %v2692
        %v2694 = vlaneseq
        %v2695 = vshrl.u32 %v2694, 7
        %v2696 = vsub.s32 %v2693, %v2695
        %v2697 = vrot.slane %v2683, %v2696
        %v2698 = vcombine.low %v2642, %v2658
        %v2699 = vcombine.high %v2642, %v2658
        %v2701 = vunpack.c.l.s4 1934713408
        %v2702 = vunpack.c.0.s8 %v2701
        %v2703 = vlaneseq
        %v2704 = vshrl.u32 %v2703, 7
        %v2705 = vsub.s32 %v2702, %v2704
        %v2706 = vrot.slane %v2698, %v2705
        %v2708 = vunpack.c.l.s4 1934713408
        %v2709 = vunpack.c.0.s8 %v2708
        %v2710 = vlaneseq
        %v2711 = vshrl.u32 %v2710, 7
        %v2712 = vsub.s32 %v2709, %v2711
        %v2713 = vrot.slane %v2699, %v2712
        %v2714 = vcombine.low %v2649, %v2665
        %v2715 = vcombine.high %v2649, %v2665
        %v2717 = vunpack.c.l.s4 1934713408
        %v2718 = vunpack.c.0.s8 %v2717
        %v2719 = vlaneseq
        %v2720 = vshrl.u32 %v2719, 7
        %v2721 = vsub.s32 %v2718, %v2720
        %v2722 = vrot.slane %v2714, %v2721
        %v2724 = vunpack.c.l.s4 1934713408
        %v2725 = vunpack.c.0.s8 %v2724
        %v2726 = vlaneseq
        %v2727 = vshrl.u32 %v2726, 7
        %v2728 = vsub.s32 %v2725, %v2727
        %v2729 = vrot.slane %v2715, %v2728
        %v2730 = vcombine.low %v2674, %v2690
        %v2731 = vcombine.high %v2674, %v2690
        %v2733 = vunpack.c.l.s4 1934713408
        %v2734 = vunpack.c.0.s8 %v2733
        %v2735 = vlaneseq
        %v2736 = vshrl.u32 %v2735, 7
        %v2737 = vsub.s32 %v2734, %v2736
        %v2738 = vrot.slane %v2730, %v2737
        %v2740 = vunpack.c.l.s4 1934713408
        %v2741 = vunpack.c.0.s8 %v2740
        %v2742 = vlaneseq
        %v2743 = vshrl.u32 %v2742, 7
        %v2744 = vsub.s32 %v2741, %v2743
        %v2745 = vrot.slane %v2731, %v2744
        %v2746 = vcombine.low %v2681, %v2697
        %v2747 = vcombine.high %v2681, %v2697
        %v2749 = vunpack.c.l.s4 1934713408
        %v2750 = vunpack.c.0.s8 %v2749
        %v2751 = vlaneseq
        %v2752 = vshrl.u32 %v2751, 7
        %v2753 = vsub.s32 %v2750, %v2752
        %v2754 = vrot.slane %v2746, %v2753
        %v2756 = vunpack.c.l.s4 1934713408
        %v2757 = vunpack.c.0.s8 %v2756
        %v2758 = vlaneseq
        %v2759 = vshrl.u32 %v2758, 7
        %v2760 = vsub.s32 %v2757, %v2759
        %v2761 = vrot.slane %v2747, %v2760
        %v2762 = vcombine.low %v2706, %v2738
        %v2763 = vcombine.high %v2706, %v2738
        %v2764 = vcombine.low %v2713, %v2745
        %v2765 = vcombine.high %v2713, %v2745
        %v2766 = vcombine.low %v2722, %v2754
        %v2767 = vcombine.high %v2722, %v2754
        %v2768 = vcombine.low %v2729, %v2761
        %v2769 = vcombine.high %v2729, %v2761
        %v2770 = vcombine.low %v2211, %v2229
        %v2771 = vcombine.high %v2211, %v2229
        %v2773 = vunpack.c.l.s4 1983009808
        %v2774 = vunpack.c.0.s8 %v2773
        %v2775 = vlaneseq
        %v2776 = vshrl.u32 %v2775, 7
        %v2777 = vsub.s32 %v2774, %v2776
        %v2778 = vrot.slane %v2770, %v2777
        %v2780 = vunpack.c.l.s4 1983009808
        %v2781 = vunpack.c.0.s8 %v2780
        %v2782 = vlaneseq
        %v2783 = vshrl.u32 %v2782, 7
        %v2784 = vsub.s32 %v2781, %v2783
        %v2785 = vrot.slane %v2771, %v2784
        %v2786 = vcombine.low %v2220, %v2238
        %v2787 = vcombine.high %v2220, %v2238
        %v2789 = vunpack.c.l.s4 1983009808
        %v2790 = vunpack.c.0.s8 %v2789
        %v2791 = vlaneseq
        %v2792 = vshrl.u32 %v2791, 7
        %v2793 = vsub.s32 %v2790, %v2792
        %v2794 = vrot.slane %v2786, %v2793
        %v2796 = vunpack.c.l.s4 1983009808
        %v2797 = vunpack.c.0.s8 %v2796
        %v2798 = vlaneseq
        %v2799 = vshrl.u32 %v2798, 7
        %v2800 = vsub.s32 %v2797, %v2799
        %v2801 = vrot.slane %v2787, %v2800
        %v2802 = vcombine.low %v2247, %v2265
        %v2803 = vcombine.high %v2247, %v2265
        %v2805 = vunpack.c.l.s4 1983009808
        %v2806 = vunpack.c.0.s8 %v2805
        %v2807 = vlaneseq
        %v2808 = vshrl.u32 %v2807, 7
        %v2809 = vsub.s32 %v2806, %v2808
        %v2810 = vrot.slane %v2802, %v2809
        %v2812 = vunpack.c.l.s4 1983009808
        %v2813 = vunpack.c.0.s8 %v2812
        %v2814 = vlaneseq
        %v2815 = vshrl.u32 %v2814, 7
        %v2816 = vsub.s32 %v2813, %v2815
        %v2817 = vrot.slane %v2803, %v2816
        %v2818 = vcombine.low %v2256, %v2274
        %v2819 = vcombine.high %v2256, %v2274
        %v2821 = vunpack.c.l.s4 1983009808
        %v2822 = vunpack.c.0.s8 %v2821
        %v2823 = vlaneseq
        %v2824 = vshrl.u32 %v2823, 7
        %v2825 = vsub.s32 %v2822, %v2824
        %v2826 = vrot.slane %v2818, %v2825
        %v2828 = vunpack.c.l.s4 1983009808
        %v2829 = vunpack.c.0.s8 %v2828
        %v2830 = vlaneseq
        %v2831 = vshrl.u32 %v2830, 7
        %v2832 = vsub.s32 %v2829, %v2831
        %v2833 = vrot.slane %v2819, %v2832
        %v2834 = vcombine.low %v2778, %v2794
        %v2835 = vcombine.high %v2778, %v2794
        %v2837 = vunpack.c.l.s4 1934713408
        %v2838 = vunpack.c.0.s8 %v2837
        %v2839 = vlaneseq
        %v2840 = vshrl.u32 %v2839, 7
        %v2841 = vsub.s32 %v2838, %v2840
        %v2842 = vrot.slane %v2834, %v2841
        %v2844 = vunpack.c.l.s4 1934713408
        %v2845 = vunpack.c.0.s8 %v2844
        %v2846 = vlaneseq
        %v2847 = vshrl.u32 %v2846, 7
        %v2848 = vsub.s32 %v2845, %v2847
        %v2849 = vrot.slane %v2835, %v2848
        %v2850 = vcombine.low %v2785, %v2801
        %v2851 = vcombine.high %v2785, %v2801
        %v2853 = vunpack.c.l.s4 1934713408
        %v2854 = vunpack.c.0.s8 %v2853
        %v2855 = vlaneseq
        %v2856 = vshrl.u32 %v2855, 7
        %v2857 = vsub.s32 %v2854, %v2856
        %v2858 = vrot.slane %v2850, %v2857
        %v2860 = vunpack.c.l.s4 1934713408
        %v2861 = vunpack.c.0.s8 %v2860
        %v2862 = vlaneseq
        %v2863 = vshrl.u32 %v2862, 7
        %v2864 = vsub.s32 %v2861, %v2863
        %v2865 = vrot.slane %v2851, %v2864
        %v2866 = vcombine.low %v2810, %v2826
        %v2867 = vcombine.high %v2810, %v2826
        %v2869 = vunpack.c.l.s4 1934713408
        %v2870 = vunpack.c.0.s8 %v2869
        %v2871 = vlaneseq
        %v2872 = vshrl.u32 %v2871, 7
        %v2873 = vsub.s32 %v2870, %v2872
        %v2874 = vrot.slane %v2866, %v2873
        %v2876 = vunpack.c.l.s4 1934713408
        %v2877 = vunpack.c.0.s8 %v2876
        %v2878 = vlaneseq
        %v2879 = vshrl.u32 %v2878, 7
        %v2880 = vsub.s32 %v2877, %v2879
        %v2881 = vrot.slane %v2867, %v2880
        %v2882 = vcombine.low %v2817, %v2833
        %v2883 = vcombine.high %v2817, %v2833
        %v2885 = vunpack.c.l.s4 1934713408
        %v2886 = vunpack.c.0.s8 %v2885
        %v2887 = vlaneseq
        %v2888 = vshrl.u32 %v2887, 7
        %v2889 = vsub.s32 %v2886, %v2888
        %v2890 = vrot.slane %v2882, %v2889
        %v2892 = vunpack.c.l.s4 1934713408
        %v2893 = vunpack.c.0.s8 %v2892
        %v2894 = vlaneseq
        %v2895 = vshrl.u32 %v2894, 7
        %v2896 = vsub.s32 %v2893, %v2895
        %v2897 = vrot.slane %v2883, %v2896
        %v2898 = vcombine.low %v2842, %v2874
        %v2899 = vcombine.high %v2842, %v2874
        %v2900 = vcombine.low %v2849, %v2881
        %v2901 = vcombine.high %v2849, %v2881
        %v2902 = vcombine.low %v2858, %v2890
        %v2903 = vcombine.high %v2858, %v2890
        %v2904 = vcombine.low %v2865, %v2897
        %v2905 = vcombine.high %v2865, %v2897
        %v2906 = vcombine.high %v2283, 0.0
        %v2908 = vunpack.c.l.s4 1983009808
        %v2909 = vunpack.c.0.s8 %v2908
        %v2910 = vlaneseq
        %v2911 = vshrl.u32 %v2910, 7
        %v2912 = vsub.s32 %v2909, %v2911
        %v2913 = vrot.slane %v2283, %v2912
        %v2915 = vunpack.c.l.s4 1983009808
        %v2916 = vunpack.c.0.s8 %v2915
        %v2917 = vlaneseq
        %v2918 = vshrl.u32 %v2917, 7
        %v2919 = vsub.s32 %v2916, %v2918
        %v2920 = vrot.slane %v2906, %v2919
        %v2921 = vcombine.high %v2291, 0.0
        %v2923 = vunpack.c.l.s4 1983009808
        %v2924 = vunpack.c.0.s8 %v2923
        %v2925 = vlaneseq
        %v2926 = vshrl.u32 %v2925, 7
        %v2927 = vsub.s32 %v2924, %v2926
        %v2928 = vrot.slane %v2291, %v2927
        %v2930 = vunpack.c.l.s4 1983009808
        %v2931 = vunpack.c.0.s8 %v2930
        %v2932 = vlaneseq
        %v2933 = vshrl.u32 %v2932, 7
        %v2934 = vsub.s32 %v2931, %v2933
        %v2935 = vrot.slane %v2921, %v2934
        %v2936 = vcombine.low %v2913, %v2928
        %v2937 = vcombine.high %v2913, %v2928
        %v2939 = vunpack.c.l.s4 1934713408
        %v2940 = vunpack.c.0.s8 %v2939
        %v2941 = vlaneseq
        %v2942 = vshrl.u32 %v2941, 7
        %v2943 = vsub.s32 %v2940, %v2942
        %v2944 = vrot.slane %v2936, %v2943
        %v2946 = vunpack.c.l.s4 1934713408
        %v2947 = vunpack.c.0.s8 %v2946
        %v2948 = vlaneseq
        %v2949 = vshrl.u32 %v2948, 7
        %v2950 = vsub.s32 %v2947, %v2949
        %v2951 = vrot.slane %v2937, %v2950
        %v2952 = vcombine.low %v2920, %v2935
        %v2953 = vcombine.high %v2920, %v2935
        %v2955 = vunpack.c.l.s4 1934713408
        %v2956 = vunpack.c.0.s8 %v2955
        %v2957 = vlaneseq
        %v2958 = vshrl.u32 %v2957, 7
        %v2959 = vsub.s32 %v2956, %v2958
        %v2960 = vrot.slane %v2952, %v2959
        %v2962 = vunpack.c.l.s4 1934713408
        %v2963 = vunpack.c.0.s8 %v2962
        %v2964 = vlaneseq
        %v2965 = vshrl.u32 %v2964, 7
        %v2966 = vsub.s32 %v2963, %v2965
        %v2967 = vrot.slane %v2953, %v2966
        %v2968 = vcombine.high %v2944, 0.0
        %v2969 = vcombine.high %v2951, 0.0
        %v2970 = vcombine.high %v2960, 0.0
        %v2971 = vcombine.high %v2967, 0.0
        %v2972 = vcombine.low %v2137, %v2159
        %v2974 = vunpack.c.l.s4 1983009808
        %v2975 = vunpack.c.0.s8 %v2974
        %v2976 = vlaneseq
        %v2977 = vshrl.u32 %v2976, 7
        %v2978 = vsub.s32 %v2975, %v2977
        %v2979 = vrot.slane %v2972, %v2978
        %v2980 = vcombine.low %v2150, %v2168
        %v2982 = vunpack.c.l.s4 1983009808
        %v2983 = vunpack.c.0.s8 %v2982
        %v2984 = vlaneseq
        %v2985 = vshrl.u32 %v2984, 7
        %v2986 = vsub.s32 %v2983, %v2985
        %v2987 = vrot.slane %v2980, %v2986
        %v2988 = vcombine.low %v2177, %v2195
        %v2990 = vunpack.c.l.s4 1983009808
        %v2991 = vunpack.c.0.s8 %v2990
        %v2992 = vlaneseq
        %v2993 = vshrl.u32 %v2992, 7
        %v2994 = vsub.s32 %v2991, %v2993
        %v2995 = vrot.slane %v2988, %v2994
        %v2996 = vcombine.low %v2186, %v2204
        %v2998 = vunpack.c.l.s4 1983009808
        %v2999 = vunpack.c.0.s8 %v2998
        %v3000 = vlaneseq
        %v3001 = vshrl.u32 %v3000, 7
        %v3002 = vsub.s32 %v2999, %v3001
        %v3003 = vrot.slane %v2996, %v3002
        %v3004 = vcombine.low %v2979, %v2987
        %v3006 = vunpack.c.l.s4 1934713408
        %v3007 = vunpack.c.0.s8 %v3006
        %v3008 = vlaneseq
        %v3009 = vshrl.u32 %v3008, 7
        %v3010 = vsub.s32 %v3007, %v3009
        %v3011 = vrot.slane %v3004, %v3010
        %v3012 = vcombine.low %v2995, %v3003
        %v3014 = vunpack.c.l.s4 1934713408
        %v3015 = vunpack.c.0.s8 %v3014
        %v3016 = vlaneseq
        %v3017 = vshrl.u32 %v3016, 7
        %v3018 = vsub.s32 %v3015, %v3017
        %v3019 = vrot.slane %v3012, %v3018
        %v3020 = vcombine.low %v3011, %v3019
        %v3021 = vcombine.high %v3011, %v3019
        %v3022 = vcombine.low %v2213, %v2231
        %v3024 = vunpack.c.l.s4 1983009808
        %v3025 = vunpack.c.0.s8 %v3024
        %v3026 = vlaneseq
        %v3027 = vshrl.u32 %v3026, 7
        %v3028 = vsub.s32 %v3025, %v3027
        %v3029 = vrot.slane %v3022, %v3028
        %v3030 = vcombine.low %v2222, %v2240
        %v3032 = vunpack.c.l.s4 1983009808
        %v3033 = vunpack.c.0.s8 %v3032
        %v3034 = vlaneseq
        %v3035 = vshrl.u32 %v3034, 7
        %v3036 = vsub.s32 %v3033, %v3035
        %v3037 = vrot.slane %v3030, %v3036
        %v3038 = vcombine.low %v2249, %v2267
        %v3040 = vunpack.c.l.s4 1983009808
        %v3041 = vunpack.c.0.s8 %v3040
        %v3042 = vlaneseq
        %v3043 = vshrl.u32 %v3042, 7
        %v3044 = vsub.s32 %v3041, %v3043
        %v3045 = vrot.slane %v3038, %v3044
        %v3046 = vcombine.low %v2258, %v2276
        %v3048 = vunpack.c.l.s4 1983009808
        %v3049 = vunpack.c.0.s8 %v3048
        %v3050 = vlaneseq
        %v3051 = vshrl.u32 %v3050, 7
        %v3052 = vsub.s32 %v3049, %v3051
        %v3053 = vrot.slane %v3046, %v3052
        %v3054 = vcombine.low %v3029, %v3037
        %v3056 = vunpack.c.l.s4 1934713408
        %v3057 = vunpack.c.0.s8 %v3056
        %v3058 = vlaneseq
        %v3059 = vshrl.u32 %v3058, 7
        %v3060 = vsub.s32 %v3057, %v3059
        %v3061 = vrot.slane %v3054, %v3060
        %v3062 = vcombine.low %v3045, %v3053
        %v3064 = vunpack.c.l.s4 1934713408
        %v3065 = vunpack.c.0.s8 %v3064
        %v3066 = vlaneseq
        %v3067 = vshrl.u32 %v3066, 7
        %v3068 = vsub.s32 %v3065, %v3067
        %v3069 = vrot.slane %v3062, %v3068
        %v3070 = vcombine.low %v3061, %v3069
        %v3071 = vcombine.high %v3061, %v3069
        %v3074 = vcombine.low %v2285, %v2293
        %v3076 = vunpack.c.l.s4 1934713408
        %v3077 = vunpack.c.0.s8 %v3076
        %v3078 = vlaneseq
        %v3079 = vshrl.u32 %v3078, 7
        %v3080 = vsub.s32 %v3077, %v3079
        %v3081 = vrot.slane %v3074, %v3080
        %v3082 = vcombine.high %v3081, 0.0
        %v3083 = vpack.c.bf16 %v2560, %v2424
        %v3084 = vpack.c.bf16 %v2606, %v2606
        %v3085 = vpack.c.bf16 %v2561, %v2425
        %v3086 = vpack.c.bf16 %v2630, %v2630
        %v3087 = vpack.c.bf16 %v2562, %v2426
        %v3088 = vpack.c.bf16 %v2613, %v2613
        %v3089 = vpack.c.bf16 %v2563, %v2427
        %v3090 = vpack.c.bf16 %v2631, %v2631
        %v3091 = vpack.c.bf16 %v2564, %v2428
        %v3092 = vpack.c.bf16 %v2622, %v2622
        %v3093 = vpack.c.bf16 %v2565, %v2429
        %v3094 = vpack.c.bf16 %v2632, %v2632
        %v3095 = vpack.c.bf16 %v2566, %v2430
        %v3096 = vpack.c.bf16 %v2629, %v2629
        %v3097 = vpack.c.bf16 %v2567, %v2431
        %v3098 = vpack.c.bf16 %v2633, %v2633
        %v3099 = vpack.c.bf16 %v2898, %v2762
        %v3100 = vpack.c.bf16 %v2944, %v2944
        %v3101 = vpack.c.bf16 %v2899, %v2763
        %v3102 = vpack.c.bf16 %v2968, %v2968
        %v3103 = vpack.c.bf16 %v2900, %v2764
        %v3104 = vpack.c.bf16 %v2951, %v2951
        %v3105 = vpack.c.bf16 %v2901, %v2765
        %v3106 = vpack.c.bf16 %v2969, %v2969
        %v3107 = vpack.c.bf16 %v2902, %v2766
        %v3108 = vpack.c.bf16 %v2960, %v2960
        %v3109 = vpack.c.bf16 %v2903, %v2767
        %v3110 = vpack.c.bf16 %v2970, %v2970
        %v3111 = vpack.c.bf16 %v2904, %v2768
        %v3112 = vpack.c.bf16 %v2967, %v2967
        %v3113 = vpack.c.bf16 %v2905, %v2769
        %v3114 = vpack.c.bf16 %v2971, %v2971
        %v3115 = vpack.c.bf16 %v3070, %v3020
        %v3116 = vpack.c.bf16 %v3081, %v3081
        %v3117 = vpack.c.bf16 %v3071, %v3021
        %v3118 = vpack.c.bf16 %v3082, %v3082
        %3135 = vrot.lane.b32.xlu0 %v3085, 4
        %v3136 = vpop.permute.xlu0 %3135
        %3137 = vrot.lane.b32.xlu0 %v3087, 4
        %v3138 = vpop.permute.xlu0 %3137
        %3139 = vrot.lane.b32.xlu0 %v3089, 4
        %v3140 = vpop.permute.xlu0 %3139
        %3141 = vrot.lane.b32.xlu0 %v3091, 4
        %v3142 = vpop.permute.xlu0 %3141
        %3143 = vrot.lane.b32.xlu0 %v3093, 4
        %v3144 = vpop.permute.xlu0 %3143
        %3145 = vrot.lane.b32.xlu0 %v3095, 4
        %v3146 = vpop.permute.xlu0 %3145
        %3147 = vrot.lane.b32.xlu0 %v3097, 4
        %v3148 = vpop.permute.xlu0 %3147
        %3149 = vrot.lane.b32.xlu0 %v3099, 4
        %v3150 = vpop.permute.xlu0 %3149
        %3151 = vrot.lane.b32.xlu0 %v3101, 4
        %v3152 = vpop.permute.xlu0 %3151
        %3153 = vrot.lane.b32.xlu0 %v3103, 4
        %v3154 = vpop.permute.xlu0 %3153
        %3155 = vrot.lane.b32.xlu0 %v3105, 4
        %v3156 = vpop.permute.xlu0 %3155
        %3157 = vrot.lane.b32.xlu0 %v3107, 4
        %v3158 = vpop.permute.xlu0 %3157
        %3159 = vrot.lane.b32.xlu0 %v3109, 4
        %v3160 = vpop.permute.xlu0 %3159
        %3161 = vrot.lane.b32.xlu0 %v3111, 4
        %v3162 = vpop.permute.xlu0 %3161
        %3163 = vrot.lane.b32.xlu0 %v3113, 4
        %v3164 = vpop.permute.xlu0 %3163
        %3165 = vrot.lane.b32.xlu0 %v3115, 4
        %v3166 = vpop.permute.xlu0 %3165
        %3168 = vrot.lane.b32.xlu0 %v3087, 8
        %v3169 = vpop.permute.xlu0 %3168
        %3170 = vrot.lane.b32.xlu0 %v3089, 8
        %v3171 = vpop.permute.xlu0 %3170
        %3172 = vrot.lane.b32.xlu0 %v3091, 8
        %v3173 = vpop.permute.xlu0 %3172
        %3174 = vrot.lane.b32.xlu0 %v3093, 8
        %v3175 = vpop.permute.xlu0 %3174
        %3176 = vrot.lane.b32.xlu0 %v3095, 8
        %v3177 = vpop.permute.xlu0 %3176
        %3178 = vrot.lane.b32.xlu0 %v3097, 8
        %v3179 = vpop.permute.xlu0 %3178
        %3180 = vrot.lane.b32.xlu0 %v3099, 8
        %v3181 = vpop.permute.xlu0 %3180
        %3182 = vrot.lane.b32.xlu0 %v3101, 8
        %v3183 = vpop.permute.xlu0 %3182
        %3184 = vrot.lane.b32.xlu0 %v3103, 8
        %v3185 = vpop.permute.xlu0 %3184
        %3186 = vrot.lane.b32.xlu0 %v3105, 8
        %v3187 = vpop.permute.xlu0 %3186
        %3188 = vrot.lane.b32.xlu0 %v3107, 8
        %v3189 = vpop.permute.xlu0 %3188
        %3190 = vrot.lane.b32.xlu0 %v3109, 8
        %v3191 = vpop.permute.xlu0 %3190
        %3192 = vrot.lane.b32.xlu0 %v3111, 8
        %v3193 = vpop.permute.xlu0 %3192
        %3194 = vrot.lane.b32.xlu0 %v3113, 8
        %v3195 = vpop.permute.xlu0 %3194
        %3196 = vrot.lane.b32.xlu0 %v3115, 8
        %v3197 = vpop.permute.xlu0 %3196
        %3198 = vrot.lane.b32.xlu0 %v3117, 8
        %v3199 = vpop.permute.xlu0 %3198
        %v3202 = vsel %vm2026, %v3083, %v3136
        %v3205 = vsel %vm2026, %v3085, %v3138
        %v3208 = vsel %vm2026, %v3087, %v3140
        %v3211 = vsel %vm2026, %v3089, %v3142
        %v3214 = vsel %vm2026, %v3091, %v3144
        %v3217 = vsel %vm2026, %v3093, %v3146
        %v3220 = vsel %vm2026, %v3095, %v3148
        %v3223 = vsel %vm2026, %v3097, %v3150
        %v3226 = vsel %vm2026, %v3099, %v3152
        %v3229 = vsel %vm2026, %v3101, %v3154
        %v3232 = vsel %vm2026, %v3103, %v3156
        %v3235 = vsel %vm2026, %v3105, %v3158
        %v3238 = vsel %vm2026, %v3107, %v3160
        %v3241 = vsel %vm2026, %v3109, %v3162
        %v3244 = vsel %vm2026, %v3111, %v3164
        %v3247 = vsel %vm2026, %v3113, %v3166
        %v3249 = vsel %vm454, %v3202, %v3169
        %v3251 = vsel %vm454, %v3205, %v3171
        %v3253 = vsel %vm454, %v3208, %v3173
        %v3255 = vsel %vm454, %v3211, %v3175
        %v3257 = vsel %vm454, %v3214, %v3177
        %v3259 = vsel %vm454, %v3217, %v3179
        %v3261 = vsel %vm454, %v3220, %v3181
        %v3263 = vsel %vm454, %v3223, %v3183
        %v3265 = vsel %vm454, %v3226, %v3185
        %v3267 = vsel %vm454, %v3229, %v3187
        %v3269 = vsel %vm454, %v3232, %v3189
        %v3271 = vsel %vm454, %v3235, %v3191
        %v3273 = vsel %vm454, %v3238, %v3193
        %v3275 = vsel %vm454, %v3241, %v3195
        %v3277 = vsel %vm454, %v3244, %v3197
        %v3279 = vsel %vm454, %v3247, %v3199
        %v3280 = vld [vmem:[%s6] sm:$0xf]
        %v3281 = vld [vmem:[%s6 + $0x4] sm:$0x3]
        %3298 = vrot.lane.b32.xlu0 %v3086, 4
        %v3299 = vpop.permute.xlu0 %3298
        %3300 = vrot.lane.b32.xlu0 %v3088, 4
        %v3301 = vpop.permute.xlu0 %3300
        %3302 = vrot.lane.b32.xlu0 %v3090, 4
        %v3303 = vpop.permute.xlu0 %3302
        %3304 = vrot.lane.b32.xlu0 %v3092, 4
        %v3305 = vpop.permute.xlu0 %3304
        %3306 = vrot.lane.b32.xlu0 %v3094, 4
        %v3307 = vpop.permute.xlu0 %3306
        %3308 = vrot.lane.b32.xlu0 %v3096, 4
        %v3309 = vpop.permute.xlu0 %3308
        %3310 = vrot.lane.b32.xlu0 %v3098, 4
        %v3311 = vpop.permute.xlu0 %3310
        %3312 = vrot.lane.b32.xlu0 %v3100, 4
        %v3313 = vpop.permute.xlu0 %3312
        %3314 = vrot.lane.b32.xlu0 %v3102, 4
        %v3315 = vpop.permute.xlu0 %3314
        %3316 = vrot.lane.b32.xlu0 %v3104, 4
        %v3317 = vpop.permute.xlu0 %3316
        %3318 = vrot.lane.b32.xlu0 %v3106, 4
        %v3319 = vpop.permute.xlu0 %3318
        %3320 = vrot.lane.b32.xlu0 %v3108, 4
        %v3321 = vpop.permute.xlu0 %3320
        %3322 = vrot.lane.b32.xlu0 %v3110, 4
        %v3323 = vpop.permute.xlu0 %3322
        %3324 = vrot.lane.b32.xlu0 %v3112, 4
        %v3325 = vpop.permute.xlu0 %3324
        %3326 = vrot.lane.b32.xlu0 %v3114, 4
        %v3327 = vpop.permute.xlu0 %3326
        %3328 = vrot.lane.b32.xlu0 %v3116, 4
        %v3329 = vpop.permute.xlu0 %3328
        %3331 = vrot.lane.b32.xlu0 %v3088, 8
        %v3332 = vpop.permute.xlu0 %3331
        %3333 = vrot.lane.b32.xlu0 %v3090, 8
        %v3334 = vpop.permute.xlu0 %3333
        %3335 = vrot.lane.b32.xlu0 %v3092, 8
        %v3336 = vpop.permute.xlu0 %3335
        %3337 = vrot.lane.b32.xlu0 %v3094, 8
        %v3338 = vpop.permute.xlu0 %3337
        %3339 = vrot.lane.b32.xlu0 %v3096, 8
        %v3340 = vpop.permute.xlu0 %3339
        %3341 = vrot.lane.b32.xlu0 %v3098, 8
        %v3342 = vpop.permute.xlu0 %3341
        %3343 = vrot.lane.b32.xlu0 %v3100, 8
        %v3344 = vpop.permute.xlu0 %3343
        %3345 = vrot.lane.b32.xlu0 %v3102, 8
        %v3346 = vpop.permute.xlu0 %3345
        %3347 = vrot.lane.b32.xlu0 %v3104, 8
        %v3348 = vpop.permute.xlu0 %3347
        %3349 = vrot.lane.b32.xlu0 %v3106, 8
        %v3350 = vpop.permute.xlu0 %3349
        %3351 = vrot.lane.b32.xlu0 %v3108, 8
        %v3352 = vpop.permute.xlu0 %3351
        %3353 = vrot.lane.b32.xlu0 %v3110, 8
        %v3354 = vpop.permute.xlu0 %3353
        %3355 = vrot.lane.b32.xlu0 %v3112, 8
        %v3356 = vpop.permute.xlu0 %3355
        %3357 = vrot.lane.b32.xlu0 %v3114, 8
        %v3358 = vpop.permute.xlu0 %3357
        %3359 = vrot.lane.b32.xlu0 %v3116, 8
        %v3360 = vpop.permute.xlu0 %3359
        %3361 = vrot.lane.b32.xlu0 %v3118, 8
        %v3362 = vpop.permute.xlu0 %3361
        %v3365 = vsel %vm2026, %v3084, %v3299
        %v3368 = vsel %vm2026, %v3086, %v3301
        %v3371 = vsel %vm2026, %v3088, %v3303
        %v3374 = vsel %vm2026, %v3090, %v3305
        %v3377 = vsel %vm2026, %v3092, %v3307
        %v3380 = vsel %vm2026, %v3094, %v3309
        %v3383 = vsel %vm2026, %v3096, %v3311
        %v3386 = vsel %vm2026, %v3098, %v3313
        %v3389 = vsel %vm2026, %v3100, %v3315
        %v3392 = vsel %vm2026, %v3102, %v3317
        %v3395 = vsel %vm2026, %v3104, %v3319
        %v3398 = vsel %vm2026, %v3106, %v3321
        %v3401 = vsel %vm2026, %v3108, %v3323
        %v3404 = vsel %vm2026, %v3110, %v3325
        %v3407 = vsel %vm2026, %v3112, %v3327
        %v3410 = vsel %vm2026, %v3114, %v3329
        %v3412 = vsel %vm454, %v3365, %v3332
        %v3414 = vsel %vm454, %v3368, %v3334
        %v3416 = vsel %vm454, %v3371, %v3336
        %v3418 = vsel %vm454, %v3374, %v3338
        %v3420 = vsel %vm454, %v3377, %v3340
        %v3422 = vsel %vm454, %v3380, %v3342
        %v3424 = vsel %vm454, %v3383, %v3344
        %v3426 = vsel %vm454, %v3386, %v3346
        %v3428 = vsel %vm454, %v3389, %v3348
        %v3430 = vsel %vm454, %v3392, %v3350
        %v3432 = vsel %vm454, %v3395, %v3352
        %v3434 = vsel %vm454, %v3398, %v3354
        %v3436 = vsel %vm454, %v3401, %v3356
        %v3438 = vsel %vm454, %v3404, %v3358
        %v3440 = vsel %vm454, %v3407, %v3360
        %v3442 = vsel %vm454, %v3410, %v3362
        %vm3443 = vsmask.f32 7424
        %v3444 = vshrl.u32 %v3249, 16
        %v3446 = vshll.u32 %v3249, 16
        %v3448 = vrot.slane %v3446, 1
        %v3449 = vor.u32 %v3444, %v3448
        %v3450 = vshll.u32 %v3412, 16
        %v3452 = vrot.slane %v3450, 1
        %v3453 = vsel %vm3443, %v3449, %v3452
        %v3454 = vshrl.u32 %v3251, 16
        %v3456 = vshll.u32 %v3251, 16
        %v3458 = vrot.slane %v3456, 1
        %v3459 = vor.u32 %v3454, %v3458
        %v3460 = vshll.u32 %v3414, 16
        %v3462 = vrot.slane %v3460, 1
        %v3463 = vsel %vm3443, %v3459, %v3462
        %v3464 = vshrl.u32 %v3253, 16
        %v3466 = vshll.u32 %v3253, 16
        %v3468 = vrot.slane %v3466, 1
        %v3469 = vor.u32 %v3464, %v3468
        %v3470 = vshll.u32 %v3416, 16
        %v3472 = vrot.slane %v3470, 1
        %v3473 = vsel %vm3443, %v3469, %v3472
        %v3474 = vshrl.u32 %v3255, 16
        %v3476 = vshll.u32 %v3255, 16
        %v3478 = vrot.slane %v3476, 1
        %v3479 = vor.u32 %v3474, %v3478
        %v3480 = vshll.u32 %v3418, 16
        %v3482 = vrot.slane %v3480, 1
        %v3483 = vsel %vm3443, %v3479, %v3482
        %v3484 = vshrl.u32 %v3257, 16
        %v3486 = vshll.u32 %v3257, 16
        %v3488 = vrot.slane %v3486, 1
        %v3489 = vor.u32 %v3484, %v3488
        %v3490 = vshll.u32 %v3420, 16
        %v3492 = vrot.slane %v3490, 1
        %v3493 = vsel %vm3443, %v3489, %v3492
        %v3494 = vshrl.u32 %v3259, 16
        %v3496 = vshll.u32 %v3259, 16
        %v3498 = vrot.slane %v3496, 1
        %v3499 = vor.u32 %v3494, %v3498
        %v3500 = vshll.u32 %v3422, 16
        %v3502 = vrot.slane %v3500, 1
        %v3503 = vsel %vm3443, %v3499, %v3502
        %v3504 = vshrl.u32 %v3261, 16
        %v3506 = vshll.u32 %v3261, 16
        %v3508 = vrot.slane %v3506, 1
        %v3509 = vor.u32 %v3504, %v3508
        %v3510 = vshll.u32 %v3424, 16
        %v3512 = vrot.slane %v3510, 1
        %v3513 = vsel %vm3443, %v3509, %v3512
        %v3514 = vshrl.u32 %v3263, 16
        %v3516 = vshll.u32 %v3263, 16
        %v3518 = vrot.slane %v3516, 1
        %v3519 = vor.u32 %v3514, %v3518
        %v3520 = vshll.u32 %v3426, 16
        %v3522 = vrot.slane %v3520, 1
        %v3523 = vsel %vm3443, %v3519, %v3522
        %v3524 = vshrl.u32 %v3265, 16
        %v3526 = vshll.u32 %v3265, 16
        %v3528 = vrot.slane %v3526, 1
        %v3529 = vor.u32 %v3524, %v3528
        %v3530 = vshll.u32 %v3428, 16
        %v3532 = vrot.slane %v3530, 1
        %v3533 = vsel %vm3443, %v3529, %v3532
        %v3534 = vshrl.u32 %v3267, 16
        %v3536 = vshll.u32 %v3267, 16
        %v3538 = vrot.slane %v3536, 1
        %v3539 = vor.u32 %v3534, %v3538
        %v3540 = vshll.u32 %v3430, 16
        %v3542 = vrot.slane %v3540, 1
        %v3543 = vsel %vm3443, %v3539, %v3542
        %v3544 = vshrl.u32 %v3269, 16
        %v3546 = vshll.u32 %v3269, 16
        %v3548 = vrot.slane %v3546, 1
        %v3549 = vor.u32 %v3544, %v3548
        %v3550 = vshll.u32 %v3432, 16
        %v3552 = vrot.slane %v3550, 1
        %v3553 = vsel %vm3443, %v3549, %v3552
        %v3554 = vshrl.u32 %v3271, 16
        %v3556 = vshll.u32 %v3271, 16
        %v3558 = vrot.slane %v3556, 1
        %v3559 = vor.u32 %v3554, %v3558
        %v3560 = vshll.u32 %v3434, 16
        %v3562 = vrot.slane %v3560, 1
        %v3563 = vsel %vm3443, %v3559, %v3562
        %v3564 = vshrl.u32 %v3273, 16
        %v3566 = vshll.u32 %v3273, 16
        %v3568 = vrot.slane %v3566, 1
        %v3569 = vor.u32 %v3564, %v3568
        %v3570 = vshll.u32 %v3436, 16
        %v3572 = vrot.slane %v3570, 1
        %v3573 = vsel %vm3443, %v3569, %v3572
        %v3574 = vshrl.u32 %v3275, 16
        %v3576 = vshll.u32 %v3275, 16
        %v3578 = vrot.slane %v3576, 1
        %v3579 = vor.u32 %v3574, %v3578
        %v3580 = vshll.u32 %v3438, 16
        %v3582 = vrot.slane %v3580, 1
        %v3583 = vsel %vm3443, %v3579, %v3582
        %v3584 = vshrl.u32 %v3277, 16
        %v3586 = vshll.u32 %v3277, 16
        %v3588 = vrot.slane %v3586, 1
        %v3589 = vor.u32 %v3584, %v3588
        %v3590 = vshll.u32 %v3440, 16
        %v3592 = vrot.slane %v3590, 1
        %v3593 = vsel %vm3443, %v3589, %v3592
        %v3594 = vshrl.u32 %v3279, 16
        %v3596 = vshll.u32 %v3279, 16
        %v3598 = vrot.slane %v3596, 1
        %v3599 = vor.u32 %v3594, %v3598
        %v3600 = vshll.u32 %v3442, 16
        %v3602 = vrot.slane %v3600, 1
        %v3603 = vsel %vm3443, %v3599, %v3602
        %s3604 = scalar_lea.vmem %s6, 8
        %v3605 = vld [vmem:[%s3604] sm:$0xf]
        %v3606 = vld [vmem:[%s3604 + $0x4] sm:$0x3]
        %v3609 = vunpack.c.l.b16 %v3605
        %v3610 = vunpack.c.l.b16 %v3606
        %v3611 = vpack.c.b16 %v3610, %v3609
        %v3613 = vsel %vm2032, %v3453, 0
        %v3616 = vsel %vm2032, %v3463, 0
        %v3619 = vsel %vm2032, %v3473, 0
        %v3622 = vsel %vm2032, %v3483, 0
        %v3625 = vsel %vm2032, %v3493, 0
        %v3628 = vsel %vm2032, %v3503, 0
        %v3631 = vsel %vm2032, %v3513, 0
        %v3634 = vsel %vm2032, %v3523, 0
        %v3637 = vsel %vm2032, %v3533, 0
        %v3640 = vsel %vm2032, %v3543, 0
        %v3643 = vsel %vm2032, %v3553, 0
        %v3646 = vsel %vm2032, %v3563, 0
        %v3649 = vsel %vm2032, %v3573, 0
        %v3652 = vsel %vm2032, %v3583, 0
        %v3655 = vsel %vm2032, %v3593, 0
        %v3658 = vsel %vm2032, %v3603, 0
        %vm3660 = vcmask 1045504
        %v3662 = vsel %vm3660, %v3611, 0
        %3664 = vmatprep.subr.bf16.mxu0 0
        %3665 = vmatpush1.bf16.msra.mxu0 %v3662
        %3666 = vmatprep.subr.bf16.mxu0 0
        %3667 = vmatpush1.bf16.msra.mxu0 0
        %3668 = vmatprep.subr.bf16.mxu0 0
        %3669 = vmatpush1.bf16.msra.mxu0 0
        %3670 = vmatprep.subr.bf16.mxu0 0
        %3671 = vmatpush1.bf16.msra.mxu0 0
        %3672 = vmatprep.subr.bf16.mxu0 0
        %3673 = vmatpush1.bf16.msra.mxu0 0
        %3674 = vmatprep.subr.bf16.mxu0 0
        %3675 = vmatpush1.bf16.msra.mxu0 0
        %3676 = vmatprep.subr.bf16.mxu0 0
        %3677 = vmatpush1.bf16.msra.mxu0 0
        %3678 = vmatprep.subr.bf16.mxu0 0
        %3679 = vmatpush1.bf16.msra.mxu0 0
        %3680 = vmatprep.subr.bf16.mxu0 0
        %3681 = vmatpush1.bf16.msra.mxu0 0
        %3682 = vmatprep.subr.bf16.mxu0 0
        %3683 = vmatpush1.bf16.msra.mxu0 0
        %3684 = vmatprep.subr.bf16.mxu0 0
        %3685 = vmatpush1.bf16.msra.mxu0 0
        %3686 = vmatprep.subr.bf16.mxu0 0
        %3687 = vmatpush1.bf16.msra.mxu0 0
        %3688 = vmatprep.subr.bf16.mxu0 0
        %3689 = vmatpush1.bf16.msra.mxu0 0
        %3690 = vmatprep.subr.bf16.mxu0 0
        %3691 = vmatpush1.bf16.msra.mxu0 0
        %3692 = vmatprep.subr.bf16.mxu0 0
        %3693 = vmatpush1.bf16.msra.mxu0 0
        %3694 = vmatprep.subr.bf16.mxu0 0
        %3695 = vmatpush1.bf16.msra.mxu0 0
        %3696 = vmatprep.mubr.bf16.mxu0 0
        %3697 = vmatmul.mubr.bf16.gmra.mrb[0].mxu0 %v3613
        %v3698 = vpop.f32.mrb[0].mxu0
        %v3699 = vadd.f32 0.0, %v3698
        %v3700 = vpop.f32.mrb[0].mxu0
        %v3701 = vpop.f32.mrb[0].mxu0
        %v3702 = vadd.f32 0.0, %v3701
        %v3703 = vpop.f32.mrb[0].mxu0
        %3704 = vmatprep.mubr.bf16.mxu0 0
        %3705 = vmatmul.mubr.bf16.gmra.mrb[0].mxu0 %v3616
        %v3706 = vpop.f32.mrb[0].mxu0
        %v3707 = vadd.f32 0.0, %v3706
        %v3708 = vpop.f32.mrb[0].mxu0
        %v3709 = vpop.f32.mrb[0].mxu0
        %v3710 = vadd.f32 0.0, %v3709
        %v3711 = vpop.f32.mrb[0].mxu0
        %3712 = vmatprep.mubr.bf16.mxu0 0
        %3713 = vmatmul.mubr.bf16.gmra.mrb[0].mxu0 %v3619
        %v3714 = vpop.f32.mrb[0].mxu0
        %v3715 = vadd.f32 0.0, %v3714
        %v3716 = vpop.f32.mrb[0].mxu0
        %v3717 = vpop.f32.mrb[0].mxu0
        %v3718 = vadd.f32 0.0, %v3717
        %v3719 = vpop.f32.mrb[0].mxu0
        %3720 = vmatprep.mubr.bf16.mxu0 0
        %3721 = vmatmul.mubr.bf16.gmra.mrb[0].mxu0 %v3622
        %v3722 = vpop.f32.mrb[0].mxu0
        %v3723 = vadd.f32 0.0, %v3722
        %v3724 = vpop.f32.mrb[0].mxu0
        %v3725 = vpop.f32.mrb[0].mxu0
        %v3726 = vadd.f32 0.0, %v3725
        %v3727 = vpop.f32.mrb[0].mxu0
        %3728 = vmatprep.mubr.bf16.mxu0 0
        %3729 = vmatmul.mubr.bf16.gmra.mrb[0].mxu0 %v3625
        %v3730 = vpop.f32.mrb[0].mxu0
        %v3731 = vadd.f32 0.0, %v3730
        %v3732 = vpop.f32.mrb[0].mxu0
        %v3733 = vpop.f32.mrb[0].mxu0
        %v3734 = vadd.f32 0.0, %v3733
        %v3735 = vpop.f32.mrb[0].mxu0
        %3736 = vmatprep.mubr.bf16.mxu0 0
        %3737 = vmatmul.mubr.bf16.gmra.mrb[0].mxu0 %v3628
        %v3738 = vpop.f32.mrb[0].mxu0
        %v3739 = vadd.f32 0.0, %v3738
        %v3740 = vpop.f32.mrb[0].mxu0
        %v3741 = vpop.f32.mrb[0].mxu0
        %v3742 = vadd.f32 0.0, %v3741
        %v3743 = vpop.f32.mrb[0].mxu0
        %3744 = vmatprep.mubr.bf16.mxu0 0
        %3745 = vmatmul.mubr.bf16.gmra.mrb[0].mxu0 %v3631
        %v3746 = vpop.f32.mrb[0].mxu0
        %v3747 = vadd.f32 0.0, %v3746
        %v3748 = vpop.f32.mrb[0].mxu0
        %v3749 = vpop.f32.mrb[0].mxu0
        %v3750 = vadd.f32 0.0, %v3749
        %v3751 = vpop.f32.mrb[0].mxu0
        %3752 = vmatprep.mubr.bf16.mxu0 0
        %3753 = vmatmul.mubr.bf16.gmra.mrb[0].mxu0 %v3634
        %v3754 = vpop.f32.mrb[0].mxu0
        %v3755 = vadd.f32 0.0, %v3754
        %v3756 = vpop.f32.mrb[0].mxu0
        %v3757 = vpop.f32.mrb[0].mxu0
        %v3758 = vadd.f32 0.0, %v3757
        %v3759 = vpop.f32.mrb[0].mxu0
        %3760 = vmatprep.mubr.bf16.mxu0 0
        %3761 = vmatmul.mubr.bf16.gmra.mrb[0].mxu0 %v3637
        %v3762 = vpop.f32.mrb[0].mxu0
        %v3763 = vadd.f32 0.0, %v3762
        %v3764 = vpop.f32.mrb[0].mxu0
        %v3765 = vpop.f32.mrb[0].mxu0
        %v3766 = vadd.f32 0.0, %v3765
        %v3767 = vpop.f32.mrb[0].mxu0
        %3768 = vmatprep.mubr.bf16.mxu0 0
        %3769 = vmatmul.mubr.bf16.gmra.mrb[0].mxu0 %v3640
        %v3770 = vpop.f32.mrb[0].mxu0
        %v3771 = vadd.f32 0.0, %v3770
        %v3772 = vpop.f32.mrb[0].mxu0
        %v3773 = vpop.f32.mrb[0].mxu0
        %v3774 = vadd.f32 0.0, %v3773
        %v3775 = vpop.f32.mrb[0].mxu0
        %3776 = vmatprep.mubr.bf16.mxu0 0
        %3777 = vmatmul.mubr.bf16.gmra.mrb[0].mxu0 %v3643
        %v3778 = vpop.f32.mrb[0].mxu0
        %v3779 = vadd.f32 0.0, %v3778
        %v3780 = vpop.f32.mrb[0].mxu0
        %v3781 = vpop.f32.mrb[0].mxu0
        %v3782 = vadd.f32 0.0, %v3781
        %v3783 = vpop.f32.mrb[0].mxu0
        %3784 = vmatprep.mubr.bf16.mxu0 0
        %3785 = vmatmul.mubr.bf16.gmra.mrb[0].mxu0 %v3646
        %v3786 = vpop.f32.mrb[0].mxu0
        %v3787 = vadd.f32 0.0, %v3786
        %v3788 = vpop.f32.mrb[0].mxu0
        %v3789 = vpop.f32.mrb[0].mxu0
        %v3790 = vadd.f32 0.0, %v3789
        %v3791 = vpop.f32.mrb[0].mxu0
        %3792 = vmatprep.mubr.bf16.mxu0 0
        %3793 = vmatmul.mubr.bf16.gmra.mrb[0].mxu0 %v3649
        %v3794 = vpop.f32.mrb[0].mxu0
        %v3795 = vadd.f32 0.0, %v3794
        %v3796 = vpop.f32.mrb[0].mxu0
        %v3797 = vpop.f32.mrb[0].mxu0
        %v3798 = vadd.f32 0.0, %v3797
        %v3799 = vpop.f32.mrb[0].mxu0
        %3800 = vmatprep.mubr.bf16.mxu0 0
        %3801 = vmatmul.mubr.bf16.gmra.mrb[0].mxu0 %v3652
        %v3802 = vpop.f32.mrb[0].mxu0
        %v3803 = vadd.f32 0.0, %v3802
        %v3804 = vpop.f32.mrb[0].mxu0
        %v3805 = vpop.f32.mrb[0].mxu0
        %v3806 = vadd.f32 0.0, %v3805
        %v3807 = vpop.f32.mrb[0].mxu0
        %3808 = vmatprep.mubr.bf16.mxu0 0
        %3809 = vmatmul.mubr.bf16.gmra.mrb[0].mxu0 %v3655
        %v3810 = vpop.f32.mrb[0].mxu0
        %v3811 = vadd.f32 0.0, %v3810
        %v3812 = vpop.f32.mrb[0].mxu0
        %v3813 = vpop.f32.mrb[0].mxu0
        %v3814 = vadd.f32 0.0, %v3813
        %v3815 = vpop.f32.mrb[0].mxu0
        %3816 = vmatprep.mubr.bf16.mxu0 0
        %3817 = vmatmul.mubr.bf16.gmra.mrb[0].mxu0 %v3658
        %v3818 = vpop.f32.mrb[0].mxu0
        %v3819 = vadd.f32 0.0, %v3818
        %v3820 = vpop.f32.mrb[0].mxu0
        %v3821 = vpop.f32.mrb[0].mxu0
        %v3822 = vadd.f32 0.0, %v3821
        %v3823 = vpop.f32.mrb[0].mxu0
        %3824 = vdwg.mxu0
        %v3827 = vunpack.c.l.b16 %v3280
        %v3828 = vunpack.c.l.b16 %v3281
        %v3829 = vpack.c.b16 %v3828, %v3827
        %v3830 = vsel %vm2032, %v3249, 0
        %v3832 = vsel %vm2032, %v3251, 0
        %v3834 = vsel %vm2032, %v3253, 0
        %v3836 = vsel %vm2032, %v3255, 0
        %v3838 = vsel %vm2032, %v3257, 0
        %v3840 = vsel %vm2032, %v3259, 0
        %v3842 = vsel %vm2032, %v3261, 0
        %v3844 = vsel %vm2032, %v3263, 0
        %v3846 = vsel %vm2032, %v3265, 0
        %v3848 = vsel %vm2032, %v3267, 0
        %v3850 = vsel %vm2032, %v3269, 0
        %v3852 = vsel %vm2032, %v3271, 0
        %v3854 = vsel %vm2032, %v3273, 0
        %v3856 = vsel %vm2032, %v3275, 0
        %v3858 = vsel %vm2032, %v3277, 0
        %v3860 = vsel %vm2032, %v3279, 0
        %v3863 = vsel %vm3660, %v3829, 0
        %3865 = vmatprep.subr.bf16.mxu0 0
        %3866 = vmatpush1.bf16.msra.mxu0 %v3863
        %3867 = vmatprep.subr.bf16.mxu0 0
        %3868 = vmatpush1.bf16.msra.mxu0 0
        %3869 = vmatprep.subr.bf16.mxu0 0
        %3870 = vmatpush1.bf16.msra.mxu0 0
        %3871 = vmatprep.subr.bf16.mxu0 0
        %3872 = vmatpush1.bf16.msra.mxu0 0
        %3873 = vmatprep.subr.bf16.mxu0 0
        %3874 = vmatpush1.bf16.msra.mxu0 0
        %3875 = vmatprep.subr.bf16.mxu0 0
        %3876 = vmatpush1.bf16.msra.mxu0 0
        %3877 = vmatprep.subr.bf16.mxu0 0
        %3878 = vmatpush1.bf16.msra.mxu0 0
        %3879 = vmatprep.subr.bf16.mxu0 0
        %3880 = vmatpush1.bf16.msra.mxu0 0
        %3881 = vmatprep.subr.bf16.mxu0 0
        %3882 = vmatpush1.bf16.msra.mxu0 0
        %3883 = vmatprep.subr.bf16.mxu0 0
        %3884 = vmatpush1.bf16.msra.mxu0 0
        %3885 = vmatprep.subr.bf16.mxu0 0
        %3886 = vmatpush1.bf16.msra.mxu0 0
        %3887 = vmatprep.subr.bf16.mxu0 0
        %3888 = vmatpush1.bf16.msra.mxu0 0
        %3889 = vmatprep.subr.bf16.mxu0 0
        %3890 = vmatpush1.bf16.msra.mxu0 0
        %3891 = vmatprep.subr.bf16.mxu0 0
        %3892 = vmatpush1.bf16.msra.mxu0 0
        %3893 = vmatprep.subr.bf16.mxu0 0
        %3894 = vmatpush1.bf16.msra.mxu0 0
        %3895 = vmatprep.subr.bf16.mxu0 0
        %3896 = vmatpush1.bf16.msra.mxu0 0
        %3897 = vmatprep.mubr.bf16.mxu0 0
        %3898 = vmatmul.mubr.bf16.gmra.mrb[0].mxu0 %v3830
        %v3899 = vpop.f32.mrb[0].mxu0
        %v3900 = vadd.f32 %v3699, %v3899
        %v3901 = vpop.f32.mrb[0].mxu0
        %v3902 = vpop.f32.mrb[0].mxu0
        %v3903 = vadd.f32 %v3702, %v3902
        %v3904 = vpop.f32.mrb[0].mxu0
        %3905 = vmatprep.mubr.bf16.mxu0 0
        %3906 = vmatmul.mubr.bf16.gmra.mrb[0].mxu0 %v3832
        %v3907 = vpop.f32.mrb[0].mxu0
        %v3908 = vadd.f32 %v3707, %v3907
        %v3909 = vpop.f32.mrb[0].mxu0
        %v3910 = vpop.f32.mrb[0].mxu0
        %v3911 = vadd.f32 %v3710, %v3910
        %v3912 = vpop.f32.mrb[0].mxu0
        %3913 = vmatprep.mubr.bf16.mxu0 0
        %3914 = vmatmul.mubr.bf16.gmra.mrb[0].mxu0 %v3834
        %v3915 = vpop.f32.mrb[0].mxu0
        %v3916 = vadd.f32 %v3715, %v3915
        %v3917 = vpop.f32.mrb[0].mxu0
        %v3918 = vpop.f32.mrb[0].mxu0
        %v3919 = vadd.f32 %v3718, %v3918
        %v3920 = vpop.f32.mrb[0].mxu0
        %3921 = vmatprep.mubr.bf16.mxu0 0
        %3922 = vmatmul.mubr.bf16.gmra.mrb[0].mxu0 %v3836
        %v3923 = vpop.f32.mrb[0].mxu0
        %v3924 = vadd.f32 %v3723, %v3923
        %v3925 = vpop.f32.mrb[0].mxu0
        %v3926 = vpop.f32.mrb[0].mxu0
        %v3927 = vadd.f32 %v3726, %v3926
        %v3928 = vpop.f32.mrb[0].mxu0
        %3929 = vmatprep.mubr.bf16.mxu0 0
        %3930 = vmatmul.mubr.bf16.gmra.mrb[0].mxu0 %v3838
        %v3931 = vpop.f32.mrb[0].mxu0
        %v3932 = vadd.f32 %v3731, %v3931
        %v3933 = vpop.f32.mrb[0].mxu0
        %v3934 = vpop.f32.mrb[0].mxu0
        %v3935 = vadd.f32 %v3734, %v3934
        %v3936 = vpop.f32.mrb[0].mxu0
        %3937 = vmatprep.mubr.bf16.mxu0 0
        %3938 = vmatmul.mubr.bf16.gmra.mrb[0].mxu0 %v3840
        %v3939 = vpop.f32.mrb[0].mxu0
        %v3940 = vadd.f32 %v3739, %v3939
        %v3941 = vpop.f32.mrb[0].mxu0
        %v3942 = vpop.f32.mrb[0].mxu0
        %v3943 = vadd.f32 %v3742, %v3942
        %v3944 = vpop.f32.mrb[0].mxu0
        %3945 = vmatprep.mubr.bf16.mxu0 0
        %3946 = vmatmul.mubr.bf16.gmra.mrb[0].mxu0 %v3842
        %v3947 = vpop.f32.mrb[0].mxu0
        %v3948 = vadd.f32 %v3747, %v3947
        %v3949 = vpop.f32.mrb[0].mxu0
        %v3950 = vpop.f32.mrb[0].mxu0
        %v3951 = vadd.f32 %v3750, %v3950
        %v3952 = vpop.f32.mrb[0].mxu0
        %3953 = vmatprep.mubr.bf16.mxu0 0
        %3954 = vmatmul.mubr.bf16.gmra.mrb[0].mxu0 %v3844
        %v3955 = vpop.f32.mrb[0].mxu0
        %v3956 = vadd.f32 %v3755, %v3955
        %v3957 = vpop.f32.mrb[0].mxu0
        %v3958 = vpop.f32.mrb[0].mxu0
        %v3959 = vadd.f32 %v3758, %v3958
        %v3960 = vpop.f32.mrb[0].mxu0
        %3961 = vmatprep.mubr.bf16.mxu0 0
        %3962 = vmatmul.mubr.bf16.gmra.mrb[0].mxu0 %v3846
        %v3963 = vpop.f32.mrb[0].mxu0
        %v3964 = vadd.f32 %v3763, %v3963
        %v3965 = vpop.f32.mrb[0].mxu0
        %v3966 = vpop.f32.mrb[0].mxu0
        %v3967 = vadd.f32 %v3766, %v3966
        %v3968 = vpop.f32.mrb[0].mxu0
        %3969 = vmatprep.mubr.bf16.mxu0 0
        %3970 = vmatmul.mubr.bf16.gmra.mrb[0].mxu0 %v3848
        %v3971 = vpop.f32.mrb[0].mxu0
        %v3972 = vadd.f32 %v3771, %v3971
        %v3973 = vpop.f32.mrb[0].mxu0
        %v3974 = vpop.f32.mrb[0].mxu0
        %v3975 = vadd.f32 %v3774, %v3974
        %v3976 = vpop.f32.mrb[0].mxu0
        %3977 = vmatprep.mubr.bf16.mxu0 0
        %3978 = vmatmul.mubr.bf16.gmra.mrb[0].mxu0 %v3850
        %v3979 = vpop.f32.mrb[0].mxu0
        %v3980 = vadd.f32 %v3779, %v3979
        %v3981 = vpop.f32.mrb[0].mxu0
        %v3982 = vpop.f32.mrb[0].mxu0
        %v3983 = vadd.f32 %v3782, %v3982
        %v3984 = vpop.f32.mrb[0].mxu0
        %3985 = vmatprep.mubr.bf16.mxu0 0
        %3986 = vmatmul.mubr.bf16.gmra.mrb[0].mxu0 %v3852
        %v3987 = vpop.f32.mrb[0].mxu0
        %v3988 = vadd.f32 %v3787, %v3987
        %v3989 = vpop.f32.mrb[0].mxu0
        %v3990 = vpop.f32.mrb[0].mxu0
        %v3991 = vadd.f32 %v3790, %v3990
        %v3992 = vpop.f32.mrb[0].mxu0
        %3993 = vmatprep.mubr.bf16.mxu0 0
        %3994 = vmatmul.mubr.bf16.gmra.mrb[0].mxu0 %v3854
        %v3995 = vpop.f32.mrb[0].mxu0
        %v3996 = vadd.f32 %v3795, %v3995
        %v3997 = vpop.f32.mrb[0].mxu0
        %v3998 = vpop.f32.mrb[0].mxu0
        %v3999 = vadd.f32 %v3798, %v3998
        %v4000 = vpop.f32.mrb[0].mxu0
        %4001 = vmatprep.mubr.bf16.mxu0 0
        %4002 = vmatmul.mubr.bf16.gmra.mrb[0].mxu0 %v3856
        %v4003 = vpop.f32.mrb[0].mxu0
        %v4004 = vadd.f32 %v3803, %v4003
        %v4005 = vpop.f32.mrb[0].mxu0
        %v4006 = vpop.f32.mrb[0].mxu0
        %v4007 = vadd.f32 %v3806, %v4006
        %v4008 = vpop.f32.mrb[0].mxu0
        %4009 = vmatprep.mubr.bf16.mxu0 0
        %4010 = vmatmul.mubr.bf16.gmra.mrb[0].mxu0 %v3858
        %v4011 = vpop.f32.mrb[0].mxu0
        %v4012 = vadd.f32 %v3811, %v4011
        %v4013 = vpop.f32.mrb[0].mxu0
        %v4014 = vpop.f32.mrb[0].mxu0
        %v4015 = vadd.f32 %v3814, %v4014
        %v4016 = vpop.f32.mrb[0].mxu0
        %4017 = vmatprep.mubr.bf16.mxu0 0
        %4018 = vmatmul.mubr.bf16.gmra.mrb[0].mxu0 %v3860
        %v4019 = vpop.f32.mrb[0].mxu0
        %v4020 = vadd.f32 %v3819, %v4019
        %v4021 = vpop.f32.mrb[0].mxu0
        %v4022 = vpop.f32.mrb[0].mxu0
        %v4023 = vadd.f32 %v3822, %v4022
        %v4024 = vpop.f32.mrb[0].mxu0
        %4025 = vdwg.mxu0
        %vm4058 = vcmask 1046528
        %v4059 = vrot.slane %v3249, 1
        %v4060 = vrot.slane %v3412, 1
        %v4061 = vsel %vm4058, %v4059, %v4060
        %v4062 = vrot.slane %v3251, 1
        %v4063 = vrot.slane %v3414, 1
        %v4064 = vsel %vm4058, %v4062, %v4063
        %v4065 = vrot.slane %v3253, 1
        %v4066 = vrot.slane %v3416, 1
        %v4067 = vsel %vm4058, %v4065, %v4066
        %v4068 = vrot.slane %v3255, 1
        %v4069 = vrot.slane %v3418, 1
        %v4070 = vsel %vm4058, %v4068, %v4069
        %v4071 = vrot.slane %v3257, 1
        %v4072 = vrot.slane %v3420, 1
        %v4073 = vsel %vm4058, %v4071, %v4072
        %v4074 = vrot.slane %v3259, 1
        %v4075 = vrot.slane %v3422, 1
        %v4076 = vsel %vm4058, %v4074, %v4075
        %v4077 = vrot.slane %v3261, 1
        %v4078 = vrot.slane %v3424, 1
        %v4079 = vsel %vm4058, %v4077, %v4078
        %v4080 = vrot.slane %v3263, 1
        %v4081 = vrot.slane %v3426, 1
        %v4082 = vsel %vm4058, %v4080, %v4081
        %v4083 = vrot.slane %v3265, 1
        %v4084 = vrot.slane %v3428, 1
        %v4085 = vsel %vm4058, %v4083, %v4084
        %v4086 = vrot.slane %v3267, 1
        %v4087 = vrot.slane %v3430, 1
        %v4088 = vsel %vm4058, %v4086, %v4087
        %v4089 = vrot.slane %v3269, 1
        %v4090 = vrot.slane %v3432, 1
        %v4091 = vsel %vm4058, %v4089, %v4090
        %v4092 = vrot.slane %v3271, 1
        %v4093 = vrot.slane %v3434, 1
        %v4094 = vsel %vm4058, %v4092, %v4093
        %v4095 = vrot.slane %v3273, 1
        %v4096 = vrot.slane %v3436, 1
        %v4097 = vsel %vm4058, %v4095, %v4096
        %v4098 = vrot.slane %v3275, 1
        %v4099 = vrot.slane %v3438, 1
        %v4100 = vsel %vm4058, %v4098, %v4099
        %v4101 = vrot.slane %v3277, 1
        %v4102 = vrot.slane %v3440, 1
        %v4103 = vsel %vm4058, %v4101, %v4102
        %v4104 = vrot.slane %v3279, 1
        %v4105 = vrot.slane %v3442, 1
        %v4106 = vsel %vm4058, %v4104, %v4105
        %s4107 = scalar_lea.vmem %s6, 16
        %v4108 = vld [vmem:[%s4107] sm:$0xf]
        %v4109 = vld [vmem:[%s4107 + $0x4] sm:$0x3]
        %v4112 = vunpack.c.l.b16 %v4108
        %v4113 = vunpack.c.l.b16 %v4109
        %v4114 = vpack.c.b16 %v4113, %v4112
        %v4116 = vsel %vm2032, %v4061, 0
        %v4119 = vsel %vm2032, %v4064, 0
        %v4122 = vsel %vm2032, %v4067, 0
        %v4125 = vsel %vm2032, %v4070, 0
        %v4128 = vsel %vm2032, %v4073, 0
        %v4131 = vsel %vm2032, %v4076, 0
        %v4134 = vsel %vm2032, %v4079, 0
        %v4137 = vsel %vm2032, %v4082, 0
        %v4140 = vsel %vm2032, %v4085, 0
        %v4143 = vsel %vm2032, %v4088, 0
        %v4146 = vsel %vm2032, %v4091, 0
        %v4149 = vsel %vm2032, %v4094, 0
        %v4152 = vsel %vm2032, %v4097, 0
        %v4155 = vsel %vm2032, %v4100, 0
        %v4158 = vsel %vm2032, %v4103, 0
        %v4161 = vsel %vm2032, %v4106, 0
        %v4164 = vsel %vm3660, %v4114, 0
        %4166 = vmatprep.subr.bf16.mxu0 0
        %4167 = vmatpush1.bf16.msra.mxu0 %v4164
        %4168 = vmatprep.subr.bf16.mxu0 0
        %4169 = vmatpush1.bf16.msra.mxu0 0
        %4170 = vmatprep.subr.bf16.mxu0 0
        %4171 = vmatpush1.bf16.msra.mxu0 0
        %4172 = vmatprep.subr.bf16.mxu0 0
        %4173 = vmatpush1.bf16.msra.mxu0 0
        %4174 = vmatprep.subr.bf16.mxu0 0
        %4175 = vmatpush1.bf16.msra.mxu0 0
        %4176 = vmatprep.subr.bf16.mxu0 0
        %4177 = vmatpush1.bf16.msra.mxu0 0
        %4178 = vmatprep.subr.bf16.mxu0 0
        %4179 = vmatpush1.bf16.msra.mxu0 0
        %4180 = vmatprep.subr.bf16.mxu0 0
        %4181 = vmatpush1.bf16.msra.mxu0 0
        %4182 = vmatprep.subr.bf16.mxu0 0
        %4183 = vmatpush1.bf16.msra.mxu0 0
        %4184 = vmatprep.subr.bf16.mxu0 0
        %4185 = vmatpush1.bf16.msra.mxu0 0
        %4186 = vmatprep.subr.bf16.mxu0 0
        %4187 = vmatpush1.bf16.msra.mxu0 0
        %4188 = vmatprep.subr.bf16.mxu0 0
        %4189 = vmatpush1.bf16.msra.mxu0 0
        %4190 = vmatprep.subr.bf16.mxu0 0
        %4191 = vmatpush1.bf16.msra.mxu0 0
        %4192 = vmatprep.subr.bf16.mxu0 0
        %4193 = vmatpush1.bf16.msra.mxu0 0
        %4194 = vmatprep.subr.bf16.mxu0 0
        %4195 = vmatpush1.bf16.msra.mxu0 0
        %4196 = vmatprep.subr.bf16.mxu0 0
        %4197 = vmatpush1.bf16.msra.mxu0 0
        %4198 = vmatprep.mubr.bf16.mxu0 0
        %4199 = vmatmul.mubr.bf16.gmra.mrb[0].mxu0 %v4116
        %v4200 = vpop.f32.mrb[0].mxu0
        %v4201 = vadd.f32 0.0, %v4200
        %v4202 = vpop.f32.mrb[0].mxu0
        %v4203 = vpop.f32.mrb[0].mxu0
        %v4204 = vadd.f32 0.0, %v4203
        %v4205 = vpop.f32.mrb[0].mxu0
        %4206 = vmatprep.mubr.bf16.mxu0 0
        %4207 = vmatmul.mubr.bf16.gmra.mrb[0].mxu0 %v4119
        %v4208 = vpop.f32.mrb[0].mxu0
        %v4209 = vadd.f32 0.0, %v4208
        %v4210 = vpop.f32.mrb[0].mxu0
        %v4211 = vpop.f32.mrb[0].mxu0
        %v4212 = vadd.f32 0.0, %v4211
        %v4213 = vpop.f32.mrb[0].mxu0
        %4214 = vmatprep.mubr.bf16.mxu0 0
        %4215 = vmatmul.mubr.bf16.gmra.mrb[0].mxu0 %v4122
        %v4216 = vpop.f32.mrb[0].mxu0
        %v4217 = vadd.f32 0.0, %v4216
        %v4218 = vpop.f32.mrb[0].mxu0
        %v4219 = vpop.f32.mrb[0].mxu0
        %v4220 = vadd.f32 0.0, %v4219
        %v4221 = vpop.f32.mrb[0].mxu0
        %4222 = vmatprep.mubr.bf16.mxu0 0
        %4223 = vmatmul.mubr.bf16.gmra.mrb[0].mxu0 %v4125
        %v4224 = vpop.f32.mrb[0].mxu0
        %v4225 = vadd.f32 0.0, %v4224
        %v4226 = vpop.f32.mrb[0].mxu0
        %v4227 = vpop.f32.mrb[0].mxu0
        %v4228 = vadd.f32 0.0, %v4227
        %v4229 = vpop.f32.mrb[0].mxu0
        %4230 = vmatprep.mubr.bf16.mxu0 0
        %4231 = vmatmul.mubr.bf16.gmra.mrb[0].mxu0 %v4128
        %v4232 = vpop.f32.mrb[0].mxu0
        %v4233 = vadd.f32 0.0, %v4232
        %v4234 = vpop.f32.mrb[0].mxu0
        %v4235 = vpop.f32.mrb[0].mxu0
        %v4236 = vadd.f32 0.0, %v4235
        %v4237 = vpop.f32.mrb[0].mxu0
        %4238 = vmatprep.mubr.bf16.mxu0 0
        %4239 = vmatmul.mubr.bf16.gmra.mrb[0].mxu0 %v4131
        %v4240 = vpop.f32.mrb[0].mxu0
        %v4241 = vadd.f32 0.0, %v4240
        %v4242 = vpop.f32.mrb[0].mxu0
        %v4243 = vpop.f32.mrb[0].mxu0
        %v4244 = vadd.f32 0.0, %v4243
        %v4245 = vpop.f32.mrb[0].mxu0
        %4246 = vmatprep.mubr.bf16.mxu0 0
        %4247 = vmatmul.mubr.bf16.gmra.mrb[0].mxu0 %v4134
        %v4248 = vpop.f32.mrb[0].mxu0
        %v4249 = vadd.f32 0.0, %v4248
        %v4250 = vpop.f32.mrb[0].mxu0
        %v4251 = vpop.f32.mrb[0].mxu0
        %v4252 = vadd.f32 0.0, %v4251
        %v4253 = vpop.f32.mrb[0].mxu0
        %4254 = vmatprep.mubr.bf16.mxu0 0
        %4255 = vmatmul.mubr.bf16.gmra.mrb[0].mxu0 %v4137
        %v4256 = vpop.f32.mrb[0].mxu0
        %v4257 = vadd.f32 0.0, %v4256
        %v4258 = vpop.f32.mrb[0].mxu0
        %v4259 = vpop.f32.mrb[0].mxu0
        %v4260 = vadd.f32 0.0, %v4259
        %v4261 = vpop.f32.mrb[0].mxu0
        %4262 = vmatprep.mubr.bf16.mxu0 0
        %4263 = vmatmul.mubr.bf16.gmra.mrb[0].mxu0 %v4140
        %v4264 = vpop.f32.mrb[0].mxu0
        %v4265 = vadd.f32 0.0, %v4264
        %v4266 = vpop.f32.mrb[0].mxu0
        %v4267 = vpop.f32.mrb[0].mxu0
        %v4268 = vadd.f32 0.0, %v4267
        %v4269 = vpop.f32.mrb[0].mxu0
        %4270 = vmatprep.mubr.bf16.mxu0 0
        %4271 = vmatmul.mubr.bf16.gmra.mrb[0].mxu0 %v4143
        %v4272 = vpop.f32.mrb[0].mxu0
        %v4273 = vadd.f32 0.0, %v4272
        %v4274 = vpop.f32.mrb[0].mxu0
        %v4275 = vpop.f32.mrb[0].mxu0
        %v4276 = vadd.f32 0.0, %v4275
        %v4277 = vpop.f32.mrb[0].mxu0
        %4278 = vmatprep.mubr.bf16.mxu0 0
        %4279 = vmatmul.mubr.bf16.gmra.mrb[0].mxu0 %v4146
        %v4280 = vpop.f32.mrb[0].mxu0
        %v4281 = vadd.f32 0.0, %v4280
        %v4282 = vpop.f32.mrb[0].mxu0
        %v4283 = vpop.f32.mrb[0].mxu0
        %v4284 = vadd.f32 0.0, %v4283
        %v4285 = vpop.f32.mrb[0].mxu0
        %4286 = vmatprep.mubr.bf16.mxu0 0
        %4287 = vmatmul.mubr.bf16.gmra.mrb[0].mxu0 %v4149
        %v4288 = vpop.f32.mrb[0].mxu0
        %v4289 = vadd.f32 0.0, %v4288
        %v4290 = vpop.f32.mrb[0].mxu0
        %v4291 = vpop.f32.mrb[0].mxu0
        %v4292 = vadd.f32 0.0, %v4291
        %v4293 = vpop.f32.mrb[0].mxu0
        %4294 = vmatprep.mubr.bf16.mxu0 0
        %4295 = vmatmul.mubr.bf16.gmra.mrb[0].mxu0 %v4152
        %v4296 = vpop.f32.mrb[0].mxu0
        %v4297 = vadd.f32 0.0, %v4296
        %v4298 = vpop.f32.mrb[0].mxu0
        %v4299 = vpop.f32.mrb[0].mxu0
        %v4300 = vadd.f32 0.0, %v4299
        %v4301 = vpop.f32.mrb[0].mxu0
        %4302 = vmatprep.mubr.bf16.mxu0 0
        %4303 = vmatmul.mubr.bf16.gmra.mrb[0].mxu0 %v4155
        %v4304 = vpop.f32.mrb[0].mxu0
        %v4305 = vadd.f32 0.0, %v4304
        %v4306 = vpop.f32.mrb[0].mxu0
        %v4307 = vpop.f32.mrb[0].mxu0
        %v4308 = vadd.f32 0.0, %v4307
        %v4309 = vpop.f32.mrb[0].mxu0
        %4310 = vmatprep.mubr.bf16.mxu0 0
        %4311 = vmatmul.mubr.bf16.gmra.mrb[0].mxu0 %v4158
        %v4312 = vpop.f32.mrb[0].mxu0
        %v4313 = vadd.f32 0.0, %v4312
        %v4314 = vpop.f32.mrb[0].mxu0
        %v4315 = vpop.f32.mrb[0].mxu0
        %v4316 = vadd.f32 0.0, %v4315
        %v4317 = vpop.f32.mrb[0].mxu0
        %4318 = vmatprep.mubr.bf16.mxu0 0
        %4319 = vmatmul.mubr.bf16.gmra.mrb[0].mxu0 %v4161
        %v4320 = vpop.f32.mrb[0].mxu0
        %v4321 = vadd.f32 0.0, %v4320
        %v4322 = vpop.f32.mrb[0].mxu0
        %v4323 = vpop.f32.mrb[0].mxu0
        %v4324 = vadd.f32 0.0, %v4323
        %v4325 = vpop.f32.mrb[0].mxu0
        %4326 = vdwg.mxu0
        %v4327 = vadd.f32 %v3900, %v4201
        %v4328 = vadd.f32 %v3903, %v4204
        %v4329 = vadd.f32 %v3908, %v4209
        %v4330 = vadd.f32 %v3911, %v4212
        %v4331 = vadd.f32 %v3916, %v4217
        %v4332 = vadd.f32 %v3919, %v4220
        %v4333 = vadd.f32 %v3924, %v4225
        %v4334 = vadd.f32 %v3927, %v4228
        %v4335 = vadd.f32 %v3932, %v4233
        %v4336 = vadd.f32 %v3935, %v4236
        %v4337 = vadd.f32 %v3940, %v4241
        %v4338 = vadd.f32 %v3943, %v4244
        %v4339 = vadd.f32 %v3948, %v4249
        %v4340 = vadd.f32 %v3951, %v4252
        %v4341 = vadd.f32 %v3956, %v4257
        %v4342 = vadd.f32 %v3959, %v4260
        %v4343 = vadd.f32 %v3964, %v4265
        %v4344 = vadd.f32 %v3967, %v4268
        %v4345 = vadd.f32 %v3972, %v4273
        %v4346 = vadd.f32 %v3975, %v4276
        %v4347 = vadd.f32 %v3980, %v4281
        %v4348 = vadd.f32 %v3983, %v4284
        %v4349 = vadd.f32 %v3988, %v4289
        %v4350 = vadd.f32 %v3991, %v4292
        %v4351 = vadd.f32 %v3996, %v4297
        %v4352 = vadd.f32 %v3999, %v4300
        %v4353 = vadd.f32 %v4004, %v4305
        %v4354 = vadd.f32 %v4007, %v4308
        %v4355 = vadd.f32 %v4012, %v4313
        %v4356 = vadd.f32 %v4015, %v4316
        %v4357 = vadd.f32 %v4020, %v4321
        %v4358 = vadd.f32 %v4023, %v4324
        %v4359 = vld [vmem:[%s7] sm:$0x1]
        %v4361 = vlaneseq
        %v4362 = vshrl.u32 %v4361, 7
        %v4363 = vsub.s32 0, %v4362
        %v4364 = vrot.slane %v4359, %v4363
        %v4366 = vadd.f32 %v4327, %v4364
        %v4367 = vadd.f32 %v4328, %v4364
        %v4368 = vadd.f32 %v4329, %v4364
        %v4369 = vadd.f32 %v4330, %v4364
        %v4370 = vadd.f32 %v4331, %v4364
        %v4371 = vadd.f32 %v4332, %v4364
        %v4372 = vadd.f32 %v4333, %v4364
        %v4373 = vadd.f32 %v4334, %v4364
        %v4374 = vadd.f32 %v4335, %v4364
        %v4375 = vadd.f32 %v4336, %v4364
        %v4376 = vadd.f32 %v4337, %v4364
        %v4377 = vadd.f32 %v4338, %v4364
        %v4378 = vadd.f32 %v4339, %v4364
        %v4379 = vadd.f32 %v4340, %v4364
        %v4380 = vadd.f32 %v4341, %v4364
        %v4381 = vadd.f32 %v4342, %v4364
        %v4382 = vadd.f32 %v4343, %v4364
        %v4383 = vadd.f32 %v4344, %v4364
        %v4384 = vadd.f32 %v4345, %v4364
        %v4385 = vadd.f32 %v4346, %v4364
        %v4386 = vadd.f32 %v4347, %v4364
        %v4387 = vadd.f32 %v4348, %v4364
        %v4388 = vadd.f32 %v4349, %v4364
        %v4389 = vadd.f32 %v4350, %v4364
        %v4390 = vadd.f32 %v4351, %v4364
        %v4391 = vadd.f32 %v4352, %v4364
        %v4392 = vadd.f32 %v4353, %v4364
        %v4393 = vadd.f32 %v4354, %v4364
        %v4394 = vadd.f32 %v4355, %v4364
        %v4395 = vadd.f32 %v4356, %v4364
        %v4396 = vadd.f32 %v4357, %v4364
        %v4397 = vadd.f32 %v4358, %v4364
        %v4398 = vmax.f32 %v4366, 0.0
        %v4399 = vmax.f32 %v4367, 0.0
        %v4400 = vmax.f32 %v4368, 0.0
        %v4401 = vmax.f32 %v4369, 0.0
        %v4402 = vmax.f32 %v4370, 0.0
        %v4403 = vmax.f32 %v4371, 0.0
        %v4404 = vmax.f32 %v4372, 0.0
        %v4405 = vmax.f32 %v4373, 0.0
        %v4406 = vmax.f32 %v4374, 0.0
        %v4407 = vmax.f32 %v4375, 0.0
        %v4408 = vmax.f32 %v4376, 0.0
        %v4409 = vmax.f32 %v4377, 0.0
        %v4410 = vmax.f32 %v4378, 0.0
        %v4411 = vmax.f32 %v4379, 0.0
        %v4412 = vmax.f32 %v4380, 0.0
        %v4413 = vmax.f32 %v4381, 0.0
        %v4414 = vmax.f32 %v4382, 0.0
        %v4415 = vmax.f32 %v4383, 0.0
        %v4416 = vmax.f32 %v4384, 0.0
        %v4417 = vmax.f32 %v4385, 0.0
        %v4418 = vmax.f32 %v4386, 0.0
        %v4419 = vmax.f32 %v4387, 0.0
        %v4420 = vmax.f32 %v4388, 0.0
        %v4421 = vmax.f32 %v4389, 0.0
        %v4422 = vmax.f32 %v4390, 0.0
        %v4423 = vmax.f32 %v4391, 0.0
        %v4424 = vmax.f32 %v4392, 0.0
        %v4425 = vmax.f32 %v4393, 0.0
        %v4426 = vmax.f32 %v4394, 0.0
        %v4427 = vmax.f32 %v4395, 0.0
        %v4428 = vmax.f32 %v4396, 0.0
        %v4429 = vmax.f32 %v4397, 0.0
        %v4430 = vld [vmem:[%s8] sm:$0x1]
        %v4432 = vlaneseq
        %v4433 = vshrl.u32 %v4432, 7
        %v4434 = vsub.s32 0, %v4433
        %v4435 = vrot.slane %v4430, %v4434
        %v4437 = vmul.f32 %v4398, %v4435
        %v4438 = vmul.f32 %v4399, %v4435
        %v4439 = vmul.f32 %v4400, %v4435
        %v4440 = vmul.f32 %v4401, %v4435
        %v4441 = vmul.f32 %v4402, %v4435
        %v4442 = vmul.f32 %v4403, %v4435
        %v4443 = vmul.f32 %v4404, %v4435
        %v4444 = vmul.f32 %v4405, %v4435
        %v4445 = vmul.f32 %v4406, %v4435
        %v4446 = vmul.f32 %v4407, %v4435
        %v4447 = vmul.f32 %v4408, %v4435
        %v4448 = vmul.f32 %v4409, %v4435
        %v4449 = vmul.f32 %v4410, %v4435
        %v4450 = vmul.f32 %v4411, %v4435
        %v4451 = vmul.f32 %v4412, %v4435
        %v4452 = vmul.f32 %v4413, %v4435
        %v4453 = vmul.f32 %v4414, %v4435
        %v4454 = vmul.f32 %v4415, %v4435
        %v4455 = vmul.f32 %v4416, %v4435
        %v4456 = vmul.f32 %v4417, %v4435
        %v4457 = vmul.f32 %v4418, %v4435
        %v4458 = vmul.f32 %v4419, %v4435
        %v4459 = vmul.f32 %v4420, %v4435
        %v4460 = vmul.f32 %v4421, %v4435
        %v4461 = vmul.f32 %v4422, %v4435
        %v4462 = vmul.f32 %v4423, %v4435
        %v4463 = vmul.f32 %v4424, %v4435
        %v4464 = vmul.f32 %v4425, %v4435
        %v4465 = vmul.f32 %v4426, %v4435
        %v4466 = vmul.f32 %v4427, %v4435
        %v4467 = vmul.f32 %v4428, %v4435
        %v4468 = vmul.f32 %v4429, %v4435
        %v4469 = vsel %vm479, %v4437, 0.0
        %4470 = vadd.xlane.f32.xlu0 %v4469
        %v4471 = vpop.xlane.xlu0 %4470
        %v4472 = vsel %vm479, %v4438, 0.0
        %4473 = vadd.xlane.f32.xlu0 %v4472
        %v4474 = vpop.xlane.xlu0 %4473
        %v4475 = vsel %vm479, %v4439, 0.0
        %4476 = vadd.xlane.f32.xlu0 %v4475
        %v4477 = vpop.xlane.xlu0 %4476
        %v4478 = vsel %vm479, %v4440, 0.0
        %4479 = vadd.xlane.f32.xlu0 %v4478
        %v4480 = vpop.xlane.xlu0 %4479
        %v4481 = vsel %vm479, %v4441, 0.0
        %4482 = vadd.xlane.f32.xlu0 %v4481
        %v4483 = vpop.xlane.xlu0 %4482
        %v4484 = vsel %vm479, %v4442, 0.0
        %4485 = vadd.xlane.f32.xlu0 %v4484
        %v4486 = vpop.xlane.xlu0 %4485
        %v4487 = vsel %vm479, %v4443, 0.0
        %4488 = vadd.xlane.f32.xlu0 %v4487
        %v4489 = vpop.xlane.xlu0 %4488
        %v4490 = vsel %vm479, %v4444, 0.0
        %4491 = vadd.xlane.f32.xlu0 %v4490
        %v4492 = vpop.xlane.xlu0 %4491
        %v4493 = vsel %vm479, %v4445, 0.0
        %4494 = vadd.xlane.f32.xlu0 %v4493
        %v4495 = vpop.xlane.xlu0 %4494
        %v4496 = vsel %vm479, %v4446, 0.0
        %4497 = vadd.xlane.f32.xlu0 %v4496
        %v4498 = vpop.xlane.xlu0 %4497
        %v4499 = vsel %vm479, %v4447, 0.0
        %4500 = vadd.xlane.f32.xlu0 %v4499
        %v4501 = vpop.xlane.xlu0 %4500
        %v4502 = vsel %vm479, %v4448, 0.0
        %4503 = vadd.xlane.f32.xlu0 %v4502
        %v4504 = vpop.xlane.xlu0 %4503
        %v4505 = vsel %vm479, %v4449, 0.0
        %4506 = vadd.xlane.f32.xlu0 %v4505
        %v4507 = vpop.xlane.xlu0 %4506
        %v4508 = vsel %vm479, %v4450, 0.0
        %4509 = vadd.xlane.f32.xlu0 %v4508
        %v4510 = vpop.xlane.xlu0 %4509
        %v4511 = vsel %vm479, %v4451, 0.0
        %4512 = vadd.xlane.f32.xlu0 %v4511
        %v4513 = vpop.xlane.xlu0 %4512
        %v4514 = vsel %vm479, %v4452, 0.0
        %4515 = vadd.xlane.f32.xlu0 %v4514
        %v4516 = vpop.xlane.xlu0 %4515
        %v4517 = vsel %vm479, %v4453, 0.0
        %4518 = vadd.xlane.f32.xlu0 %v4517
        %v4519 = vpop.xlane.xlu0 %4518
        %v4520 = vsel %vm479, %v4454, 0.0
        %4521 = vadd.xlane.f32.xlu0 %v4520
        %v4522 = vpop.xlane.xlu0 %4521
        %v4523 = vsel %vm479, %v4455, 0.0
        %4524 = vadd.xlane.f32.xlu0 %v4523
        %v4525 = vpop.xlane.xlu0 %4524
        %v4526 = vsel %vm479, %v4456, 0.0
        %4527 = vadd.xlane.f32.xlu0 %v4526
        %v4528 = vpop.xlane.xlu0 %4527
        %v4529 = vsel %vm479, %v4457, 0.0
        %4530 = vadd.xlane.f32.xlu0 %v4529
        %v4531 = vpop.xlane.xlu0 %4530
        %v4532 = vsel %vm479, %v4458, 0.0
        %4533 = vadd.xlane.f32.xlu0 %v4532
        %v4534 = vpop.xlane.xlu0 %4533
        %v4535 = vsel %vm479, %v4459, 0.0
        %4536 = vadd.xlane.f32.xlu0 %v4535
        %v4537 = vpop.xlane.xlu0 %4536
        %v4538 = vsel %vm479, %v4460, 0.0
        %4539 = vadd.xlane.f32.xlu0 %v4538
        %v4540 = vpop.xlane.xlu0 %4539
        %v4541 = vsel %vm479, %v4461, 0.0
        %4542 = vadd.xlane.f32.xlu0 %v4541
        %v4543 = vpop.xlane.xlu0 %4542
        %v4544 = vsel %vm479, %v4462, 0.0
        %4545 = vadd.xlane.f32.xlu0 %v4544
        %v4546 = vpop.xlane.xlu0 %4545
        %v4547 = vsel %vm479, %v4463, 0.0
        %4548 = vadd.xlane.f32.xlu0 %v4547
        %v4549 = vpop.xlane.xlu0 %4548
        %v4550 = vsel %vm479, %v4464, 0.0
        %4551 = vadd.xlane.f32.xlu0 %v4550
        %v4552 = vpop.xlane.xlu0 %4551
        %v4553 = vsel %vm479, %v4465, 0.0
        %4554 = vadd.xlane.f32.xlu0 %v4553
        %v4555 = vpop.xlane.xlu0 %4554
        %v4556 = vsel %vm479, %v4466, 0.0
        %4557 = vadd.xlane.f32.xlu0 %v4556
        %v4558 = vpop.xlane.xlu0 %4557
        %v4559 = vsel %vm479, %v4467, 0.0
        %4560 = vadd.xlane.f32.xlu0 %v4559
        %v4561 = vpop.xlane.xlu0 %4560
        %v4562 = vsel %vm479, %v4468, 0.0
        %4563 = vadd.xlane.f32.xlu0 %v4562
        %v4564 = vpop.xlane.xlu0 %4563
        %v4565 = vld [vmem:[#allocation4] sm:$0x1]
        %v4567 = vlaneseq
        %v4568 = vshrl.u32 %v4567, 7
        %v4569 = vsub.s32 0, %v4568
        %v4570 = vrot.slane %v4565, %v4569
        %4571 = vset.pattern.permute.xlu0 0
        %4572 = vperm.xlu0 %4571, %v4570
        %v4573 = vpop.permute.xlu0 %4572
        %v4575 = vadd.f32 %v4471, %v4573
        %v4576 = vadd.f32 %v4474, %v4573
        %v4577 = vadd.f32 %v4477, %v4573
        %v4578 = vadd.f32 %v4480, %v4573
        %v4579 = vadd.f32 %v4483, %v4573
        %v4580 = vadd.f32 %v4486, %v4573
        %v4581 = vadd.f32 %v4489, %v4573
        %v4582 = vadd.f32 %v4492, %v4573
        %v4583 = vadd.f32 %v4495, %v4573
        %v4584 = vadd.f32 %v4498, %v4573
        %v4585 = vadd.f32 %v4501, %v4573
        %v4586 = vadd.f32 %v4504, %v4573
        %v4587 = vadd.f32 %v4507, %v4573
        %v4588 = vadd.f32 %v4510, %v4573
        %v4589 = vadd.f32 %v4513, %v4573
        %v4590 = vadd.f32 %v4516, %v4573
        %v4591 = vadd.f32 %v4519, %v4573
        %v4592 = vadd.f32 %v4522, %v4573
        %v4593 = vadd.f32 %v4525, %v4573
        %v4594 = vadd.f32 %v4528, %v4573
        %v4595 = vadd.f32 %v4531, %v4573
        %v4596 = vadd.f32 %v4534, %v4573
        %v4597 = vadd.f32 %v4537, %v4573
        %v4598 = vadd.f32 %v4540, %v4573
        %v4599 = vadd.f32 %v4543, %v4573
        %v4600 = vadd.f32 %v4546, %v4573
        %v4601 = vadd.f32 %v4549, %v4573
        %v4602 = vadd.f32 %v4552, %v4573
        %v4603 = vadd.f32 %v4555, %v4573
        %v4604 = vadd.f32 %v4558, %v4573
        %v4605 = vadd.f32 %v4561, %v4573
        %v4606 = vadd.f32 %v4564, %v4573
        %v4607 = vxor.u32 %v4575, 2147483648
        %v4608 = vxor.u32 %v4576, 2147483648
        %v4609 = vxor.u32 %v4577, 2147483648
        %v4610 = vxor.u32 %v4578, 2147483648
        %v4611 = vxor.u32 %v4579, 2147483648
        %v4612 = vxor.u32 %v4580, 2147483648
        %v4613 = vxor.u32 %v4581, 2147483648
        %v4614 = vxor.u32 %v4582, 2147483648
        %v4615 = vxor.u32 %v4583, 2147483648
        %v4616 = vxor.u32 %v4584, 2147483648
        %v4617 = vxor.u32 %v4585, 2147483648
        %v4618 = vxor.u32 %v4586, 2147483648
        %v4619 = vxor.u32 %v4587, 2147483648
        %v4620 = vxor.u32 %v4588, 2147483648
        %v4621 = vxor.u32 %v4589, 2147483648
        %v4622 = vxor.u32 %v4590, 2147483648
        %v4623 = vxor.u32 %v4591, 2147483648
        %v4624 = vxor.u32 %v4592, 2147483648
        %v4625 = vxor.u32 %v4593, 2147483648
        %v4626 = vxor.u32 %v4594, 2147483648
        %v4627 = vxor.u32 %v4595, 2147483648
        %v4628 = vxor.u32 %v4596, 2147483648
        %v4629 = vxor.u32 %v4597, 2147483648
        %v4630 = vxor.u32 %v4598, 2147483648
        %v4631 = vxor.u32 %v4599, 2147483648
        %v4632 = vxor.u32 %v4600, 2147483648
        %v4633 = vxor.u32 %v4601, 2147483648
        %v4634 = vxor.u32 %v4602, 2147483648
        %v4635 = vxor.u32 %v4603, 2147483648
        %v4636 = vxor.u32 %v4604, 2147483648
        %v4637 = vxor.u32 %v4605, 2147483648
        %v4638 = vxor.u32 %v4606, 2147483648
        %v4639 = vmul.f32 %v4607, 1.442695
        %v4640 = vpow.pop %v4639
        %v4641 = vmul.f32 %v4608, 1.442695
        %v4642 = vpow.pop %v4641
        %v4643 = vmul.f32 %v4609, 1.442695
        %v4644 = vpow.pop %v4643
        %v4645 = vmul.f32 %v4610, 1.442695
        %v4646 = vpow.pop %v4645
        %v4647 = vmul.f32 %v4611, 1.442695
        %v4648 = vpow.pop %v4647
        %v4649 = vmul.f32 %v4612, 1.442695
        %v4650 = vpow.pop %v4649
        %v4651 = vmul.f32 %v4613, 1.442695
        %v4652 = vpow.pop %v4651
        %v4653 = vmul.f32 %v4614, 1.442695
        %v4654 = vpow.pop %v4653
        %v4655 = vmul.f32 %v4615, 1.442695
        %v4656 = vpow.pop %v4655
        %v4657 = vmul.f32 %v4616, 1.442695
        %v4658 = vpow.pop %v4657
        %v4659 = vmul.f32 %v4617, 1.442695
        %v4660 = vpow.pop %v4659
        %v4661 = vmul.f32 %v4618, 1.442695
        %v4662 = vpow.pop %v4661
        %v4663 = vmul.f32 %v4619, 1.442695
        %v4664 = vpow.pop %v4663
        %v4665 = vmul.f32 %v4620, 1.442695
        %v4666 = vpow.pop %v4665
        %v4667 = vmul.f32 %v4621, 1.442695
        %v4668 = vpow.pop %v4667
        %v4669 = vmul.f32 %v4622, 1.442695
        %v4670 = vpow.pop %v4669
        %v4671 = vmul.f32 %v4623, 1.442695
        %v4672 = vpow.pop %v4671
        %v4673 = vmul.f32 %v4624, 1.442695
        %v4674 = vpow.pop %v4673
        %v4675 = vmul.f32 %v4625, 1.442695
        %v4676 = vpow.pop %v4675
        %v4677 = vmul.f32 %v4626, 1.442695
        %v4678 = vpow.pop %v4677
        %v4679 = vmul.f32 %v4627, 1.442695
        %v4680 = vpow.pop %v4679
        %v4681 = vmul.f32 %v4628, 1.442695
        %v4682 = vpow.pop %v4681
        %v4683 = vmul.f32 %v4629, 1.442695
        %v4684 = vpow.pop %v4683
        %v4685 = vmul.f32 %v4630, 1.442695
        %v4686 = vpow.pop %v4685
        %v4687 = vmul.f32 %v4631, 1.442695
        %v4688 = vpow.pop %v4687
        %v4689 = vmul.f32 %v4632, 1.442695
        %v4690 = vpow.pop %v4689
        %v4691 = vmul.f32 %v4633, 1.442695
        %v4692 = vpow.pop %v4691
        %v4693 = vmul.f32 %v4634, 1.442695
        %v4694 = vpow.pop %v4693
        %v4695 = vmul.f32 %v4635, 1.442695
        %v4696 = vpow.pop %v4695
        %v4697 = vmul.f32 %v4636, 1.442695
        %v4698 = vpow.pop %v4697
        %v4699 = vmul.f32 %v4637, 1.442695
        %v4700 = vpow.pop %v4699
        %v4701 = vmul.f32 %v4638, 1.442695
        %v4702 = vpow.pop %v4701
        %v4703 = vadd.f32 %v4640, 1.0
        %v4704 = vadd.f32 %v4642, 1.0
        %v4705 = vadd.f32 %v4644, 1.0
        %v4706 = vadd.f32 %v4646, 1.0
        %v4707 = vadd.f32 %v4648, 1.0
        %v4708 = vadd.f32 %v4650, 1.0
        %v4709 = vadd.f32 %v4652, 1.0
        %v4710 = vadd.f32 %v4654, 1.0
        %v4711 = vadd.f32 %v4656, 1.0
        %v4712 = vadd.f32 %v4658, 1.0
        %v4713 = vadd.f32 %v4660, 1.0
        %v4714 = vadd.f32 %v4662, 1.0
        %v4715 = vadd.f32 %v4664, 1.0
        %v4716 = vadd.f32 %v4666, 1.0
        %v4717 = vadd.f32 %v4668, 1.0
        %v4718 = vadd.f32 %v4670, 1.0
        %v4719 = vadd.f32 %v4672, 1.0
        %v4720 = vadd.f32 %v4674, 1.0
        %v4721 = vadd.f32 %v4676, 1.0
        %v4722 = vadd.f32 %v4678, 1.0
        %v4723 = vadd.f32 %v4680, 1.0
        %v4724 = vadd.f32 %v4682, 1.0
        %v4725 = vadd.f32 %v4684, 1.0
        %v4726 = vadd.f32 %v4686, 1.0
        %v4727 = vadd.f32 %v4688, 1.0
        %v4728 = vadd.f32 %v4690, 1.0
        %v4729 = vadd.f32 %v4692, 1.0
        %v4730 = vadd.f32 %v4694, 1.0
        %v4731 = vadd.f32 %v4696, 1.0
        %v4732 = vadd.f32 %v4698, 1.0
        %v4733 = vadd.f32 %v4700, 1.0
        %v4734 = vadd.f32 %v4702, 1.0
        %v4735 = vrcp.pop %v4703
        %v4736 = vmul.f32 1.0, %v4735
        %v4737 = vrcp.pop %v4704
        %v4738 = vmul.f32 1.0, %v4737
        %v4739 = vrcp.pop %v4705
        %v4740 = vmul.f32 1.0, %v4739
        %v4741 = vrcp.pop %v4706
        %v4742 = vmul.f32 1.0, %v4741
        %v4743 = vrcp.pop %v4707
        %v4744 = vmul.f32 1.0, %v4743
        %v4745 = vrcp.pop %v4708
        %v4746 = vmul.f32 1.0, %v4745
        %v4747 = vrcp.pop %v4709
        %v4748 = vmul.f32 1.0, %v4747
        %v4749 = vrcp.pop %v4710
        %v4750 = vmul.f32 1.0, %v4749
        %v4751 = vrcp.pop %v4711
        %v4752 = vmul.f32 1.0, %v4751
        %v4753 = vrcp.pop %v4712
        %v4754 = vmul.f32 1.0, %v4753
        %v4755 = vrcp.pop %v4713
        %v4756 = vmul.f32 1.0, %v4755
        %v4757 = vrcp.pop %v4714
        %v4758 = vmul.f32 1.0, %v4757
        %v4759 = vrcp.pop %v4715
        %v4760 = vmul.f32 1.0, %v4759
        %v4761 = vrcp.pop %v4716
        %v4762 = vmul.f32 1.0, %v4761
        %v4763 = vrcp.pop %v4717
        %v4764 = vmul.f32 1.0, %v4763
        %v4765 = vrcp.pop %v4718
        %v4766 = vmul.f32 1.0, %v4765
        %v4767 = vrcp.pop %v4719
        %v4768 = vmul.f32 1.0, %v4767
        %v4769 = vrcp.pop %v4720
        %v4770 = vmul.f32 1.0, %v4769
        %v4771 = vrcp.pop %v4721
        %v4772 = vmul.f32 1.0, %v4771
        %v4773 = vrcp.pop %v4722
        %v4774 = vmul.f32 1.0, %v4773
        %v4775 = vrcp.pop %v4723
        %v4776 = vmul.f32 1.0, %v4775
        %v4777 = vrcp.pop %v4724
        %v4778 = vmul.f32 1.0, %v4777
        %v4779 = vrcp.pop %v4725
        %v4780 = vmul.f32 1.0, %v4779
        %v4781 = vrcp.pop %v4726
        %v4782 = vmul.f32 1.0, %v4781
        %v4783 = vrcp.pop %v4727
        %v4784 = vmul.f32 1.0, %v4783
        %v4785 = vrcp.pop %v4728
        %v4786 = vmul.f32 1.0, %v4785
        %v4787 = vrcp.pop %v4729
        %v4788 = vmul.f32 1.0, %v4787
        %v4789 = vrcp.pop %v4730
        %v4790 = vmul.f32 1.0, %v4789
        %v4791 = vrcp.pop %v4731
        %v4792 = vmul.f32 1.0, %v4791
        %v4793 = vrcp.pop %v4732
        %v4794 = vmul.f32 1.0, %v4793
        %v4795 = vrcp.pop %v4733
        %v4796 = vmul.f32 1.0, %v4795
        %v4797 = vrcp.pop %v4734
        %v4798 = vmul.f32 1.0, %v4797
        %v4831 = vlaneseq
        %v4832 = vand.u32 %v4831, 127
        %v4833 = vlaneseq
        %v4834 = vshrl.u32 %v4833, 7
        %v4835 = vsub.s32 %v4832, %v4834
        %v4836 = vrot.slane %v4736, %v4835
        %v4837 = vadd.s32 %v4832, 4294967288
        %v4838 = vlaneseq
        %v4839 = vshrl.u32 %v4838, 7
        %v4840 = vsub.s32 %v4837, %v4839
        %v4841 = vrot.slane %v4738, %v4840
        %vm4842 = vcmask 130112
        %v4843 = vsel %vm4842, %v4841, %v4836
        %v4844 = vlaneseq
        %v4845 = vshrl.u32 %v4844, 7
        %v4846 = vsub.s32 %v4832, %v4845
        %v4847 = vrot.slane %v4740, %v4846
        %v4848 = vlaneseq
        %v4849 = vshrl.u32 %v4848, 7
        %v4850 = vsub.s32 %v4837, %v4849
        %v4851 = vrot.slane %v4742, %v4850
        %v4852 = vsel %vm4842, %v4851, %v4847
        %v4853 = vlaneseq
        %v4854 = vshrl.u32 %v4853, 7
        %v4855 = vsub.s32 %v4832, %v4854
        %v4856 = vrot.slane %v4744, %v4855
        %v4857 = vlaneseq
        %v4858 = vshrl.u32 %v4857, 7
        %v4859 = vsub.s32 %v4837, %v4858
        %v4860 = vrot.slane %v4746, %v4859
        %v4861 = vsel %vm4842, %v4860, %v4856
        %v4862 = vlaneseq
        %v4863 = vshrl.u32 %v4862, 7
        %v4864 = vsub.s32 %v4832, %v4863
        %v4865 = vrot.slane %v4748, %v4864
        %v4866 = vlaneseq
        %v4867 = vshrl.u32 %v4866, 7
        %v4868 = vsub.s32 %v4837, %v4867
        %v4869 = vrot.slane %v4750, %v4868
        %v4870 = vsel %vm4842, %v4869, %v4865
        %v4871 = vlaneseq
        %v4872 = vshrl.u32 %v4871, 7
        %v4873 = vsub.s32 %v4832, %v4872
        %v4874 = vrot.slane %v4752, %v4873
        %v4875 = vlaneseq
        %v4876 = vshrl.u32 %v4875, 7
        %v4877 = vsub.s32 %v4837, %v4876
        %v4878 = vrot.slane %v4754, %v4877
        %v4879 = vsel %vm4842, %v4878, %v4874
        %v4880 = vlaneseq
        %v4881 = vshrl.u32 %v4880, 7
        %v4882 = vsub.s32 %v4832, %v4881
        %v4883 = vrot.slane %v4756, %v4882
        %v4884 = vlaneseq
        %v4885 = vshrl.u32 %v4884, 7
        %v4886 = vsub.s32 %v4837, %v4885
        %v4887 = vrot.slane %v4758, %v4886
        %v4888 = vsel %vm4842, %v4887, %v4883
        %v4889 = vlaneseq
        %v4890 = vshrl.u32 %v4889, 7
        %v4891 = vsub.s32 %v4832, %v4890
        %v4892 = vrot.slane %v4760, %v4891
        %v4893 = vlaneseq
        %v4894 = vshrl.u32 %v4893, 7
        %v4895 = vsub.s32 %v4837, %v4894
        %v4896 = vrot.slane %v4762, %v4895
        %v4897 = vsel %vm4842, %v4896, %v4892
        %v4898 = vlaneseq
        %v4899 = vshrl.u32 %v4898, 7
        %v4900 = vsub.s32 %v4832, %v4899
        %v4901 = vrot.slane %v4764, %v4900
        %v4902 = vlaneseq
        %v4903 = vshrl.u32 %v4902, 7
        %v4904 = vsub.s32 %v4837, %v4903
        %v4905 = vrot.slane %v4766, %v4904
        %v4906 = vsel %vm4842, %v4905, %v4901
        %v4907 = vlaneseq
        %v4908 = vshrl.u32 %v4907, 7
        %v4909 = vsub.s32 %v4832, %v4908
        %v4910 = vrot.slane %v4768, %v4909
        %v4911 = vlaneseq
        %v4912 = vshrl.u32 %v4911, 7
        %v4913 = vsub.s32 %v4837, %v4912
        %v4914 = vrot.slane %v4770, %v4913
        %v4915 = vsel %vm4842, %v4914, %v4910
        %v4916 = vlaneseq
        %v4917 = vshrl.u32 %v4916, 7
        %v4918 = vsub.s32 %v4832, %v4917
        %v4919 = vrot.slane %v4772, %v4918
        %v4920 = vlaneseq
        %v4921 = vshrl.u32 %v4920, 7
        %v4922 = vsub.s32 %v4837, %v4921
        %v4923 = vrot.slane %v4774, %v4922
        %v4924 = vsel %vm4842, %v4923, %v4919
        %v4925 = vlaneseq
        %v4926 = vshrl.u32 %v4925, 7
        %v4927 = vsub.s32 %v4832, %v4926
        %v4928 = vrot.slane %v4776, %v4927
        %v4929 = vlaneseq
        %v4930 = vshrl.u32 %v4929, 7
        %v4931 = vsub.s32 %v4837, %v4930
        %v4932 = vrot.slane %v4778, %v4931
        %v4933 = vsel %vm4842, %v4932, %v4928
        %v4934 = vlaneseq
        %v4935 = vshrl.u32 %v4934, 7
        %v4936 = vsub.s32 %v4832, %v4935
        %v4937 = vrot.slane %v4780, %v4936
        %v4938 = vlaneseq
        %v4939 = vshrl.u32 %v4938, 7
        %v4940 = vsub.s32 %v4837, %v4939
        %v4941 = vrot.slane %v4782, %v4940
        %v4942 = vsel %vm4842, %v4941, %v4937
        %v4943 = vlaneseq
        %v4944 = vshrl.u32 %v4943, 7
        %v4945 = vsub.s32 %v4832, %v4944
        %v4946 = vrot.slane %v4784, %v4945
        %v4947 = vlaneseq
        %v4948 = vshrl.u32 %v4947, 7
        %v4949 = vsub.s32 %v4837, %v4948
        %v4950 = vrot.slane %v4786, %v4949
        %v4951 = vsel %vm4842, %v4950, %v4946
        %v4952 = vlaneseq
        %v4953 = vshrl.u32 %v4952, 7
        %v4954 = vsub.s32 %v4832, %v4953
        %v4955 = vrot.slane %v4788, %v4954
        %v4956 = vlaneseq
        %v4957 = vshrl.u32 %v4956, 7
        %v4958 = vsub.s32 %v4837, %v4957
        %v4959 = vrot.slane %v4790, %v4958
        %v4960 = vsel %vm4842, %v4959, %v4955
        %v4961 = vlaneseq
        %v4962 = vshrl.u32 %v4961, 7
        %v4963 = vsub.s32 %v4832, %v4962
        %v4964 = vrot.slane %v4792, %v4963
        %v4965 = vlaneseq
        %v4966 = vshrl.u32 %v4965, 7
        %v4967 = vsub.s32 %v4837, %v4966
        %v4968 = vrot.slane %v4794, %v4967
        %v4969 = vsel %vm4842, %v4968, %v4964
        %v4970 = vlaneseq
        %v4971 = vshrl.u32 %v4970, 7
        %v4972 = vsub.s32 %v4832, %v4971
        %v4973 = vrot.slane %v4796, %v4972
        %v4974 = vlaneseq
        %v4975 = vshrl.u32 %v4974, 7
        %v4976 = vsub.s32 %v4837, %v4975
        %v4977 = vrot.slane %v4798, %v4976
        %v4978 = vsel %vm4842, %v4977, %v4973
        %vm4979 = vcmask 1041409
        %v4980 = vsel %vm4979, %v4852, %v4843
        %vm4981 = vcmask 1042434
        %v4982 = vsel %vm4981, %v4861, %v4980
        %vm4983 = vcmask 1043459
        %v4984 = vsel %vm4983, %v4870, %v4982
        %vm4985 = vcmask 1044484
        %v4986 = vsel %vm4985, %v4879, %v4984
        %vm4987 = vcmask 1045509
        %v4988 = vsel %vm4987, %v4888, %v4986
        %vm4989 = vcmask 1046534
        %v4990 = vsel %vm4989, %v4897, %v4988
        %vm4991 = vcmask 1047559
        %v4992 = vsel %vm4991, %v4906, %v4990
        %v4993 = vsel %vm4979, %v4924, %v4915
        %v4994 = vsel %vm4981, %v4933, %v4993
        %v4995 = vsel %vm4983, %v4942, %v4994
        %v4996 = vsel %vm4985, %v4951, %v4995
        %v4997 = vsel %vm4987, %v4960, %v4996
        %v4998 = vsel %vm4989, %v4969, %v4997
        %v4999 = vsel %vm4991, %v4978, %v4998
        %5002 = vst.msk [vmem:[%s358] sm:$0xff] %vm479, %v4992
        %5003 = vst.msk [vmem:[%s358 + $0x8] sm:$0xff] %vm479, %v4999
        %s5004 = sand.u32 %s248, 1
        %s5005 = scalar_lea.sflag [#allocation6], %s5004
        %s5006 = sand.u32 %s248, 1
        %s5007 = smul.addr %s5006, 16
        %s5008 = scalar_lea.vmem [#allocation5], %s5007
        // Predicated region
        $region57: #{tpu_custom_call.1} parent=55 // pred_check
          %p5009 = pneg %p258
        $region58: #{tpu_custom_call.1} parent=55 // pred_check_branch
          %5011 = sbr.rel (%p5009) target = $region60
        $region59: #{tpu_custom_call.1} parent=55 // pred_region
          %s5012 = smul.u32 2, %s32
          %s5014 = ssub.s32 256, 256
          %5015 = vsyncadd %s5005, %s5014
          %s5016 = smul.addr %s31, 2
          %s5017 = sadd.s32 %s5012, %s5016
          %s5018 = smul.addr %s5017, 128
          %s5019 = scalar_lea.hbm %s10, %s5018
          %s5020 = sshll.u32 %s5008, 4
          %s5021 = int_to_ptr.vmem [resolvable:$true] %s5020
          %5026 = dma.vmem_to_hbm [thread:$0]  %s5021, 256, %s5019, %s5005, 128, 128, 8
        $region60: #{tpu_custom_call.1} parent=55 // pred_fallthru
          _
      $region56: #{tpu_custom_call.1} parent=5 // pred_fallthru
        _
      %p5027 = scmp.le.s32.totalorder 2, %s22
      // Predicated region
      $region61: #{tpu_custom_call.1} parent=5 // pred_check
        %p5028 = pneg %p5027
      $region62: #{tpu_custom_call.1} parent=5 // pred_check_branch
        %5030 = sbr.rel (%p5028) target = $region64
      $region63: #{tpu_custom_call.1} parent=5 // pred_region
        %s5031 = ssub.s32 %s22, 2
        // Predicated region
        $region65: #{tpu_custom_call.1} parent=63 // pred_check
          %p5032 = pneg %p264
        $region66: #{tpu_custom_call.1} parent=63 // pred_check_branch
          %5034 = sbr.rel (%p5032) target = $region68
        $region67: #{tpu_custom_call.1} parent=63 // pred_region
          %s5035 = sand.u32 %s249, 1
          %s5036 = scalar_lea.sflag [#allocation6], %s5035
          %s5037 = sand.u32 %s249, 1
          %s5038 = smul.addr %s5037, 16
          %s5039 = scalar_lea.vmem [#allocation5], %s5038
          %5040 = dma.done %s5036, 256
        $region68: #{tpu_custom_call.1} parent=63 // pred_fallthru
          _
      $region64: #{tpu_custom_call.1} parent=5 // pred_fallthru
        _
    $region6: #{tpu_custom_call.1} parent=1 // loop_footer
      %s26 = sadd.s32 1, %s22
    $region7: #{tpu_custom_call.1} parent=1 // loop_footer_branch
      %21 = sbr.rel target = $region3
    $region8: #{tpu_custom_call.1} parent=1 // loop_exit
      _
    %5041 = vsyncpa [#allocation6], 1
    %s5042 = scalar_lea.sflag [#allocation6], 1
    %5043 = vsyncpa %s5042, 1

</llo_original>
